<compile_context>
chip_gen: v5e
topology: v5e:2x2
jax: 0.10.0
libtpu: 0.0.40
codegen_flags: <defaults>
</compile_context>

<pallas_src>
import numpy as np

import jax
import jax.numpy as jnp
from jax import lax
from jax.experimental import pallas as pl
from jax.experimental.pallas import tpu as pltpu

_EPS = 1e-5


# ---------------------------------------------------------------------------
# Fused whole-network kernel
# ---------------------------------------------------------------------------
def _disc_kernel(*refs):
    """refs = (x, stem_S, stem_M, [S1,M1,b1,S2,M2,Ssc,Msc,bm] * n_blocks, pfc, fcb, out)."""
    o_ref = refs[-1]
    x_ref = refs[0]
    w = refs[1:-1]
    n_blocks = (len(w) - 4) // 8

    def conv(a, s_ref, m_ref):
        """Conv2d on a flattened-NHWC (H, W*C) activation: sum_dy S[dy] @ a @ M[dy].

        S[dy] is a 0/1 row selector (vertical tap / stride / zero pad), so the
        first dot is exact in bf16; the real contraction (k_w and C_in) runs on
        the MXU with f32 accumulation.
        """
        acc = None
        for dy in range(s_ref.shape[0]):
            rows = jnp.dot(s_ref[dy], a, preferred_element_type=jnp.float32)
            rows = rows.astype(jnp.bfloat16)          # exact: 0/1 row selection
            part = jnp.dot(rows, m_ref[dy], preferred_element_type=jnp.float32)
            acc = part if acc is None else acc + part
        return acc                                    # f32 (H_out, W_out*C_out)

    # stem: Conv2d(nc, ndf, 4, 2, 1, bias=False) + LeakyReLU(0.2)
    a = x_ref[0].astype(jnp.bfloat16)                 # (H, W*nc)
    y = conv(a, w[0], w[1])
    a = jnp.maximum(y, 0.2 * y).astype(jnp.bfloat16)  # LeakyReLU(0.2)

    idx = 2
    y_f32 = None
    for _ in range(n_blocks):
        s1, m1, b1, s2, m2, ssc, msc, bm = w[idx:idx + 8]
        idx += 8
        # main: conv3x3 /2 + BN + ReLU  (BN scale folded into m1, bias = b1)
        h1 = jnp.maximum(conv(a, s1, m1) + b1[...], 0.0).astype(jnp.bfloat16)
        # main conv3x3 /1 + BN, shortcut conv1x1 /2 + BN, relu(main + shortcut)
        y_f32 = jnp.maximum(conv(h1, s2, m2) + conv(a, ssc, msc) + bm[...], 0.0)
        a = y_f32.astype(jnp.bfloat16)
        # trailing LeakyReLU(0.2) is the identity on a ReLU output -> skipped.

    # AdaptiveAvgPool2d(1) + Linear(ndf*8, 1) + Sigmoid, fully in-kernel.
    pfc, fcb = w[idx], w[idx + 1]
    r = jnp.mean(y_f32, axis=0, keepdims=True)        # mean over image rows (1/H)
    logit = jnp.sum(r * pfc[...], axis=-1, keepdims=True) + fcb[...]  # pfc has fc_w/W tiled over W
    o_ref[0] = (1.0 / (1.0 + jnp.exp(-logit))).astype(o_ref.dtype)


def _const_index_map(ndim):
    return lambda n: (0,) * ndim


def build_forward(weights, batch, h0, wc0):
    """Build the jitted forward: one pallas_call, grid over batch (megacore-parallel)."""
    in_specs = [pl.BlockSpec((1, h0, wc0), lambda n: (n, 0, 0))]
    in_specs += [pl.BlockSpec(w.shape, _const_index_map(w.ndim)) for w in weights]

    call = pl.pallas_call(
        _disc_kernel,
        grid=(batch,),
        in_specs=in_specs,
        out_specs=pl.BlockSpec((1, 1, 1), lambda n: (n, 0, 0)),
        out_shape=jax.ShapeDtypeStruct((batch, 1, 1), jnp.float32),
        compiler_params=pltpu.CompilerParams(
            dimension_semantics=("parallel",)),       # v7x: one sample per TensorCore
    )

    @jax.jit
    def forward(x_nchw, ws):
        # NCHW -> NHWC, flatten (W, C) into the lane dim.  Only XLA glue op left.
        x = jnp.transpose(x_nchw, (0, 2, 3, 1)).reshape(batch, h0, wc0)
        return call(x, *ws)[:, :, 0]                  # (batch, 1)

    return forward


# ---------------------------------------------------------------------------
# One-time host-side weight preparation (BN folding, conv -> (S, M) factors)
# ---------------------------------------------------------------------------
def _bn_fold(bn):
    gamma, beta, mean, var = [np.asarray(t, np.float32) for t in bn]
    scale = gamma / np.sqrt(var + _EPS)
    return scale, beta - mean * scale


def _conv_factors(w, h_in, w_in, stride, pad):
    """Lower Conv2d(w[OIHW], stride, pad) acting on a flattened-NHWC (H, W*Cin)
    activation to the factors of   out = sum_dy S[dy] @ a @ M[dy]."""
    cout, cin, kh, kw = w.shape
    h_out = (h_in + 2 * pad - kh) // stride + 1
    w_out = (w_in + 2 * pad - kw) // stride + 1
    S = np.zeros((kh, h_out, h_in), np.float32)
    M = np.zeros((kh, w_in * cin, w_out * cout), np.float32)
    for dy in range(kh):
        for yo in range(h_out):
            yi = yo * stride - pad + dy
            if 0 <= yi < h_in:
                S[dy, yo, yi] = 1.0
        for xo in range(w_out):
            for dx in range(kw):
                xi = xo * stride - pad + dx
                if 0 <= xi < w_in:
                    M[dy, xi * cin:(xi + 1) * cin,
                          xo * cout:(xo + 1) * cout] = w[:, :, dy, dx].T
    return S, M, h_out, w_out


def prepare_weights(raw, h0, w0):
    """BN folding (scale into bf16 weights, f32 bias), conv -> (S, M) factors,
    per-lane bias tiling, fc/pool fusion.  Done once, outside the forward."""
    bf16 = lambda a: jnp.asarray(a, jnp.bfloat16)
    f32 = lambda a: jnp.asarray(a, jnp.float32)

    ws = []
    S, M, h, wd = _conv_factors(np.asarray(raw["conv1_w"], np.float32), h0, w0, 2, 1)
    ws += [bf16(S), bf16(M)]

    for blk in raw["blocks"]:
        s1, b1 = _bn_fold(blk["bn1"])
        s2, b2 = _bn_fold(blk["bn2"])
        ssc, bsc = _bn_fold(blk["bnsc"])
        w1 = np.asarray(blk["w1"], np.float32) * s1[:, None, None, None]
        w2 = np.asarray(blk["w2"], np.float32) * s2[:, None, None, None]
        wsc = np.asarray(blk["wsc"], np.float32) * ssc[:, None, None, None]
        S1, M1, ho, wo = _conv_factors(w1, h, wd, 2, 1)
        S2, M2, _, _ = _conv_factors(w2, ho, wo, 1, 1)
        Sc, Mc, _, _ = _conv_factors(wsc, h, wd, 2, 0)
        ws += [bf16(S1), bf16(M1), f32(np.tile(b1, wo).reshape(1, -1)),
               bf16(S2), bf16(M2), bf16(Sc), bf16(Mc),
               f32(np.tile(b2 + bsc, wo).reshape(1, -1))]
        h, wd = ho, wo

    fc_w = np.asarray(raw["fc_w"], np.float32).reshape(-1)
    pfc = np.tile(fc_w, wd).reshape(1, -1) / float(wd)   # fc weight tiled over W, incl. 1/W pool factor
    fcb = np.asarray(raw["fc_b"], np.float32).reshape(1, 1)
    ws += [f32(pfc), f32(fcb)]
    return ws


# ---------------------------------------------------------------------------
# Synthetic parameters + pure-JAX float32 reference of the PyTorch module
# ---------------------------------------------------------------------------
def init_raw_params(key, ndf, nc):
    keys = iter(jax.random.split(key, 64))

    def conv_w(cout, cin, kh, kw):
        fan_in = cin * kh * kw
        return jax.random.normal(next(keys), (cout, cin, kh, kw), jnp.float32) * np.sqrt(2.0 / fan_in)

    def bn_p(c):
        return (1.0 + 0.1 * jax.random.normal(next(keys), (c,), jnp.float32),   # gamma
                0.1 * jax.random.normal(next(keys), (c,), jnp.float32),          # beta
                0.1 * jax.random.normal(next(keys), (c,), jnp.float32),          # running_mean
                1.0 + 0.1 * jax.random.uniform(next(keys), (c,), jnp.float32))   # running_var

    params = {"conv1_w": conv_w(ndf, nc, 4, 4), "blocks": []}
    cin = ndf
    for mult in (2, 4, 8):
        cout = ndf * mult
        params["blocks"].append({
            "w1": conv_w(cout, cin, 3, 3), "bn1": bn_p(cout),
            "w2": conv_w(cout, cout, 3, 3), "bn2": bn_p(cout),
            "wsc": conv_w(cout, cin, 1, 1), "bnsc": bn_p(cout),
        })
        cin = cout
    params["fc_w"] = jax.random.normal(next(keys), (1, ndf * 8), jnp.float32) / np.sqrt(ndf * 8)
    params["fc_b"] = jnp.zeros((1,), jnp.float32)
    return params


def reference_forward(raw, x_nchw):
    """Pure-JAX float32 reference of the PyTorch Discriminator (eval-mode BN)."""
    hi = lax.Precision.HIGHEST

    def conv(x, w, stride, pad):
        return lax.conv_general_dilated(
            x, jnp.transpose(w, (2, 3, 1, 0)), (stride, stride),
            [(pad, pad), (pad, pad)],
            dimension_numbers=("NHWC", "HWIO", "NHWC"), precision=hi)

    def bn(x, p):
        g, b, m, v = p
        return (x - m) / jnp.sqrt(v + _EPS) * g + b

    def leaky(x):
        return jnp.where(x >= 0, x, 0.2 * x)

    x = jnp.transpose(x_nchw, (0, 2, 3, 1))
    x = leaky(conv(x, raw["conv1_w"], 2, 1))
    for blk in raw["blocks"]:
        main = jax.nn.relu(bn(conv(x, blk["w1"], 2, 1), blk["bn1"]))
        main = bn(conv(main, blk["w2"], 1, 1), blk["bn2"])
        sc = bn(conv(x, blk["wsc"], 2, 0), blk["bnsc"])
        x = leaky(jax.nn.relu(main + sc))
    pooled = jnp.mean(x, axis=(1, 2))                              # AdaptiveAvgPool2d(1)
    logit = jnp.dot(pooled, raw["fc_w"].T, precision=hi) + raw["fc_b"]
    return jax.nn.sigmoid(logit)


# ---------------------------------------------------------------------------
if __name__ == "__main__":
    ndf, nc = 8, 3
    batch, H, W = 2, 32, 32                           # 32 -> 16 -> 8 -> 4 -> 2

    key = jax.random.PRNGKey(0)
    k_in, k_par = jax.random.split(key)
    x = jax.random.normal(k_in, (batch, nc, H, W), jnp.float32)    # NCHW like PyTorch
    raw = init_raw_params(k_par, ndf, nc)

    weights = prepare_weights(raw, H, W)              # one-time host prep (BN fold, S/M, bf16)
    forward = build_forward(weights, batch, H, W * nc)

    out = jax.block_until_ready(forward(x, weights))
    assert out.shape == (batch, 1), out.shape
    assert bool(jnp.all(jnp.isfinite(out)))
    assert bool(jnp.all((out >= 0.0) & (out <= 1.0)))

    # End-to-end check against a pure-JAX float32 reference of the PyTorch module.
    ref = jax.block_until_ready(reference_forward(raw, x))
    err = float(jnp.max(jnp.abs(out - ref)))
    assert err < 2e-2, f"mismatch vs float32 reference: {err}"

    print("KERNEL_OK")
</pallas_src>

<mosaic_0001>
module attributes {stable_mosaic.version = 11 : i64} {
  func.func @_disc_kernel(%arg0: i32, %arg1: memref<1x32x96xf32, #tpu.memory_space<vmem>>, %arg2: memref<4x16x32xbf16, #tpu.memory_space<vmem>>, %arg3: memref<4x96x128xbf16, #tpu.memory_space<vmem>>, %arg4: memref<3x8x16xbf16, #tpu.memory_space<vmem>>, %arg5: memref<3x128x128xbf16, #tpu.memory_space<vmem>>, %arg6: memref<1x128xf32, #tpu.memory_space<vmem>>, %arg7: memref<3x8x8xbf16, #tpu.memory_space<vmem>>, %arg8: memref<3x128x128xbf16, #tpu.memory_space<vmem>>, %arg9: memref<1x8x16xbf16, #tpu.memory_space<vmem>>, %arg10: memref<1x128x128xbf16, #tpu.memory_space<vmem>>, %arg11: memref<1x128xf32, #tpu.memory_space<vmem>>, %arg12: memref<3x4x8xbf16, #tpu.memory_space<vmem>>, %arg13: memref<3x128x128xbf16, #tpu.memory_space<vmem>>, %arg14: memref<1x128xf32, #tpu.memory_space<vmem>>, %arg15: memref<3x4x4xbf16, #tpu.memory_space<vmem>>, %arg16: memref<3x128x128xbf16, #tpu.memory_space<vmem>>, %arg17: memref<1x4x8xbf16, #tpu.memory_space<vmem>>, %arg18: memref<1x128x128xbf16, #tpu.memory_space<vmem>>, %arg19: memref<1x128xf32, #tpu.memory_space<vmem>>, %arg20: memref<3x2x4xbf16, #tpu.memory_space<vmem>>, %arg21: memref<3x128x128xbf16, #tpu.memory_space<vmem>>, %arg22: memref<1x128xf32, #tpu.memory_space<vmem>>, %arg23: memref<3x2x2xbf16, #tpu.memory_space<vmem>>, %arg24: memref<3x128x128xbf16, #tpu.memory_space<vmem>>, %arg25: memref<1x2x4xbf16, #tpu.memory_space<vmem>>, %arg26: memref<1x128x128xbf16, #tpu.memory_space<vmem>>, %arg27: memref<1x128xf32, #tpu.memory_space<vmem>>, %arg28: memref<1x128xf32, #tpu.memory_space<vmem>>, %arg29: memref<1x1xf32, #tpu.memory_space<vmem>>, %arg30: memref<1x1x1xf32, #tpu.memory_space<vmem>>) attributes {dimension_semantics = [#tpu.dimension_semantics<parallel>], iteration_bounds = array<i64: 2>, scalar_prefetch = 0 : i64, scratch_operands = 0 : i64, tpu.core_type = #tpu.core_type<tc>, window_params = [{transform_indices = @transform_0, window_bounds = array<i64: 1, 32, 96>}, {pipeline_mode = #tpu.pipeline_mode<synchronous>, transform_indices = @transform_1, window_bounds = array<i64: 4, 16, 32>}, {pipeline_mode = #tpu.pipeline_mode<synchronous>, transform_indices = @transform_2, window_bounds = array<i64: 4, 96, 128>}, {pipeline_mode = #tpu.pipeline_mode<synchronous>, transform_indices = @transform_3, window_bounds = array<i64: 3, 8, 16>}, {pipeline_mode = #tpu.pipeline_mode<synchronous>, transform_indices = @transform_4, window_bounds = array<i64: 3, 128, 128>}, {pipeline_mode = #tpu.pipeline_mode<synchronous>, transform_indices = @transform_5, window_bounds = array<i64: 1, 128>}, {pipeline_mode = #tpu.pipeline_mode<synchronous>, transform_indices = @transform_6, window_bounds = array<i64: 3, 8, 8>}, {pipeline_mode = #tpu.pipeline_mode<synchronous>, transform_indices = @transform_7, window_bounds = array<i64: 3, 128, 128>}, {pipeline_mode = #tpu.pipeline_mode<synchronous>, transform_indices = @transform_8, window_bounds = array<i64: 1, 8, 16>}, {pipeline_mode = #tpu.pipeline_mode<synchronous>, transform_indices = @transform_9, window_bounds = array<i64: 1, 128, 128>}, {pipeline_mode = #tpu.pipeline_mode<synchronous>, transform_indices = @transform_10, window_bounds = array<i64: 1, 128>}, {pipeline_mode = #tpu.pipeline_mode<synchronous>, transform_indices = @transform_11, window_bounds = array<i64: 3, 4, 8>}, {pipeline_mode = #tpu.pipeline_mode<synchronous>, transform_indices = @transform_12, window_bounds = array<i64: 3, 128, 128>}, {pipeline_mode = #tpu.pipeline_mode<synchronous>, transform_indices = @transform_13, window_bounds = array<i64: 1, 128>}, {pipeline_mode = #tpu.pipeline_mode<synchronous>, transform_indices = @transform_14, window_bounds = array<i64: 3, 4, 4>}, {pipeline_mode = #tpu.pipeline_mode<synchronous>, transform_indices = @transform_15, window_bounds = array<i64: 3, 128, 128>}, {pipeline_mode = #tpu.pipeline_mode<synchronous>, transform_indices = @transform_16, window_bounds = array<i64: 1, 4, 8>}, {pipeline_mode = #tpu.pipeline_mode<synchronous>, transform_indices = @transform_17, window_bounds = array<i64: 1, 128, 128>}, {pipeline_mode = #tpu.pipeline_mode<synchronous>, transform_indices = @transform_18, window_bounds = array<i64: 1, 128>}, {pipeline_mode = #tpu.pipeline_mode<synchronous>, transform_indices = @transform_19, window_bounds = array<i64: 3, 2, 4>}, {pipeline_mode = #tpu.pipeline_mode<synchronous>, transform_indices = @transform_20, window_bounds = array<i64: 3, 128, 128>}, {pipeline_mode = #tpu.pipeline_mode<synchronous>, transform_indices = @transform_21, window_bounds = array<i64: 1, 128>}, {pipeline_mode = #tpu.pipeline_mode<synchronous>, transform_indices = @transform_22, window_bounds = array<i64: 3, 2, 2>}, {pipeline_mode = #tpu.pipeline_mode<synchronous>, transform_indices = @transform_23, window_bounds = array<i64: 3, 128, 128>}, {pipeline_mode = #tpu.pipeline_mode<synchronous>, transform_indices = @transform_24, window_bounds = array<i64: 1, 2, 4>}, {pipeline_mode = #tpu.pipeline_mode<synchronous>, transform_indices = @transform_25, window_bounds = array<i64: 1, 128, 128>}, {pipeline_mode = #tpu.pipeline_mode<synchronous>, transform_indices = @transform_26, window_bounds = array<i64: 1, 128>}, {pipeline_mode = #tpu.pipeline_mode<synchronous>, transform_indices = @transform_27, window_bounds = array<i64: 1, 128>}, {pipeline_mode = #tpu.pipeline_mode<synchronous>, transform_indices = @transform_28, window_bounds = array<i64: 1, 1>}, {transform_indices = @transform_29, window_bounds = array<i64: 1, 1, 1>}]} {
    %c0 = arith.constant 0 : index
    %c0_0 = arith.constant 0 : index
    %c0_1 = arith.constant 0 : index
    %0 = vector.load %arg1[%c0, %c0_0, %c0_1] : memref<1x32x96xf32, #tpu.memory_space<vmem>>, vector<1x32x96xf32>
    %1 = vector.shape_cast %0 : vector<1x32x96xf32> to vector<32x96xf32>
    %2 = arith.truncf %1 : vector<32x96xf32> to vector<32x96xbf16>
    %c0_2 = arith.constant 0 : index
    %c0_3 = arith.constant 0 : index
    %c0_4 = arith.constant 0 : index
    %3 = vector.load %arg2[%c0_2, %c0_3, %c0_4] : memref<4x16x32xbf16, #tpu.memory_space<vmem>>, vector<1x16x32xbf16>
    %4 = vector.shape_cast %3 : vector<1x16x32xbf16> to vector<16x32xbf16>
    %cst = arith.constant dense<0.000000e+00> : vector<16x96xf32>
    %5 = tpu.matmul %4, %2, %cst {dimension_numbers = #tpu.dot_dimension_numbers<[1], [0], [0], [1], [0, 0, 1, 1], [], []>} : vector<16x32xbf16>, vector<32x96xbf16>, vector<16x96xf32> -> vector<16x96xf32>
    %6 = arith.truncf %5 : vector<16x96xf32> to vector<16x96xbf16>
    %c0_5 = arith.constant 0 : index
    %c0_6 = arith.constant 0 : index
    %c0_7 = arith.constant 0 : index
    %7 = vector.load %arg3[%c0_5, %c0_6, %c0_7] : memref<4x96x128xbf16, #tpu.memory_space<vmem>>, vector<1x96x128xbf16>
    %8 = vector.shape_cast %7 : vector<1x96x128xbf16> to vector<96x128xbf16>
    %cst_8 = arith.constant dense<0.000000e+00> : vector<16x128xf32>
    %9 = tpu.matmul %6, %8, %cst_8 {dimension_numbers = #tpu.dot_dimension_numbers<[1], [0], [0], [1], [0, 0, 1, 1], [], []>} : vector<16x96xbf16>, vector<96x128xbf16>, vector<16x128xf32> -> vector<16x128xf32>
    %c1 = arith.constant 1 : index
    %c0_9 = arith.constant 0 : index
    %c0_10 = arith.constant 0 : index
    %10 = vector.load %arg2[%c1, %c0_9, %c0_10] : memref<4x16x32xbf16, #tpu.memory_space<vmem>>, vector<1x16x32xbf16>
    %11 = vector.shape_cast %10 : vector<1x16x32xbf16> to vector<16x32xbf16>
    %cst_11 = arith.constant dense<0.000000e+00> : vector<16x96xf32>
    %12 = tpu.matmul %11, %2, %cst_11 {dimension_numbers = #tpu.dot_dimension_numbers<[1], [0], [0], [1], [0, 0, 1, 1], [], []>} : vector<16x32xbf16>, vector<32x96xbf16>, vector<16x96xf32> -> vector<16x96xf32>
    %13 = arith.truncf %12 : vector<16x96xf32> to vector<16x96xbf16>
    %c1_12 = arith.constant 1 : index
    %c0_13 = arith.constant 0 : index
    %c0_14 = arith.constant 0 : index
    %14 = vector.load %arg3[%c1_12, %c0_13, %c0_14] : memref<4x96x128xbf16, #tpu.memory_space<vmem>>, vector<1x96x128xbf16>
    %15 = vector.shape_cast %14 : vector<1x96x128xbf16> to vector<96x128xbf16>
    %cst_15 = arith.constant dense<0.000000e+00> : vector<16x128xf32>
    %16 = tpu.matmul %13, %15, %cst_15 {dimension_numbers = #tpu.dot_dimension_numbers<[1], [0], [0], [1], [0, 0, 1, 1], [], []>} : vector<16x96xbf16>, vector<96x128xbf16>, vector<16x128xf32> -> vector<16x128xf32>
    %17 = arith.addf %9, %16 : vector<16x128xf32>
    %c2 = arith.constant 2 : index
    %c0_16 = arith.constant 0 : index
    %c0_17 = arith.constant 0 : index
    %18 = vector.load %arg2[%c2, %c0_16, %c0_17] : memref<4x16x32xbf16, #tpu.memory_space<vmem>>, vector<1x16x32xbf16>
    %19 = vector.shape_cast %18 : vector<1x16x32xbf16> to vector<16x32xbf16>
    %cst_18 = arith.constant dense<0.000000e+00> : vector<16x96xf32>
    %20 = tpu.matmul %19, %2, %cst_18 {dimension_numbers = #tpu.dot_dimension_numbers<[1], [0], [0], [1], [0, 0, 1, 1], [], []>} : vector<16x32xbf16>, vector<32x96xbf16>, vector<16x96xf32> -> vector<16x96xf32>
    %21 = arith.truncf %20 : vector<16x96xf32> to vector<16x96xbf16>
    %c2_19 = arith.constant 2 : index
    %c0_20 = arith.constant 0 : index
    %c0_21 = arith.constant 0 : index
    %22 = vector.load %arg3[%c2_19, %c0_20, %c0_21] : memref<4x96x128xbf16, #tpu.memory_space<vmem>>, vector<1x96x128xbf16>
    %23 = vector.shape_cast %22 : vector<1x96x128xbf16> to vector<96x128xbf16>
    %cst_22 = arith.constant dense<0.000000e+00> : vector<16x128xf32>
    %24 = tpu.matmul %21, %23, %cst_22 {dimension_numbers = #tpu.dot_dimension_numbers<[1], [0], [0], [1], [0, 0, 1, 1], [], []>} : vector<16x96xbf16>, vector<96x128xbf16>, vector<16x128xf32> -> vector<16x128xf32>
    %25 = arith.addf %17, %24 : vector<16x128xf32>
    %c3 = arith.constant 3 : index
    %c0_23 = arith.constant 0 : index
    %c0_24 = arith.constant 0 : index
    %26 = vector.load %arg2[%c3, %c0_23, %c0_24] : memref<4x16x32xbf16, #tpu.memory_space<vmem>>, vector<1x16x32xbf16>
    %27 = vector.shape_cast %26 : vector<1x16x32xbf16> to vector<16x32xbf16>
    %cst_25 = arith.constant dense<0.000000e+00> : vector<16x96xf32>
    %28 = tpu.matmul %27, %2, %cst_25 {dimension_numbers = #tpu.dot_dimension_numbers<[1], [0], [0], [1], [0, 0, 1, 1], [], []>} : vector<16x32xbf16>, vector<32x96xbf16>, vector<16x96xf32> -> vector<16x96xf32>
    %29 = arith.truncf %28 : vector<16x96xf32> to vector<16x96xbf16>
    %c3_26 = arith.constant 3 : index
    %c0_27 = arith.constant 0 : index
    %c0_28 = arith.constant 0 : index
    %30 = vector.load %arg3[%c3_26, %c0_27, %c0_28] : memref<4x96x128xbf16, #tpu.memory_space<vmem>>, vector<1x96x128xbf16>
    %31 = vector.shape_cast %30 : vector<1x96x128xbf16> to vector<96x128xbf16>
    %cst_29 = arith.constant dense<0.000000e+00> : vector<16x128xf32>
    %32 = tpu.matmul %29, %31, %cst_29 {dimension_numbers = #tpu.dot_dimension_numbers<[1], [0], [0], [1], [0, 0, 1, 1], [], []>} : vector<16x96xbf16>, vector<96x128xbf16>, vector<16x128xf32> -> vector<16x128xf32>
    %33 = arith.addf %25, %32 : vector<16x128xf32>
    %cst_30 = arith.constant 2.000000e-01 : f32
    %34 = vector.broadcast %cst_30 : f32 to vector<16x128xf32>
    %35 = arith.mulf %34, %33 : vector<16x128xf32>
    %36 = arith.maximumf %33, %35 : vector<16x128xf32>
    %37 = arith.truncf %36 : vector<16x128xf32> to vector<16x128xbf16>
    %c0_31 = arith.constant 0 : index
    %c0_32 = arith.constant 0 : index
    %c0_33 = arith.constant 0 : index
    %38 = vector.load %arg4[%c0_31, %c0_32, %c0_33] : memref<3x8x16xbf16, #tpu.memory_space<vmem>>, vector<1x8x16xbf16>
    %39 = vector.shape_cast %38 : vector<1x8x16xbf16> to vector<8x16xbf16>
    %cst_34 = arith.constant dense<0.000000e+00> : vector<8x128xf32>
    %40 = tpu.matmul %39, %37, %cst_34 {dimension_numbers = #tpu.dot_dimension_numbers<[1], [0], [0], [1], [0, 0, 1, 1], [], []>} : vector<8x16xbf16>, vector<16x128xbf16>, vector<8x128xf32> -> vector<8x128xf32>
    %41 = arith.truncf %40 : vector<8x128xf32> to vector<8x128xbf16>
    %c0_35 = arith.constant 0 : index
    %c0_36 = arith.constant 0 : index
    %c0_37 = arith.constant 0 : index
    %42 = vector.load %arg5[%c0_35, %c0_36, %c0_37] : memref<3x128x128xbf16, #tpu.memory_space<vmem>>, vector<1x128x128xbf16>
    %43 = vector.shape_cast %42 : vector<1x128x128xbf16> to vector<128x128xbf16>
    %cst_38 = arith.constant dense<0.000000e+00> : vector<8x128xf32>
    %44 = tpu.matmul %41, %43, %cst_38 {dimension_numbers = #tpu.dot_dimension_numbers<[1], [0], [0], [1], [0, 0, 1, 1], [], []>} : vector<8x128xbf16>, vector<128x128xbf16>, vector<8x128xf32> -> vector<8x128xf32>
    %c1_39 = arith.constant 1 : index
    %c0_40 = arith.constant 0 : index
    %c0_41 = arith.constant 0 : index
    %45 = vector.load %arg4[%c1_39, %c0_40, %c0_41] : memref<3x8x16xbf16, #tpu.memory_space<vmem>>, vector<1x8x16xbf16>
    %46 = vector.shape_cast %45 : vector<1x8x16xbf16> to vector<8x16xbf16>
    %cst_42 = arith.constant dense<0.000000e+00> : vector<8x128xf32>
    %47 = tpu.matmul %46, %37, %cst_42 {dimension_numbers = #tpu.dot_dimension_numbers<[1], [0], [0], [1], [0, 0, 1, 1], [], []>} : vector<8x16xbf16>, vector<16x128xbf16>, vector<8x128xf32> -> vector<8x128xf32>
    %48 = arith.truncf %47 : vector<8x128xf32> to vector<8x128xbf16>
    %c1_43 = arith.constant 1 : index
    %c0_44 = arith.constant 0 : index
    %c0_45 = arith.constant 0 : index
    %49 = vector.load %arg5[%c1_43, %c0_44, %c0_45] : memref<3x128x128xbf16, #tpu.memory_space<vmem>>, vector<1x128x128xbf16>
    %50 = vector.shape_cast %49 : vector<1x128x128xbf16> to vector<128x128xbf16>
    %cst_46 = arith.constant dense<0.000000e+00> : vector<8x128xf32>
    %51 = tpu.matmul %48, %50, %cst_46 {dimension_numbers = #tpu.dot_dimension_numbers<[1], [0], [0], [1], [0, 0, 1, 1], [], []>} : vector<8x128xbf16>, vector<128x128xbf16>, vector<8x128xf32> -> vector<8x128xf32>
    %52 = arith.addf %44, %51 : vector<8x128xf32>
    %c2_47 = arith.constant 2 : index
    %c0_48 = arith.constant 0 : index
    %c0_49 = arith.constant 0 : index
    %53 = vector.load %arg4[%c2_47, %c0_48, %c0_49] : memref<3x8x16xbf16, #tpu.memory_space<vmem>>, vector<1x8x16xbf16>
    %54 = vector.shape_cast %53 : vector<1x8x16xbf16> to vector<8x16xbf16>
    %cst_50 = arith.constant dense<0.000000e+00> : vector<8x128xf32>
    %55 = tpu.matmul %54, %37, %cst_50 {dimension_numbers = #tpu.dot_dimension_numbers<[1], [0], [0], [1], [0, 0, 1, 1], [], []>} : vector<8x16xbf16>, vector<16x128xbf16>, vector<8x128xf32> -> vector<8x128xf32>
    %56 = arith.truncf %55 : vector<8x128xf32> to vector<8x128xbf16>
    %c2_51 = arith.constant 2 : index
    %c0_52 = arith.constant 0 : index
    %c0_53 = arith.constant 0 : index
    %57 = vector.load %arg5[%c2_51, %c0_52, %c0_53] : memref<3x128x128xbf16, #tpu.memory_space<vmem>>, vector<1x128x128xbf16>
    %58 = vector.shape_cast %57 : vector<1x128x128xbf16> to vector<128x128xbf16>
    %cst_54 = arith.constant dense<0.000000e+00> : vector<8x128xf32>
    %59 = tpu.matmul %56, %58, %cst_54 {dimension_numbers = #tpu.dot_dimension_numbers<[1], [0], [0], [1], [0, 0, 1, 1], [], []>} : vector<8x128xbf16>, vector<128x128xbf16>, vector<8x128xf32> -> vector<8x128xf32>
    %60 = arith.addf %52, %59 : vector<8x128xf32>
    %c0_55 = arith.constant 0 : index
    %c0_56 = arith.constant 0 : index
    %61 = vector.load %arg6[%c0_55, %c0_56] : memref<1x128xf32, #tpu.memory_space<vmem>>, vector<1x128xf32>
    %62 = vector.broadcast %61 : vector<1x128xf32> to vector<8x128xf32>
    %63 = arith.addf %60, %62 : vector<8x128xf32>
    %cst_57 = arith.constant 0.000000e+00 : f32
    %64 = vector.broadcast %cst_57 : f32 to vector<8x128xf32>
    %65 = arith.maximumf %63, %64 : vector<8x128xf32>
    %66 = arith.truncf %65 : vector<8x128xf32> to vector<8x128xbf16>
    %c0_58 = arith.constant 0 : index
    %c0_59 = arith.constant 0 : index
    %c0_60 = arith.constant 0 : index
    %67 = vector.load %arg7[%c0_58, %c0_59, %c0_60] : memref<3x8x8xbf16, #tpu.memory_space<vmem>>, vector<1x8x8xbf16>
    %68 = vector.shape_cast %67 : vector<1x8x8xbf16> to vector<8x8xbf16>
    %cst_61 = arith.constant dense<0.000000e+00> : vector<8x128xf32>
    %69 = tpu.matmul %68, %66, %cst_61 {dimension_numbers = #tpu.dot_dimension_numbers<[1], [0], [0], [1], [0, 0, 1, 1], [], []>} : vector<8x8xbf16>, vector<8x128xbf16>, vector<8x128xf32> -> vector<8x128xf32>
    %70 = arith.truncf %69 : vector<8x128xf32> to vector<8x128xbf16>
    %c0_62 = arith.constant 0 : index
    %c0_63 = arith.constant 0 : index
    %c0_64 = arith.constant 0 : index
    %71 = vector.load %arg8[%c0_62, %c0_63, %c0_64] : memref<3x128x128xbf16, #tpu.memory_space<vmem>>, vector<1x128x128xbf16>
    %72 = vector.shape_cast %71 : vector<1x128x128xbf16> to vector<128x128xbf16>
    %cst_65 = arith.constant dense<0.000000e+00> : vector<8x128xf32>
    %73 = tpu.matmul %70, %72, %cst_65 {dimension_numbers = #tpu.dot_dimension_numbers<[1], [0], [0], [1], [0, 0, 1, 1], [], []>} : vector<8x128xbf16>, vector<128x128xbf16>, vector<8x128xf32> -> vector<8x128xf32>
    %c1_66 = arith.constant 1 : index
    %c0_67 = arith.constant 0 : index
    %c0_68 = arith.constant 0 : index
    %74 = vector.load %arg7[%c1_66, %c0_67, %c0_68] : memref<3x8x8xbf16, #tpu.memory_space<vmem>>, vector<1x8x8xbf16>
    %75 = vector.shape_cast %74 : vector<1x8x8xbf16> to vector<8x8xbf16>
    %cst_69 = arith.constant dense<0.000000e+00> : vector<8x128xf32>
    %76 = tpu.matmul %75, %66, %cst_69 {dimension_numbers = #tpu.dot_dimension_numbers<[1], [0], [0], [1], [0, 0, 1, 1], [], []>} : vector<8x8xbf16>, vector<8x128xbf16>, vector<8x128xf32> -> vector<8x128xf32>
    %77 = arith.truncf %76 : vector<8x128xf32> to vector<8x128xbf16>
    %c1_70 = arith.constant 1 : index
    %c0_71 = arith.constant 0 : index
    %c0_72 = arith.constant 0 : index
    %78 = vector.load %arg8[%c1_70, %c0_71, %c0_72] : memref<3x128x128xbf16, #tpu.memory_space<vmem>>, vector<1x128x128xbf16>
    %79 = vector.shape_cast %78 : vector<1x128x128xbf16> to vector<128x128xbf16>
    %cst_73 = arith.constant dense<0.000000e+00> : vector<8x128xf32>
    %80 = tpu.matmul %77, %79, %cst_73 {dimension_numbers = #tpu.dot_dimension_numbers<[1], [0], [0], [1], [0, 0, 1, 1], [], []>} : vector<8x128xbf16>, vector<128x128xbf16>, vector<8x128xf32> -> vector<8x128xf32>
    %81 = arith.addf %73, %80 : vector<8x128xf32>
    %c2_74 = arith.constant 2 : index
    %c0_75 = arith.constant 0 : index
    %c0_76 = arith.constant 0 : index
    %82 = vector.load %arg7[%c2_74, %c0_75, %c0_76] : memref<3x8x8xbf16, #tpu.memory_space<vmem>>, vector<1x8x8xbf16>
    %83 = vector.shape_cast %82 : vector<1x8x8xbf16> to vector<8x8xbf16>
    %cst_77 = arith.constant dense<0.000000e+00> : vector<8x128xf32>
    %84 = tpu.matmul %83, %66, %cst_77 {dimension_numbers = #tpu.dot_dimension_numbers<[1], [0], [0], [1], [0, 0, 1, 1], [], []>} : vector<8x8xbf16>, vector<8x128xbf16>, vector<8x128xf32> -> vector<8x128xf32>
    %85 = arith.truncf %84 : vector<8x128xf32> to vector<8x128xbf16>
    %c2_78 = arith.constant 2 : index
    %c0_79 = arith.constant 0 : index
    %c0_80 = arith.constant 0 : index
    %86 = vector.load %arg8[%c2_78, %c0_79, %c0_80] : memref<3x128x128xbf16, #tpu.memory_space<vmem>>, vector<1x128x128xbf16>
    %87 = vector.shape_cast %86 : vector<1x128x128xbf16> to vector<128x128xbf16>
    %cst_81 = arith.constant dense<0.000000e+00> : vector<8x128xf32>
    %88 = tpu.matmul %85, %87, %cst_81 {dimension_numbers = #tpu.dot_dimension_numbers<[1], [0], [0], [1], [0, 0, 1, 1], [], []>} : vector<8x128xbf16>, vector<128x128xbf16>, vector<8x128xf32> -> vector<8x128xf32>
    %89 = arith.addf %81, %88 : vector<8x128xf32>
    %c0_82 = arith.constant 0 : index
    %c0_83 = arith.constant 0 : index
    %c0_84 = arith.constant 0 : index
    %90 = vector.load %arg9[%c0_82, %c0_83, %c0_84] : memref<1x8x16xbf16, #tpu.memory_space<vmem>>, vector<1x8x16xbf16>
    %91 = vector.shape_cast %90 : vector<1x8x16xbf16> to vector<8x16xbf16>
    %cst_85 = arith.constant dense<0.000000e+00> : vector<8x128xf32>
    %92 = tpu.matmul %91, %37, %cst_85 {dimension_numbers = #tpu.dot_dimension_numbers<[1], [0], [0], [1], [0, 0, 1, 1], [], []>} : vector<8x16xbf16>, vector<16x128xbf16>, vector<8x128xf32> -> vector<8x128xf32>
    %93 = arith.truncf %92 : vector<8x128xf32> to vector<8x128xbf16>
    %c0_86 = arith.constant 0 : index
    %c0_87 = arith.constant 0 : index
    %c0_88 = arith.constant 0 : index
    %94 = vector.load %arg10[%c0_86, %c0_87, %c0_88] : memref<1x128x128xbf16, #tpu.memory_space<vmem>>, vector<1x128x128xbf16>
    %95 = vector.shape_cast %94 : vector<1x128x128xbf16> to vector<128x128xbf16>
    %cst_89 = arith.constant dense<0.000000e+00> : vector<8x128xf32>
    %96 = tpu.matmul %93, %95, %cst_89 {dimension_numbers = #tpu.dot_dimension_numbers<[1], [0], [0], [1], [0, 0, 1, 1], [], []>} : vector<8x128xbf16>, vector<128x128xbf16>, vector<8x128xf32> -> vector<8x128xf32>
    %97 = arith.addf %89, %96 : vector<8x128xf32>
    %c0_90 = arith.constant 0 : index
    %c0_91 = arith.constant 0 : index
    %98 = vector.load %arg11[%c0_90, %c0_91] : memref<1x128xf32, #tpu.memory_space<vmem>>, vector<1x128xf32>
    %99 = vector.broadcast %98 : vector<1x128xf32> to vector<8x128xf32>
    %100 = arith.addf %97, %99 : vector<8x128xf32>
    %cst_92 = arith.constant 0.000000e+00 : f32
    %101 = vector.broadcast %cst_92 : f32 to vector<8x128xf32>
    %102 = arith.maximumf %100, %101 : vector<8x128xf32>
    %103 = arith.truncf %102 : vector<8x128xf32> to vector<8x128xbf16>
    %c0_93 = arith.constant 0 : index
    %c0_94 = arith.constant 0 : index
    %c0_95 = arith.constant 0 : index
    %104 = vector.load %arg12[%c0_93, %c0_94, %c0_95] : memref<3x4x8xbf16, #tpu.memory_space<vmem>>, vector<1x4x8xbf16>
    %105 = vector.shape_cast %104 : vector<1x4x8xbf16> to vector<4x8xbf16>
    %cst_96 = arith.constant dense<0.000000e+00> : vector<4x128xf32>
    %106 = tpu.matmul %105, %103, %cst_96 {dimension_numbers = #tpu.dot_dimension_numbers<[1], [0], [0], [1], [0, 0, 1, 1], [], []>} : vector<4x8xbf16>, vector<8x128xbf16>, vector<4x128xf32> -> vector<4x128xf32>
    %107 = arith.truncf %106 : vector<4x128xf32> to vector<4x128xbf16>
    %c0_97 = arith.constant 0 : index
    %c0_98 = arith.constant 0 : index
    %c0_99 = arith.constant 0 : index
    %108 = vector.load %arg13[%c0_97, %c0_98, %c0_99] : memref<3x128x128xbf16, #tpu.memory_space<vmem>>, vector<1x128x128xbf16>
    %109 = vector.shape_cast %108 : vector<1x128x128xbf16> to vector<128x128xbf16>
    %cst_100 = arith.constant dense<0.000000e+00> : vector<4x128xf32>
    %110 = tpu.matmul %107, %109, %cst_100 {dimension_numbers = #tpu.dot_dimension_numbers<[1], [0], [0], [1], [0, 0, 1, 1], [], []>} : vector<4x128xbf16>, vector<128x128xbf16>, vector<4x128xf32> -> vector<4x128xf32>
    %c1_101 = arith.constant 1 : index
    %c0_102 = arith.constant 0 : index
    %c0_103 = arith.constant 0 : index
    %111 = vector.load %arg12[%c1_101, %c0_102, %c0_103] : memref<3x4x8xbf16, #tpu.memory_space<vmem>>, vector<1x4x8xbf16>
    %112 = vector.shape_cast %111 : vector<1x4x8xbf16> to vector<4x8xbf16>
    %cst_104 = arith.constant dense<0.000000e+00> : vector<4x128xf32>
    %113 = tpu.matmul %112, %103, %cst_104 {dimension_numbers = #tpu.dot_dimension_numbers<[1], [0], [0], [1], [0, 0, 1, 1], [], []>} : vector<4x8xbf16>, vector<8x128xbf16>, vector<4x128xf32> -> vector<4x128xf32>
    %114 = arith.truncf %113 : vector<4x128xf32> to vector<4x128xbf16>
    %c1_105 = arith.constant 1 : index
    %c0_106 = arith.constant 0 : index
    %c0_107 = arith.constant 0 : index
    %115 = vector.load %arg13[%c1_105, %c0_106, %c0_107] : memref<3x128x128xbf16, #tpu.memory_space<vmem>>, vector<1x128x128xbf16>
    %116 = vector.shape_cast %115 : vector<1x128x128xbf16> to vector<128x128xbf16>
    %cst_108 = arith.constant dense<0.000000e+00> : vector<4x128xf32>
    %117 = tpu.matmul %114, %116, %cst_108 {dimension_numbers = #tpu.dot_dimension_numbers<[1], [0], [0], [1], [0, 0, 1, 1], [], []>} : vector<4x128xbf16>, vector<128x128xbf16>, vector<4x128xf32> -> vector<4x128xf32>
    %118 = arith.addf %110, %117 : vector<4x128xf32>
    %c2_109 = arith.constant 2 : index
    %c0_110 = arith.constant 0 : index
    %c0_111 = arith.constant 0 : index
    %119 = vector.load %arg12[%c2_109, %c0_110, %c0_111] : memref<3x4x8xbf16, #tpu.memory_space<vmem>>, vector<1x4x8xbf16>
    %120 = vector.shape_cast %119 : vector<1x4x8xbf16> to vector<4x8xbf16>
    %cst_112 = arith.constant dense<0.000000e+00> : vector<4x128xf32>
    %121 = tpu.matmul %120, %103, %cst_112 {dimension_numbers = #tpu.dot_dimension_numbers<[1], [0], [0], [1], [0, 0, 1, 1], [], []>} : vector<4x8xbf16>, vector<8x128xbf16>, vector<4x128xf32> -> vector<4x128xf32>
    %122 = arith.truncf %121 : vector<4x128xf32> to vector<4x128xbf16>
    %c2_113 = arith.constant 2 : index
    %c0_114 = arith.constant 0 : index
    %c0_115 = arith.constant 0 : index
    %123 = vector.load %arg13[%c2_113, %c0_114, %c0_115] : memref<3x128x128xbf16, #tpu.memory_space<vmem>>, vector<1x128x128xbf16>
    %124 = vector.shape_cast %123 : vector<1x128x128xbf16> to vector<128x128xbf16>
    %cst_116 = arith.constant dense<0.000000e+00> : vector<4x128xf32>
    %125 = tpu.matmul %122, %124, %cst_116 {dimension_numbers = #tpu.dot_dimension_numbers<[1], [0], [0], [1], [0, 0, 1, 1], [], []>} : vector<4x128xbf16>, vector<128x128xbf16>, vector<4x128xf32> -> vector<4x128xf32>
    %126 = arith.addf %118, %125 : vector<4x128xf32>
    %c0_117 = arith.constant 0 : index
    %c0_118 = arith.constant 0 : index
    %127 = vector.load %arg14[%c0_117, %c0_118] : memref<1x128xf32, #tpu.memory_space<vmem>>, vector<1x128xf32>
    %128 = vector.broadcast %127 : vector<1x128xf32> to vector<4x128xf32>
    %129 = arith.addf %126, %128 : vector<4x128xf32>
    %cst_119 = arith.constant 0.000000e+00 : f32
    %130 = vector.broadcast %cst_119 : f32 to vector<4x128xf32>
    %131 = arith.maximumf %129, %130 : vector<4x128xf32>
    %132 = arith.truncf %131 : vector<4x128xf32> to vector<4x128xbf16>
    %c0_120 = arith.constant 0 : index
    %c0_121 = arith.constant 0 : index
    %c0_122 = arith.constant 0 : index
    %133 = vector.load %arg15[%c0_120, %c0_121, %c0_122] : memref<3x4x4xbf16, #tpu.memory_space<vmem>>, vector<1x4x4xbf16>
    %134 = vector.shape_cast %133 : vector<1x4x4xbf16> to vector<4x4xbf16>
    %cst_123 = arith.constant dense<0.000000e+00> : vector<4x128xf32>
    %135 = tpu.matmul %134, %132, %cst_123 {dimension_numbers = #tpu.dot_dimension_numbers<[1], [0], [0], [1], [0, 0, 1, 1], [], []>} : vector<4x4xbf16>, vector<4x128xbf16>, vector<4x128xf32> -> vector<4x128xf32>
    %136 = arith.truncf %135 : vector<4x128xf32> to vector<4x128xbf16>
    %c0_124 = arith.constant 0 : index
    %c0_125 = arith.constant 0 : index
    %c0_126 = arith.constant 0 : index
    %137 = vector.load %arg16[%c0_124, %c0_125, %c0_126] : memref<3x128x128xbf16, #tpu.memory_space<vmem>>, vector<1x128x128xbf16>
    %138 = vector.shape_cast %137 : vector<1x128x128xbf16> to vector<128x128xbf16>
    %cst_127 = arith.constant dense<0.000000e+00> : vector<4x128xf32>
    %139 = tpu.matmul %136, %138, %cst_127 {dimension_numbers = #tpu.dot_dimension_numbers<[1], [0], [0], [1], [0, 0, 1, 1], [], []>} : vector<4x128xbf16>, vector<128x128xbf16>, vector<4x128xf32> -> vector<4x128xf32>
    %c1_128 = arith.constant 1 : index
    %c0_129 = arith.constant 0 : index
    %c0_130 = arith.constant 0 : index
    %140 = vector.load %arg15[%c1_128, %c0_129, %c0_130] : memref<3x4x4xbf16, #tpu.memory_space<vmem>>, vector<1x4x4xbf16>
    %141 = vector.shape_cast %140 : vector<1x4x4xbf16> to vector<4x4xbf16>
    %cst_131 = arith.constant dense<0.000000e+00> : vector<4x128xf32>
    %142 = tpu.matmul %141, %132, %cst_131 {dimension_numbers = #tpu.dot_dimension_numbers<[1], [0], [0], [1], [0, 0, 1, 1], [], []>} : vector<4x4xbf16>, vector<4x128xbf16>, vector<4x128xf32> -> vector<4x128xf32>
    %143 = arith.truncf %142 : vector<4x128xf32> to vector<4x128xbf16>
    %c1_132 = arith.constant 1 : index
    %c0_133 = arith.constant 0 : index
    %c0_134 = arith.constant 0 : index
    %144 = vector.load %arg16[%c1_132, %c0_133, %c0_134] : memref<3x128x128xbf16, #tpu.memory_space<vmem>>, vector<1x128x128xbf16>
    %145 = vector.shape_cast %144 : vector<1x128x128xbf16> to vector<128x128xbf16>
    %cst_135 = arith.constant dense<0.000000e+00> : vector<4x128xf32>
    %146 = tpu.matmul %143, %145, %cst_135 {dimension_numbers = #tpu.dot_dimension_numbers<[1], [0], [0], [1], [0, 0, 1, 1], [], []>} : vector<4x128xbf16>, vector<128x128xbf16>, vector<4x128xf32> -> vector<4x128xf32>
    %147 = arith.addf %139, %146 : vector<4x128xf32>
    %c2_136 = arith.constant 2 : index
    %c0_137 = arith.constant 0 : index
    %c0_138 = arith.constant 0 : index
    %148 = vector.load %arg15[%c2_136, %c0_137, %c0_138] : memref<3x4x4xbf16, #tpu.memory_space<vmem>>, vector<1x4x4xbf16>
    %149 = vector.shape_cast %148 : vector<1x4x4xbf16> to vector<4x4xbf16>
    %cst_139 = arith.constant dense<0.000000e+00> : vector<4x128xf32>
    %150 = tpu.matmul %149, %132, %cst_139 {dimension_numbers = #tpu.dot_dimension_numbers<[1], [0], [0], [1], [0, 0, 1, 1], [], []>} : vector<4x4xbf16>, vector<4x128xbf16>, vector<4x128xf32> -> vector<4x128xf32>
    %151 = arith.truncf %150 : vector<4x128xf32> to vector<4x128xbf16>
    %c2_140 = arith.constant 2 : index
    %c0_141 = arith.constant 0 : index
    %c0_142 = arith.constant 0 : index
    %152 = vector.load %arg16[%c2_140, %c0_141, %c0_142] : memref<3x128x128xbf16, #tpu.memory_space<vmem>>, vector<1x128x128xbf16>
    %153 = vector.shape_cast %152 : vector<1x128x128xbf16> to vector<128x128xbf16>
    %cst_143 = arith.constant dense<0.000000e+00> : vector<4x128xf32>
    %154 = tpu.matmul %151, %153, %cst_143 {dimension_numbers = #tpu.dot_dimension_numbers<[1], [0], [0], [1], [0, 0, 1, 1], [], []>} : vector<4x128xbf16>, vector<128x128xbf16>, vector<4x128xf32> -> vector<4x128xf32>
    %155 = arith.addf %147, %154 : vector<4x128xf32>
    %c0_144 = arith.constant 0 : index
    %c0_145 = arith.constant 0 : index
    %c0_146 = arith.constant 0 : index
    %156 = vector.load %arg17[%c0_144, %c0_145, %c0_146] : memref<1x4x8xbf16, #tpu.memory_space<vmem>>, vector<1x4x8xbf16>
    %157 = vector.shape_cast %156 : vector<1x4x8xbf16> to vector<4x8xbf16>
    %cst_147 = arith.constant dense<0.000000e+00> : vector<4x128xf32>
    %158 = tpu.matmul %157, %103, %cst_147 {dimension_numbers = #tpu.dot_dimension_numbers<[1], [0], [0], [1], [0, 0, 1, 1], [], []>} : vector<4x8xbf16>, vector<8x128xbf16>, vector<4x128xf32> -> vector<4x128xf32>
    %159 = arith.truncf %158 : vector<4x128xf32> to vector<4x128xbf16>
    %c0_148 = arith.constant 0 : index
    %c0_149 = arith.constant 0 : index
    %c0_150 = arith.constant 0 : index
    %160 = vector.load %arg18[%c0_148, %c0_149, %c0_150] : memref<1x128x128xbf16, #tpu.memory_space<vmem>>, vector<1x128x128xbf16>
    %161 = vector.shape_cast %160 : vector<1x128x128xbf16> to vector<128x128xbf16>
    %cst_151 = arith.constant dense<0.000000e+00> : vector<4x128xf32>
    %162 = tpu.matmul %159, %161, %cst_151 {dimension_numbers = #tpu.dot_dimension_numbers<[1], [0], [0], [1], [0, 0, 1, 1], [], []>} : vector<4x128xbf16>, vector<128x128xbf16>, vector<4x128xf32> -> vector<4x128xf32>
    %163 = arith.addf %155, %162 : vector<4x128xf32>
    %c0_152 = arith.constant 0 : index
    %c0_153 = arith.constant 0 : index
    %164 = vector.load %arg19[%c0_152, %c0_153] : memref<1x128xf32, #tpu.memory_space<vmem>>, vector<1x128xf32>
    %165 = vector.broadcast %164 : vector<1x128xf32> to vector<4x128xf32>
    %166 = arith.addf %163, %165 : vector<4x128xf32>
    %cst_154 = arith.constant 0.000000e+00 : f32
    %167 = vector.broadcast %cst_154 : f32 to vector<4x128xf32>
    %168 = arith.maximumf %166, %167 : vector<4x128xf32>
    %169 = arith.truncf %168 : vector<4x128xf32> to vector<4x128xbf16>
    %c0_155 = arith.constant 0 : index
    %c0_156 = arith.constant 0 : index
    %c0_157 = arith.constant 0 : index
    %170 = vector.load %arg20[%c0_155, %c0_156, %c0_157] : memref<3x2x4xbf16, #tpu.memory_space<vmem>>, vector<1x2x4xbf16>
    %171 = vector.shape_cast %170 : vector<1x2x4xbf16> to vector<2x4xbf16>
    %cst_158 = arith.constant dense<0.000000e+00> : vector<2x128xf32>
    %172 = tpu.matmul %171, %169, %cst_158 {dimension_numbers = #tpu.dot_dimension_numbers<[1], [0], [0], [1], [0, 0, 1, 1], [], []>} : vector<2x4xbf16>, vector<4x128xbf16>, vector<2x128xf32> -> vector<2x128xf32>
    %173 = arith.truncf %172 : vector<2x128xf32> to vector<2x128xbf16>
    %c0_159 = arith.constant 0 : index
    %c0_160 = arith.constant 0 : index
    %c0_161 = arith.constant 0 : index
    %174 = vector.load %arg21[%c0_159, %c0_160, %c0_161] : memref<3x128x128xbf16, #tpu.memory_space<vmem>>, vector<1x128x128xbf16>
    %175 = vector.shape_cast %174 : vector<1x128x128xbf16> to vector<128x128xbf16>
    %cst_162 = arith.constant dense<0.000000e+00> : vector<2x128xf32>
    %176 = tpu.matmul %173, %175, %cst_162 {dimension_numbers = #tpu.dot_dimension_numbers<[1], [0], [0], [1], [0, 0, 1, 1], [], []>} : vector<2x128xbf16>, vector<128x128xbf16>, vector<2x128xf32> -> vector<2x128xf32>
    %c1_163 = arith.constant 1 : index
    %c0_164 = arith.constant 0 : index
    %c0_165 = arith.constant 0 : index
    %177 = vector.load %arg20[%c1_163, %c0_164, %c0_165] : memref<3x2x4xbf16, #tpu.memory_space<vmem>>, vector<1x2x4xbf16>
    %178 = vector.shape_cast %177 : vector<1x2x4xbf16> to vector<2x4xbf16>
    %cst_166 = arith.constant dense<0.000000e+00> : vector<2x128xf32>
    %179 = tpu.matmul %178, %169, %cst_166 {dimension_numbers = #tpu.dot_dimension_numbers<[1], [0], [0], [1], [0, 0, 1, 1], [], []>} : vector<2x4xbf16>, vector<4x128xbf16>, vector<2x128xf32> -> vector<2x128xf32>
    %180 = arith.truncf %179 : vector<2x128xf32> to vector<2x128xbf16>
    %c1_167 = arith.constant 1 : index
    %c0_168 = arith.constant 0 : index
    %c0_169 = arith.constant 0 : index
    %181 = vector.load %arg21[%c1_167, %c0_168, %c0_169] : memref<3x128x128xbf16, #tpu.memory_space<vmem>>, vector<1x128x128xbf16>
    %182 = vector.shape_cast %181 : vector<1x128x128xbf16> to vector<128x128xbf16>
    %cst_170 = arith.constant dense<0.000000e+00> : vector<2x128xf32>
    %183 = tpu.matmul %180, %182, %cst_170 {dimension_numbers = #tpu.dot_dimension_numbers<[1], [0], [0], [1], [0, 0, 1, 1], [], []>} : vector<2x128xbf16>, vector<128x128xbf16>, vector<2x128xf32> -> vector<2x128xf32>
    %184 = arith.addf %176, %183 : vector<2x128xf32>
    %c2_171 = arith.constant 2 : index
    %c0_172 = arith.constant 0 : index
    %c0_173 = arith.constant 0 : index
    %185 = vector.load %arg20[%c2_171, %c0_172, %c0_173] : memref<3x2x4xbf16, #tpu.memory_space<vmem>>, vector<1x2x4xbf16>
    %186 = vector.shape_cast %185 : vector<1x2x4xbf16> to vector<2x4xbf16>
    %cst_174 = arith.constant dense<0.000000e+00> : vector<2x128xf32>
    %187 = tpu.matmul %186, %169, %cst_174 {dimension_numbers = #tpu.dot_dimension_numbers<[1], [0], [0], [1], [0, 0, 1, 1], [], []>} : vector<2x4xbf16>, vector<4x128xbf16>, vector<2x128xf32> -> vector<2x128xf32>
    %188 = arith.truncf %187 : vector<2x128xf32> to vector<2x128xbf16>
    %c2_175 = arith.constant 2 : index
    %c0_176 = arith.constant 0 : index
    %c0_177 = arith.constant 0 : index
    %189 = vector.load %arg21[%c2_175, %c0_176, %c0_177] : memref<3x128x128xbf16, #tpu.memory_space<vmem>>, vector<1x128x128xbf16>
    %190 = vector.shape_cast %189 : vector<1x128x128xbf16> to vector<128x128xbf16>
    %cst_178 = arith.constant dense<0.000000e+00> : vector<2x128xf32>
    %191 = tpu.matmul %188, %190, %cst_178 {dimension_numbers = #tpu.dot_dimension_numbers<[1], [0], [0], [1], [0, 0, 1, 1], [], []>} : vector<2x128xbf16>, vector<128x128xbf16>, vector<2x128xf32> -> vector<2x128xf32>
    %192 = arith.addf %184, %191 : vector<2x128xf32>
    %c0_179 = arith.constant 0 : index
    %c0_180 = arith.constant 0 : index
    %193 = vector.load %arg22[%c0_179, %c0_180] : memref<1x128xf32, #tpu.memory_space<vmem>>, vector<1x128xf32>
    %194 = vector.broadcast %193 : vector<1x128xf32> to vector<2x128xf32>
    %195 = arith.addf %192, %194 : vector<2x128xf32>
    %cst_181 = arith.constant 0.000000e+00 : f32
    %196 = vector.broadcast %cst_181 : f32 to vector<2x128xf32>
    %197 = arith.maximumf %195, %196 : vector<2x128xf32>
    %198 = arith.truncf %197 : vector<2x128xf32> to vector<2x128xbf16>
    %c0_182 = arith.constant 0 : index
    %c0_183 = arith.constant 0 : index
    %c0_184 = arith.constant 0 : index
    %199 = vector.load %arg23[%c0_182, %c0_183, %c0_184] : memref<3x2x2xbf16, #tpu.memory_space<vmem>>, vector<1x2x2xbf16>
    %200 = vector.shape_cast %199 : vector<1x2x2xbf16> to vector<2x2xbf16>
    %cst_185 = arith.constant dense<0.000000e+00> : vector<2x128xf32>
    %201 = tpu.matmul %200, %198, %cst_185 {dimension_numbers = #tpu.dot_dimension_numbers<[1], [0], [0], [1], [0, 0, 1, 1], [], []>} : vector<2x2xbf16>, vector<2x128xbf16>, vector<2x128xf32> -> vector<2x128xf32>
    %202 = arith.truncf %201 : vector<2x128xf32> to vector<2x128xbf16>
    %c0_186 = arith.constant 0 : index
    %c0_187 = arith.constant 0 : index
    %c0_188 = arith.constant 0 : index
    %203 = vector.load %arg24[%c0_186, %c0_187, %c0_188] : memref<3x128x128xbf16, #tpu.memory_space<vmem>>, vector<1x128x128xbf16>
    %204 = vector.shape_cast %203 : vector<1x128x128xbf16> to vector<128x128xbf16>
    %cst_189 = arith.constant dense<0.000000e+00> : vector<2x128xf32>
    %205 = tpu.matmul %202, %204, %cst_189 {dimension_numbers = #tpu.dot_dimension_numbers<[1], [0], [0], [1], [0, 0, 1, 1], [], []>} : vector<2x128xbf16>, vector<128x128xbf16>, vector<2x128xf32> -> vector<2x128xf32>
    %c1_190 = arith.constant 1 : index
    %c0_191 = arith.constant 0 : index
    %c0_192 = arith.constant 0 : index
    %206 = vector.load %arg23[%c1_190, %c0_191, %c0_192] : memref<3x2x2xbf16, #tpu.memory_space<vmem>>, vector<1x2x2xbf16>
    %207 = vector.shape_cast %206 : vector<1x2x2xbf16> to vector<2x2xbf16>
    %cst_193 = arith.constant dense<0.000000e+00> : vector<2x128xf32>
    %208 = tpu.matmul %207, %198, %cst_193 {dimension_numbers = #tpu.dot_dimension_numbers<[1], [0], [0], [1], [0, 0, 1, 1], [], []>} : vector<2x2xbf16>, vector<2x128xbf16>, vector<2x128xf32> -> vector<2x128xf32>
    %209 = arith.truncf %208 : vector<2x128xf32> to vector<2x128xbf16>
    %c1_194 = arith.constant 1 : index
    %c0_195 = arith.constant 0 : index
    %c0_196 = arith.constant 0 : index
    %210 = vector.load %arg24[%c1_194, %c0_195, %c0_196] : memref<3x128x128xbf16, #tpu.memory_space<vmem>>, vector<1x128x128xbf16>
    %211 = vector.shape_cast %210 : vector<1x128x128xbf16> to vector<128x128xbf16>
    %cst_197 = arith.constant dense<0.000000e+00> : vector<2x128xf32>
    %212 = tpu.matmul %209, %211, %cst_197 {dimension_numbers = #tpu.dot_dimension_numbers<[1], [0], [0], [1], [0, 0, 1, 1], [], []>} : vector<2x128xbf16>, vector<128x128xbf16>, vector<2x128xf32> -> vector<2x128xf32>
    %213 = arith.addf %205, %212 : vector<2x128xf32>
    %c2_198 = arith.constant 2 : index
    %c0_199 = arith.constant 0 : index
    %c0_200 = arith.constant 0 : index
    %214 = vector.load %arg23[%c2_198, %c0_199, %c0_200] : memref<3x2x2xbf16, #tpu.memory_space<vmem>>, vector<1x2x2xbf16>
    %215 = vector.shape_cast %214 : vector<1x2x2xbf16> to vector<2x2xbf16>
    %cst_201 = arith.constant dense<0.000000e+00> : vector<2x128xf32>
    %216 = tpu.matmul %215, %198, %cst_201 {dimension_numbers = #tpu.dot_dimension_numbers<[1], [0], [0], [1], [0, 0, 1, 1], [], []>} : vector<2x2xbf16>, vector<2x128xbf16>, vector<2x128xf32> -> vector<2x128xf32>
    %217 = arith.truncf %216 : vector<2x128xf32> to vector<2x128xbf16>
    %c2_202 = arith.constant 2 : index
    %c0_203 = arith.constant 0 : index
    %c0_204 = arith.constant 0 : index
    %218 = vector.load %arg24[%c2_202, %c0_203, %c0_204] : memref<3x128x128xbf16, #tpu.memory_space<vmem>>, vector<1x128x128xbf16>
    %219 = vector.shape_cast %218 : vector<1x128x128xbf16> to vector<128x128xbf16>
    %cst_205 = arith.constant dense<0.000000e+00> : vector<2x128xf32>
    %220 = tpu.matmul %217, %219, %cst_205 {dimension_numbers = #tpu.dot_dimension_numbers<[1], [0], [0], [1], [0, 0, 1, 1], [], []>} : vector<2x128xbf16>, vector<128x128xbf16>, vector<2x128xf32> -> vector<2x128xf32>
    %221 = arith.addf %213, %220 : vector<2x128xf32>
    %c0_206 = arith.constant 0 : index
    %c0_207 = arith.constant 0 : index
    %c0_208 = arith.constant 0 : index
    %222 = vector.load %arg25[%c0_206, %c0_207, %c0_208] : memref<1x2x4xbf16, #tpu.memory_space<vmem>>, vector<1x2x4xbf16>
    %223 = vector.shape_cast %222 : vector<1x2x4xbf16> to vector<2x4xbf16>
    %cst_209 = arith.constant dense<0.000000e+00> : vector<2x128xf32>
    %224 = tpu.matmul %223, %169, %cst_209 {dimension_numbers = #tpu.dot_dimension_numbers<[1], [0], [0], [1], [0, 0, 1, 1], [], []>} : vector<2x4xbf16>, vector<4x128xbf16>, vector<2x128xf32> -> vector<2x128xf32>
    %225 = arith.truncf %224 : vector<2x128xf32> to vector<2x128xbf16>
    %c0_210 = arith.constant 0 : index
    %c0_211 = arith.constant 0 : index
    %c0_212 = arith.constant 0 : index
    %226 = vector.load %arg26[%c0_210, %c0_211, %c0_212] : memref<1x128x128xbf16, #tpu.memory_space<vmem>>, vector<1x128x128xbf16>
    %227 = vector.shape_cast %226 : vector<1x128x128xbf16> to vector<128x128xbf16>
    %cst_213 = arith.constant dense<0.000000e+00> : vector<2x128xf32>
    %228 = tpu.matmul %225, %227, %cst_213 {dimension_numbers = #tpu.dot_dimension_numbers<[1], [0], [0], [1], [0, 0, 1, 1], [], []>} : vector<2x128xbf16>, vector<128x128xbf16>, vector<2x128xf32> -> vector<2x128xf32>
    %229 = arith.addf %221, %228 : vector<2x128xf32>
    %c0_214 = arith.constant 0 : index
    %c0_215 = arith.constant 0 : index
    %230 = vector.load %arg27[%c0_214, %c0_215] : memref<1x128xf32, #tpu.memory_space<vmem>>, vector<1x128xf32>
    %231 = vector.broadcast %230 : vector<1x128xf32> to vector<2x128xf32>
    %232 = arith.addf %229, %231 : vector<2x128xf32>
    %cst_216 = arith.constant 0.000000e+00 : f32
    %233 = vector.broadcast %cst_216 : f32 to vector<2x128xf32>
    %234 = arith.maximumf %232, %233 : vector<2x128xf32>
    %cst_217 = arith.constant dense<0.000000e+00> : vector<128xf32>
    %235 = vector.multi_reduction <add>, %234, %cst_217 [0] : vector<2x128xf32> to vector<128xf32>
    %236 = vector.shape_cast %235 : vector<128xf32> to vector<1x128xf32>
    %cst_218 = arith.constant 2.000000e+00 : f32
    %237 = vector.broadcast %cst_218 : f32 to vector<1x128xf32>
    %238 = arith.divf %236, %237 : vector<1x128xf32>
    %c0_219 = arith.constant 0 : index
    %c0_220 = arith.constant 0 : index
    %239 = vector.load %arg28[%c0_219, %c0_220] : memref<1x128xf32, #tpu.memory_space<vmem>>, vector<1x128xf32>
    %240 = arith.mulf %238, %239 : vector<1x128xf32>
    %cst_221 = arith.constant dense<0.000000e+00> : vector<1xf32>
    %241 = vector.multi_reduction <add>, %240, %cst_221 [1] : vector<1x128xf32> to vector<1xf32>
    %242 = vector.shape_cast %241 : vector<1xf32> to vector<1x1xf32>
    %c0_222 = arith.constant 0 : index
    %c0_223 = arith.constant 0 : index
    %243 = vector.load %arg29[%c0_222, %c0_223] : memref<1x1xf32, #tpu.memory_space<vmem>>, vector<1x1xf32>
    %244 = arith.addf %242, %243 : vector<1x1xf32>
    %cst_224 = arith.constant 0.000000e+00 : f32
    %245 = vector.broadcast %cst_224 : f32 to vector<1x1xf32>
    %246 = arith.subf %245, %244 : vector<1x1xf32>
    %247 = math.exp %246 : vector<1x1xf32>
    %cst_225 = arith.constant 1.000000e+00 : f32
    %248 = vector.broadcast %cst_225 : f32 to vector<1x1xf32>
    %249 = arith.addf %248, %247 : vector<1x1xf32>
    %cst_226 = arith.constant 1.000000e+00 : f32
    %250 = vector.broadcast %cst_226 : f32 to vector<1x1xf32>
    %251 = arith.divf %250, %249 : vector<1x1xf32>
    %c0_227 = arith.constant 0 : index
    %c0_228 = arith.constant 0 : index
    %c0_229 = arith.constant 0 : index
    %252 = vector.load %arg30[%c0_227, %c0_228, %c0_229] : memref<1x1x1xf32, #tpu.memory_space<vmem>>, vector<1x1x1xf32>
    %253 = vector.shape_cast %252 : vector<1x1x1xf32> to vector<1x1xf32>
    %254 = vector.shape_cast %251 : vector<1x1xf32> to vector<1x1x1xf32>
    tpu.vector_store %arg30[%c0_227, %c0_228, %c0_229], %254 {strides = array<i32>} : memref<1x1x1xf32, #tpu.memory_space<vmem>>, vector<1x1x1xf32>,
    return
  }
  func.func @transform_0(%arg0: i32) -> (i32, i32, i32) {
    %c0_i32 = arith.constant 0 : i32
    %c0_i32_0 = arith.constant 0 : i32
    %c0_i32_1 = arith.constant 0 : i32
    return %arg0, %c0_i32, %c0_i32_0 : i32, i32, i32
  }
  func.func @transform_1(%arg0: i32) -> (i32, i32, i32) {
    %c0_i32 = arith.constant 0 : i32
    %c0_i32_0 = arith.constant 0 : i32
    %c0_i32_1 = arith.constant 0 : i32
    %c0_i32_2 = arith.constant 0 : i32
    return %c0_i32, %c0_i32_0, %c0_i32_1 : i32, i32, i32
  }
  func.func @transform_2(%arg0: i32) -> (i32, i32, i32) {
    %c0_i32 = arith.constant 0 : i32
    %c0_i32_0 = arith.constant 0 : i32
    %c0_i32_1 = arith.constant 0 : i32
    %c0_i32_2 = arith.constant 0 : i32
    return %c0_i32, %c0_i32_0, %c0_i32_1 : i32, i32, i32
  }
  func.func @transform_3(%arg0: i32) -> (i32, i32, i32) {
    %c0_i32 = arith.constant 0 : i32
    %c0_i32_0 = arith.constant 0 : i32
    %c0_i32_1 = arith.constant 0 : i32
    %c0_i32_2 = arith.constant 0 : i32
    return %c0_i32, %c0_i32_0, %c0_i32_1 : i32, i32, i32
  }
  func.func @transform_4(%arg0: i32) -> (i32, i32, i32) {
    %c0_i32 = arith.constant 0 : i32
    %c0_i32_0 = arith.constant 0 : i32
    %c0_i32_1 = arith.constant 0 : i32
    %c0_i32_2 = arith.constant 0 : i32
    return %c0_i32, %c0_i32_0, %c0_i32_1 : i32, i32, i32
  }
  func.func @transform_5(%arg0: i32) -> (i32, i32) {
    %c0_i32 = arith.constant 0 : i32
    %c0_i32_0 = arith.constant 0 : i32
    %c0_i32_1 = arith.constant 0 : i32
    return %c0_i32, %c0_i32_0 : i32, i32
  }
  func.func @transform_6(%arg0: i32) -> (i32, i32, i32) {
    %c0_i32 = arith.constant 0 : i32
    %c0_i32_0 = arith.constant 0 : i32
    %c0_i32_1 = arith.constant 0 : i32
    %c0_i32_2 = arith.constant 0 : i32
    return %c0_i32, %c0_i32_0, %c0_i32_1 : i32, i32, i32
  }
  func.func @transform_7(%arg0: i32) -> (i32, i32, i32) {
    %c0_i32 = arith.constant 0 : i32
    %c0_i32_0 = arith.constant 0 : i32
    %c0_i32_1 = arith.constant 0 : i32
    %c0_i32_2 = arith.constant 0 : i32
    return %c0_i32, %c0_i32_0, %c0_i32_1 : i32, i32, i32
  }
  func.func @transform_8(%arg0: i32) -> (i32, i32, i32) {
    %c0_i32 = arith.constant 0 : i32
    %c0_i32_0 = arith.constant 0 : i32
    %c0_i32_1 = arith.constant 0 : i32
    %c0_i32_2 = arith.constant 0 : i32
    return %c0_i32, %c0_i32_0, %c0_i32_1 : i32, i32, i32
  }
  func.func @transform_9(%arg0: i32) -> (i32, i32, i32) {
    %c0_i32 = arith.constant 0 : i32
    %c0_i32_0 = arith.constant 0 : i32
    %c0_i32_1 = arith.constant 0 : i32
    %c0_i32_2 = arith.constant 0 : i32
    return %c0_i32, %c0_i32_0, %c0_i32_1 : i32, i32, i32
  }
  func.func @transform_10(%arg0: i32) -> (i32, i32) {
    %c0_i32 = arith.constant 0 : i32
    %c0_i32_0 = arith.constant 0 : i32
    %c0_i32_1 = arith.constant 0 : i32
    return %c0_i32, %c0_i32_0 : i32, i32
  }
  func.func @transform_11(%arg0: i32) -> (i32, i32, i32) {
    %c0_i32 = arith.constant 0 : i32
    %c0_i32_0 = arith.constant 0 : i32
    %c0_i32_1 = arith.constant 0 : i32
    %c0_i32_2 = arith.constant 0 : i32
    return %c0_i32, %c0_i32_0, %c0_i32_1 : i32, i32, i32
  }
  func.func @transform_12(%arg0: i32) -> (i32, i32, i32) {
    %c0_i32 = arith.constant 0 : i32
    %c0_i32_0 = arith.constant 0 : i32
    %c0_i32_1 = arith.constant 0 : i32
    %c0_i32_2 = arith.constant 0 : i32
    return %c0_i32, %c0_i32_0, %c0_i32_1 : i32, i32, i32
  }
  func.func @transform_13(%arg0: i32) -> (i32, i32) {
    %c0_i32 = arith.constant 0 : i32
    %c0_i32_0 = arith.constant 0 : i32
    %c0_i32_1 = arith.constant 0 : i32
    return %c0_i32, %c0_i32_0 : i32, i32
  }
  func.func @transform_14(%arg0: i32) -> (i32, i32, i32) {
    %c0_i32 = arith.constant 0 : i32
    %c0_i32_0 = arith.constant 0 : i32
    %c0_i32_1 = arith.constant 0 : i32
    %c0_i32_2 = arith.constant 0 : i32
    return %c0_i32, %c0_i32_0, %c0_i32_1 : i32, i32, i32
  }
  func.func @transform_15(%arg0: i32) -> (i32, i32, i32) {
    %c0_i32 = arith.constant 0 : i32
    %c0_i32_0 = arith.constant 0 : i32
    %c0_i32_1 = arith.constant 0 : i32
    %c0_i32_2 = arith.constant 0 : i32
    return %c0_i32, %c0_i32_0, %c0_i32_1 : i32, i32, i32
  }
  func.func @transform_16(%arg0: i32) -> (i32, i32, i32) {
    %c0_i32 = arith.constant 0 : i32
    %c0_i32_0 = arith.constant 0 : i32
    %c0_i32_1 = arith.constant 0 : i32
    %c0_i32_2 = arith.constant 0 : i32
    return %c0_i32, %c0_i32_0, %c0_i32_1 : i32, i32, i32
  }
  func.func @transform_17(%arg0: i32) -> (i32, i32, i32) {
    %c0_i32 = arith.constant 0 : i32
    %c0_i32_0 = arith.constant 0 : i32
    %c0_i32_1 = arith.constant 0 : i32
    %c0_i32_2 = arith.constant 0 : i32
    return %c0_i32, %c0_i32_0, %c0_i32_1 : i32, i32, i32
  }
  func.func @transform_18(%arg0: i32) -> (i32, i32) {
    %c0_i32 = arith.constant 0 : i32
    %c0_i32_0 = arith.constant 0 : i32
    %c0_i32_1 = arith.constant 0 : i32
    return %c0_i32, %c0_i32_0 : i32, i32
  }
  func.func @transform_19(%arg0: i32) -> (i32, i32, i32) {
    %c0_i32 = arith.constant 0 : i32
    %c0_i32_0 = arith.constant 0 : i32
    %c0_i32_1 = arith.constant 0 : i32
    %c0_i32_2 = arith.constant 0 : i32
    return %c0_i32, %c0_i32_0, %c0_i32_1 : i32, i32, i32
  }
  func.func @transform_20(%arg0: i32) -> (i32, i32, i32) {
    %c0_i32 = arith.constant 0 : i32
    %c0_i32_0 = arith.constant 0 : i32
    %c0_i32_1 = arith.constant 0 : i32
    %c0_i32_2 = arith.constant 0 : i32
    return %c0_i32, %c0_i32_0, %c0_i32_1 : i32, i32, i32
  }
  func.func @transform_21(%arg0: i32) -> (i32, i32) {
    %c0_i32 = arith.constant 0 : i32
    %c0_i32_0 = arith.constant 0 : i32
    %c0_i32_1 = arith.constant 0 : i32
    return %c0_i32, %c0_i32_0 : i32, i32
  }
  func.func @transform_22(%arg0: i32) -> (i32, i32, i32) {
    %c0_i32 = arith.constant 0 : i32
    %c0_i32_0 = arith.constant 0 : i32
    %c0_i32_1 = arith.constant 0 : i32
    %c0_i32_2 = arith.constant 0 : i32
    return %c0_i32, %c0_i32_0, %c0_i32_1 : i32, i32, i32
  }
  func.func @transform_23(%arg0: i32) -> (i32, i32, i32) {
    %c0_i32 = arith.constant 0 : i32
    %c0_i32_0 = arith.constant 0 : i32
    %c0_i32_1 = arith.constant 0 : i32
    %c0_i32_2 = arith.constant 0 : i32
    return %c0_i32, %c0_i32_0, %c0_i32_1 : i32, i32, i32
  }
  func.func @transform_24(%arg0: i32) -> (i32, i32, i32) {
    %c0_i32 = arith.constant 0 : i32
    %c0_i32_0 = arith.constant 0 : i32
    %c0_i32_1 = arith.constant 0 : i32
    %c0_i32_2 = arith.constant 0 : i32
    return %c0_i32, %c0_i32_0, %c0_i32_1 : i32, i32, i32
  }
  func.func @transform_25(%arg0: i32) -> (i32, i32, i32) {
    %c0_i32 = arith.constant 0 : i32
    %c0_i32_0 = arith.constant 0 : i32
    %c0_i32_1 = arith.constant 0 : i32
    %c0_i32_2 = arith.constant 0 : i32
    return %c0_i32, %c0_i32_0, %c0_i32_1 : i32, i32, i32
  }
  func.func @transform_26(%arg0: i32) -> (i32, i32) {
    %c0_i32 = arith.constant 0 : i32
    %c0_i32_0 = arith.constant 0 : i32
    %c0_i32_1 = arith.constant 0 : i32
    return %c0_i32, %c0_i32_0 : i32, i32
  }
  func.func @transform_27(%arg0: i32) -> (i32, i32) {
    %c0_i32 = arith.constant 0 : i32
    %c0_i32_0 = arith.constant 0 : i32
    %c0_i32_1 = arith.constant 0 : i32
    return %c0_i32, %c0_i32_0 : i32, i32
  }
  func.func @transform_28(%arg0: i32) -> (i32, i32) {
    %c0_i32 = arith.constant 0 : i32
    %c0_i32_0 = arith.constant 0 : i32
    %c0_i32_1 = arith.constant 0 : i32
    return %c0_i32, %c0_i32_0 : i32, i32
  }
  func.func @transform_29(%arg0: i32) -> (i32, i32, i32) {
    %c0_i32 = arith.constant 0 : i32
    %c0_i32_0 = arith.constant 0 : i32
    %c0_i32_1 = arith.constant 0 : i32
    return %arg0, %c0_i32, %c0_i32_0 : i32, i32, i32
  }
}

</mosaic_0001>

<llo_original>
// kernel: forward.1
$region0: #{forward.1}
  #allocation0 [shape = 'u32[]', space=smem, size = 0x4, offset = 0x4, fixed_abs, tag = 'smem constant byte address 0x4 - core index']
  #allocation1 [shape = 'u32[72,128]{1,0:T(1,128)}', space=vmem, size = 0x9000, scoped, tag = 'internal scratch']
  #allocation2 [shape = 'f32[1,1]{1,0:T(1,128)S(1)}', space=vmem, size = 0x200, scoped, tag = 'scoped memory for forward.1']
  %s0 = inlined_call_operand.smem [shape: u32[30], index: -1, kind: input, shape index: {}]
  %s1 = sld [smem:[%s0]]
  %s2 = scalar_lea.smem %s0, 1
  %s3 = sld [smem:[%s2]]
  %s4 = scalar_lea.smem %s0, 2
  %s5 = sld [smem:[%s4]]
  %s6 = scalar_lea.smem %s0, 3
  %s7 = sld [smem:[%s6]]
  %s8 = scalar_lea.smem %s0, 4
  %s9 = sld [smem:[%s8]]
  %s10 = scalar_lea.smem %s0, 5
  %s11 = sld [smem:[%s10]]
  %s12 = scalar_lea.smem %s0, 6
  %s13 = sld [smem:[%s12]]
  %s14 = scalar_lea.smem %s0, 7
  %s15 = sld [smem:[%s14]]
  %s16 = scalar_lea.smem %s0, 8
  %s17 = sld [smem:[%s16]]
  %s18 = scalar_lea.smem %s0, 9
  %s19 = sld [smem:[%s18]]
  %s20 = scalar_lea.smem %s0, 10
  %s21 = sld [smem:[%s20]]
  %s22 = scalar_lea.smem %s0, 11
  %s23 = sld [smem:[%s22]]
  %s24 = scalar_lea.smem %s0, 12
  %s25 = sld [smem:[%s24]]
  %s26 = scalar_lea.smem %s0, 13
  %s27 = sld [smem:[%s26]]
  %s28 = scalar_lea.smem %s0, 14
  %s29 = sld [smem:[%s28]]
  %s30 = scalar_lea.smem %s0, 15
  %s31 = sld [smem:[%s30]]
  %s32 = scalar_lea.smem %s0, 16
  %s33 = sld [smem:[%s32]]
  %s34 = scalar_lea.smem %s0, 17
  %s35 = sld [smem:[%s34]]
  %s36 = scalar_lea.smem %s0, 18
  %s37 = sld [smem:[%s36]]
  %s38 = scalar_lea.smem %s0, 19
  %s39 = sld [smem:[%s38]]
  %s40 = scalar_lea.smem %s0, 20
  %s41 = sld [smem:[%s40]]
  %s42 = scalar_lea.smem %s0, 21
  %s43 = sld [smem:[%s42]]
  %s44 = scalar_lea.smem %s0, 22
  %s45 = sld [smem:[%s44]]
  %s46 = scalar_lea.smem %s0, 23
  %s47 = sld [smem:[%s46]]
  %s48 = scalar_lea.smem %s0, 24
  %s49 = sld [smem:[%s48]]
  %s50 = scalar_lea.smem %s0, 25
  %s51 = sld [smem:[%s50]]
  %s52 = scalar_lea.smem %s0, 26
  %s53 = sld [smem:[%s52]]
  %s54 = scalar_lea.smem %s0, 27
  %s55 = sld [smem:[%s54]]
  %s56 = scalar_lea.smem %s0, 28
  %s57 = sld [smem:[%s56]]
  %s58 = scalar_lea.smem %s0, 29
  %s59 = sld [smem:[%s58]]
  %s60 = sld [smem:[#allocation0]]
  $region221: #{forward.1} parent=0
    _
  %s62 = ssub.s32 1, %s60
  %s63 = scalar_select 0, %s62, %s60
  %v64 = vstv %s57
  %65 = vst [vmem:[#allocation2] sm:$0x1] %v64
  $region1: #{forward.1} parent=0
    #allocation3 [shape = 'u8[16384]{0}', space=vmem, size = 0x4000, scoped, tag = 'input window, operand 1, single buffered']
    #allocation4 [shape = 's32[2]{0}', space=sflag, size = 0x8, scoped, tag = 'scoped memory for forward.1']
    #allocation5 [shape = 'u8[512]{0}', space=vmem, size = 0x400, scoped, tag = 'input window, operand 5, single buffered']
    #allocation6 [shape = 's32[1]{0}', space=sflag, size = 0x4, scoped, tag = 'scoped memory for forward.1']
    #allocation7 [shape = 'u8[6144]{0}', space=vmem, size = 0x1800, scoped, tag = 'input window, operand 6, single buffered']
    #allocation8 [shape = 'u8[2048]{0}', space=vmem, size = 0x800, scoped, tag = 'input window, operand 8, single buffered']
    #allocation9 [shape = 's32[1]{0}', space=sflag, size = 0x4, scoped, tag = 'scoped memory for forward.1']
    #allocation10 [shape = 'u8[512]{0}', space=vmem, size = 0x400, scoped, tag = 'input window, operand 10, single buffered']
    #allocation11 [shape = 'u8[98304]{0}', space=vmem, size = 0x18000, scoped, tag = 'input window, operand 12, single buffered']
    #allocation12 [shape = 's32[1]{0}', space=sflag, size = 0x4, scoped, tag = 'scoped memory for forward.1']
    #allocation13 [shape = 'u8[98304]{0}', space=vmem, size = 0x18000, scoped, tag = 'input window, operand 15, single buffered']
    #allocation14 [shape = 'u8[1024]{0}', space=vmem, size = 0x400, scoped, tag = 'input window, operand 16, single buffered']
    #allocation15 [shape = 's32[1]{0}', space=sflag, size = 0x4, scoped, tag = 'scoped memory for forward.1']
    #allocation16 [shape = 'u8[32768]{0}', space=vmem, size = 0x8000, scoped, tag = 'input window, operand 17, single buffered']
    #allocation17 [shape = 'u8[512]{0}', space=vmem, size = 0x400, scoped, tag = 'input window, operand 18, single buffered']
    #allocation18 [shape = 's32[1]{0}', space=sflag, size = 0x4, scoped, tag = 'scoped memory for forward.1']
    #allocation19 [shape = 'u8[1536]{0}', space=vmem, size = 0x800, scoped, tag = 'input window, operand 19, single buffered']
    #allocation20 [shape = 'u8[98304]{0}', space=vmem, size = 0x18000, scoped, tag = 'input window, operand 20, single buffered']
    #allocation21 [shape = 's32[1]{0}', space=sflag, size = 0x4, scoped, tag = 'scoped memory for forward.1']
    #allocation22 [shape = 'u8[512]{0}', space=vmem, size = 0x400, scoped, tag = 'input window, operand 21, single buffered']
    #allocation23 [shape = 'u8[98304]{0}', space=vmem, size = 0x18000, scoped, tag = 'input window, operand 23, single buffered']
    #allocation24 [shape = 's32[1]{0}', space=sflag, size = 0x4, scoped, tag = 'scoped memory for forward.1']
    #allocation25 [shape = 'u8[512]{0}', space=vmem, size = 0x400, scoped, tag = 'input window, operand 24, single buffered']
    #allocation26 [shape = 'u8[32768]{0}', space=vmem, size = 0x8000, scoped, tag = 'input window, operand 25, single buffered']
    #allocation27 [shape = 's32[1]{0}', space=sflag, size = 0x4, scoped, tag = 'scoped memory for forward.1']
    #allocation28 [shape = 'u8[512]{0}', space=vmem, size = 0x400, scoped, tag = 'input window, operand 26, single buffered']
    #allocation29 [shape = 'u8[512]{0}', space=vmem, size = 0x400, scoped, tag = 'input window, operand 27, single buffered']
    #allocation30 [shape = 's32[1]{0}', space=sflag, size = 0x4, scoped, tag = 'scoped memory for forward.1']
    %66 = vsyncpa [#allocation4], 0
    %67 = vsyncpa [#allocation6], 0
    %68 = vsyncpa [#allocation9], 0
    %69 = vsyncpa [#allocation12], 0
    %70 = vsyncpa [#allocation15], 0
    %71 = vsyncpa [#allocation18], 0
    %72 = vsyncpa [#allocation21], 0
    %73 = vsyncpa [#allocation24], 0
    %74 = vsyncpa [#allocation27], 0
    %75 = vsyncpa [#allocation30], 0
    loop: start=0, step=1, limit=4
    $region2: #{forward.1} parent=1 // loop_pre_header
      _
    $region3: #{forward.1} parent=1 // loop_header
      %s77 = sphi 0, %s81
      %p78 = scmp.ge.s32.totalorder %s77, 4
      %s87 = sphi 0, %s89
      %s90 = sphi 0, %s87
      %s91 = sphi 0, %s90
      %s107 = sphi 0, %s91
      %s111 = sphi 0, %s111
      %s113 = sphi 0, %s111
      %s114 = sphi 0, %s113
      %s128 = sphi 0, %s114
      %s132 = sphi 0, %s132
      %s134 = sphi 0, %s132
      %s135 = sphi 0, %s134
      %s149 = sphi 0, %s135
      %s153 = sphi 0, %s153
      %s155 = sphi 0, %s153
      %s156 = sphi 0, %s155
      %s170 = sphi 0, %s156
      %s174 = sphi 0, %s174
      %s176 = sphi 0, %s174
      %s177 = sphi 0, %s176
      %s191 = sphi 0, %s177
      %s195 = sphi 0, %s195
      %s197 = sphi 0, %s195
      %s198 = sphi 0, %s197
      %s212 = sphi 0, %s198
      %s216 = sphi 0, %s216
      %s218 = sphi 0, %s216
      %s219 = sphi 0, %s218
      %s233 = sphi 0, %s219
      %s237 = sphi 0, %s237
      %s239 = sphi 0, %s237
      %s240 = sphi 0, %s239
      %s254 = sphi 0, %s240
      %s258 = sphi 0, %s258
      %s260 = sphi 0, %s258
      %s261 = sphi 0, %s260
      %s275 = sphi 0, %s261
      %s279 = sphi 0, %s279
      %s281 = sphi 0, %s279
      %s282 = sphi 0, %s281
      %s296 = sphi 0, %s282
      %s300 = sphi 0, %s300
      %s302 = sphi 0, %s300
      %s303 = sphi 0, %s302
      %s317 = sphi 0, %s303
      %s321 = sphi 0, %s321
      %s323 = sphi 0, %s321
      %s324 = sphi 0, %s323
      %s338 = sphi 0, %s324
      %s342 = sphi 0, %s342
      %s344 = sphi 0, %s342
      %s345 = sphi 0, %s344
      %s359 = sphi 0, %s345
      %s363 = sphi 0, %s363
      %s365 = sphi 0, %s363
      %s366 = sphi 0, %s365
      %s380 = sphi 0, %s366
      %s384 = sphi 0, %s384
      %s386 = sphi 0, %s384
      %s387 = sphi 0, %s386
      %s401 = sphi 0, %s387
      %s405 = sphi 0, %s405
      %s407 = sphi 0, %s405
      %s408 = sphi 0, %s407
      %s422 = sphi 0, %s408
      %s426 = sphi 0, %s426
      %s428 = sphi 0, %s426
      %s429 = sphi 0, %s428
      %s443 = sphi 0, %s429
      %s447 = sphi 0, %s447
      %s449 = sphi 0, %s447
      %s450 = sphi 0, %s449
      %s464 = sphi 0, %s450
      %s468 = sphi 0, %s468
      %s470 = sphi 0, %s468
      %s471 = sphi 0, %s470
      %s485 = sphi 0, %s471
      %s489 = sphi 0, %s489
      %s491 = sphi 0, %s489
      %s492 = sphi 0, %s491
      %s506 = sphi 0, %s492
      %s510 = sphi 0, %s510
      %s512 = sphi 0, %s510
      %s513 = sphi 0, %s512
      %s527 = sphi 0, %s513
      %s531 = sphi 0, %s531
      %s533 = sphi 0, %s531
      %s534 = sphi 0, %s533
      %s548 = sphi 0, %s534
      %s552 = sphi 0, %s552
      %s554 = sphi 0, %s552
      %s555 = sphi 0, %s554
      %s569 = sphi 0, %s555
      %s573 = sphi 0, %s573
      %s575 = sphi 0, %s573
      %s576 = sphi 0, %s575
      %s590 = sphi 0, %s576
      %s594 = sphi 0, %s594
      %s596 = sphi 0, %s594
      %s597 = sphi 0, %s596
      %s611 = sphi 0, %s597
      %s615 = sphi 0, %s615
      %s617 = sphi 0, %s615
      %s618 = sphi 0, %s617
      %s632 = sphi 0, %s618
      %s636 = sphi 0, %s636
      %s638 = sphi 0, %s636
      %s639 = sphi 0, %s638
      %s653 = sphi 0, %s639
      %s657 = sphi 0, %s657
      %s659 = sphi 0, %s657
      %s660 = sphi 0, %s659
      %s674 = sphi 0, %s660
      %s678 = sphi 0, %s678
      %s680 = sphi 0, %s678
      %s681 = sphi 0, %s680
      %s695 = sphi 0, %s681
      %s701 = sphi 0, %s703
      %s704 = sphi 0, %s701
      %s705 = sphi 0, %s704
      %s721 = sphi 0, %s705
    $region4: #{forward.1} parent=1 // loop_header_branch
      %80 = sbr.rel (%p78) target = $region8
    $region5: #{forward.1} parent=1 // loop_body
      %s82 = ssub.s32 %s77, 1
      %s83 = ssub.s32 %s77, 2
      %s84 = sadd.s32 %s77, 1
      %s85 = ssub.s32 %s77, %s84
      %p86 = scmp.eq.s32.totalorder %s85, 0
      %s88 = sadd.s32 %s87, 1
      %s89 = scalar_select %p86, %s87, %s88
      %p92 = pneg %p86
      %p93 = scmp.eq.s32.totalorder %s77, 1
      %p94 = por %p92, %p93
      %p95 = scmp.ne.s32.totalorder %s87, %s90
      %p96 = scmp.eq.s32.totalorder %s77, 0
      %p97 = por %p95, %p96
      %p98 = scmp.ne.s32.totalorder %s87, %s90
      %p99 = scmp.eq.s32.totalorder %s82, 1
      %p100 = por %p98, %p99
      %p101 = scmp.ne.s32.totalorder %s90, %s91
      %p102 = scmp.eq.s32.totalorder %s82, 0
      %p103 = por %p101, %p102
      %p104 = scmp.ne.s32.totalorder %s90, %s91
      %p105 = scmp.eq.s32.totalorder %s83, 1
      %p106 = por %p104, %p105
      %p108 = scmp.ne.s32.totalorder %s91, %s107
      %p109 = scmp.eq.s32.totalorder %s83, 0
      %p110 = por %p108, %p109
      %s112 = sadd.s32 %s111, 1
      %p115 = scmp.eq.s32.totalorder %s77, 1
      %p116 = scmp.ne.s32.totalorder %s111, %s113
      %p117 = scmp.eq.s32.totalorder %s77, 0
      %p118 = por %p116, %p117
      %p119 = scmp.ne.s32.totalorder %s111, %s113
      %p120 = scmp.eq.s32.totalorder %s82, 1
      %p121 = por %p119, %p120
      %p122 = scmp.ne.s32.totalorder %s113, %s114
      %p123 = scmp.eq.s32.totalorder %s82, 0
      %p124 = por %p122, %p123
      %p125 = scmp.ne.s32.totalorder %s113, %s114
      %p126 = scmp.eq.s32.totalorder %s83, 1
      %p127 = por %p125, %p126
      %p129 = scmp.ne.s32.totalorder %s114, %s128
      %p130 = scmp.eq.s32.totalorder %s83, 0
      %p131 = por %p129, %p130
      %s133 = sadd.s32 %s132, 1
      %p136 = scmp.eq.s32.totalorder %s77, 1
      %p137 = scmp.ne.s32.totalorder %s132, %s134
      %p138 = scmp.eq.s32.totalorder %s77, 0
      %p139 = por %p137, %p138
      %p140 = scmp.ne.s32.totalorder %s132, %s134
      %p141 = scmp.eq.s32.totalorder %s82, 1
      %p142 = por %p140, %p141
      %p143 = scmp.ne.s32.totalorder %s134, %s135
      %p144 = scmp.eq.s32.totalorder %s82, 0
      %p145 = por %p143, %p144
      %p146 = scmp.ne.s32.totalorder %s134, %s135
      %p147 = scmp.eq.s32.totalorder %s83, 1
      %p148 = por %p146, %p147
      %p150 = scmp.ne.s32.totalorder %s135, %s149
      %p151 = scmp.eq.s32.totalorder %s83, 0
      %p152 = por %p150, %p151
      %s154 = sadd.s32 %s153, 1
      %p157 = scmp.eq.s32.totalorder %s77, 1
      %p158 = scmp.ne.s32.totalorder %s153, %s155
      %p159 = scmp.eq.s32.totalorder %s77, 0
      %p160 = por %p158, %p159
      %p161 = scmp.ne.s32.totalorder %s153, %s155
      %p162 = scmp.eq.s32.totalorder %s82, 1
      %p163 = por %p161, %p162
      %p164 = scmp.ne.s32.totalorder %s155, %s156
      %p165 = scmp.eq.s32.totalorder %s82, 0
      %p166 = por %p164, %p165
      %p167 = scmp.ne.s32.totalorder %s155, %s156
      %p168 = scmp.eq.s32.totalorder %s83, 1
      %p169 = por %p167, %p168
      %p171 = scmp.ne.s32.totalorder %s156, %s170
      %p172 = scmp.eq.s32.totalorder %s83, 0
      %p173 = por %p171, %p172
      %s175 = sadd.s32 %s174, 1
      %p178 = scmp.eq.s32.totalorder %s77, 1
      %p179 = scmp.ne.s32.totalorder %s174, %s176
      %p180 = scmp.eq.s32.totalorder %s77, 0
      %p181 = por %p179, %p180
      %p182 = scmp.ne.s32.totalorder %s174, %s176
      %p183 = scmp.eq.s32.totalorder %s82, 1
      %p184 = por %p182, %p183
      %p185 = scmp.ne.s32.totalorder %s176, %s177
      %p186 = scmp.eq.s32.totalorder %s82, 0
      %p187 = por %p185, %p186
      %p188 = scmp.ne.s32.totalorder %s176, %s177
      %p189 = scmp.eq.s32.totalorder %s83, 1
      %p190 = por %p188, %p189
      %p192 = scmp.ne.s32.totalorder %s177, %s191
      %p193 = scmp.eq.s32.totalorder %s83, 0
      %p194 = por %p192, %p193
      %s196 = sadd.s32 %s195, 1
      %p199 = scmp.eq.s32.totalorder %s77, 1
      %p200 = scmp.ne.s32.totalorder %s195, %s197
      %p201 = scmp.eq.s32.totalorder %s77, 0
      %p202 = por %p200, %p201
      %p203 = scmp.ne.s32.totalorder %s195, %s197
      %p204 = scmp.eq.s32.totalorder %s82, 1
      %p205 = por %p203, %p204
      %p206 = scmp.ne.s32.totalorder %s197, %s198
      %p207 = scmp.eq.s32.totalorder %s82, 0
      %p208 = por %p206, %p207
      %p209 = scmp.ne.s32.totalorder %s197, %s198
      %p210 = scmp.eq.s32.totalorder %s83, 1
      %p211 = por %p209, %p210
      %p213 = scmp.ne.s32.totalorder %s198, %s212
      %p214 = scmp.eq.s32.totalorder %s83, 0
      %p215 = por %p213, %p214
      %s217 = sadd.s32 %s216, 1
      %p220 = scmp.eq.s32.totalorder %s77, 1
      %p221 = scmp.ne.s32.totalorder %s216, %s218
      %p222 = scmp.eq.s32.totalorder %s77, 0
      %p223 = por %p221, %p222
      %p224 = scmp.ne.s32.totalorder %s216, %s218
      %p225 = scmp.eq.s32.totalorder %s82, 1
      %p226 = por %p224, %p225
      %p227 = scmp.ne.s32.totalorder %s218, %s219
      %p228 = scmp.eq.s32.totalorder %s82, 0
      %p229 = por %p227, %p228
      %p230 = scmp.ne.s32.totalorder %s218, %s219
      %p231 = scmp.eq.s32.totalorder %s83, 1
      %p232 = por %p230, %p231
      %p234 = scmp.ne.s32.totalorder %s219, %s233
      %p235 = scmp.eq.s32.totalorder %s83, 0
      %p236 = por %p234, %p235
      %s238 = sadd.s32 %s237, 1
      %p241 = scmp.eq.s32.totalorder %s77, 1
      %p242 = scmp.ne.s32.totalorder %s237, %s239
      %p243 = scmp.eq.s32.totalorder %s77, 0
      %p244 = por %p242, %p243
      %p245 = scmp.ne.s32.totalorder %s237, %s239
      %p246 = scmp.eq.s32.totalorder %s82, 1
      %p247 = por %p245, %p246
      %p248 = scmp.ne.s32.totalorder %s239, %s240
      %p249 = scmp.eq.s32.totalorder %s82, 0
      %p250 = por %p248, %p249
      %p251 = scmp.ne.s32.totalorder %s239, %s240
      %p252 = scmp.eq.s32.totalorder %s83, 1
      %p253 = por %p251, %p252
      %p255 = scmp.ne.s32.totalorder %s240, %s254
      %p256 = scmp.eq.s32.totalorder %s83, 0
      %p257 = por %p255, %p256
      %s259 = sadd.s32 %s258, 1
      %p262 = scmp.eq.s32.totalorder %s77, 1
      %p263 = scmp.ne.s32.totalorder %s258, %s260
      %p264 = scmp.eq.s32.totalorder %s77, 0
      %p265 = por %p263, %p264
      %p266 = scmp.ne.s32.totalorder %s258, %s260
      %p267 = scmp.eq.s32.totalorder %s82, 1
      %p268 = por %p266, %p267
      %p269 = scmp.ne.s32.totalorder %s260, %s261
      %p270 = scmp.eq.s32.totalorder %s82, 0
      %p271 = por %p269, %p270
      %p272 = scmp.ne.s32.totalorder %s260, %s261
      %p273 = scmp.eq.s32.totalorder %s83, 1
      %p274 = por %p272, %p273
      %p276 = scmp.ne.s32.totalorder %s261, %s275
      %p277 = scmp.eq.s32.totalorder %s83, 0
      %p278 = por %p276, %p277
      %s280 = sadd.s32 %s279, 1
      %p283 = scmp.eq.s32.totalorder %s77, 1
      %p284 = scmp.ne.s32.totalorder %s279, %s281
      %p285 = scmp.eq.s32.totalorder %s77, 0
      %p286 = por %p284, %p285
      %p287 = scmp.ne.s32.totalorder %s279, %s281
      %p288 = scmp.eq.s32.totalorder %s82, 1
      %p289 = por %p287, %p288
      %p290 = scmp.ne.s32.totalorder %s281, %s282
      %p291 = scmp.eq.s32.totalorder %s82, 0
      %p292 = por %p290, %p291
      %p293 = scmp.ne.s32.totalorder %s281, %s282
      %p294 = scmp.eq.s32.totalorder %s83, 1
      %p295 = por %p293, %p294
      %p297 = scmp.ne.s32.totalorder %s282, %s296
      %p298 = scmp.eq.s32.totalorder %s83, 0
      %p299 = por %p297, %p298
      %s301 = sadd.s32 %s300, 1
      %p304 = scmp.eq.s32.totalorder %s77, 1
      %p305 = scmp.ne.s32.totalorder %s300, %s302
      %p306 = scmp.eq.s32.totalorder %s77, 0
      %p307 = por %p305, %p306
      %p308 = scmp.ne.s32.totalorder %s300, %s302
      %p309 = scmp.eq.s32.totalorder %s82, 1
      %p310 = por %p308, %p309
      %p311 = scmp.ne.s32.totalorder %s302, %s303
      %p312 = scmp.eq.s32.totalorder %s82, 0
      %p313 = por %p311, %p312
      %p314 = scmp.ne.s32.totalorder %s302, %s303
      %p315 = scmp.eq.s32.totalorder %s83, 1
      %p316 = por %p314, %p315
      %p318 = scmp.ne.s32.totalorder %s303, %s317
      %p319 = scmp.eq.s32.totalorder %s83, 0
      %p320 = por %p318, %p319
      %s322 = sadd.s32 %s321, 1
      %p325 = scmp.eq.s32.totalorder %s77, 1
      %p326 = scmp.ne.s32.totalorder %s321, %s323
      %p327 = scmp.eq.s32.totalorder %s77, 0
      %p328 = por %p326, %p327
      %p329 = scmp.ne.s32.totalorder %s321, %s323
      %p330 = scmp.eq.s32.totalorder %s82, 1
      %p331 = por %p329, %p330
      %p332 = scmp.ne.s32.totalorder %s323, %s324
      %p333 = scmp.eq.s32.totalorder %s82, 0
      %p334 = por %p332, %p333
      %p335 = scmp.ne.s32.totalorder %s323, %s324
      %p336 = scmp.eq.s32.totalorder %s83, 1
      %p337 = por %p335, %p336
      %p339 = scmp.ne.s32.totalorder %s324, %s338
      %p340 = scmp.eq.s32.totalorder %s83, 0
      %p341 = por %p339, %p340
      %s343 = sadd.s32 %s342, 1
      %p346 = scmp.eq.s32.totalorder %s77, 1
      %p347 = scmp.ne.s32.totalorder %s342, %s344
      %p348 = scmp.eq.s32.totalorder %s77, 0
      %p349 = por %p347, %p348
      %p350 = scmp.ne.s32.totalorder %s342, %s344
      %p351 = scmp.eq.s32.totalorder %s82, 1
      %p352 = por %p350, %p351
      %p353 = scmp.ne.s32.totalorder %s344, %s345
      %p354 = scmp.eq.s32.totalorder %s82, 0
      %p355 = por %p353, %p354
      %p356 = scmp.ne.s32.totalorder %s344, %s345
      %p357 = scmp.eq.s32.totalorder %s83, 1
      %p358 = por %p356, %p357
      %p360 = scmp.ne.s32.totalorder %s345, %s359
      %p361 = scmp.eq.s32.totalorder %s83, 0
      %p362 = por %p360, %p361
      %s364 = sadd.s32 %s363, 1
      %p367 = scmp.eq.s32.totalorder %s77, 1
      %p368 = scmp.ne.s32.totalorder %s363, %s365
      %p369 = scmp.eq.s32.totalorder %s77, 0
      %p370 = por %p368, %p369
      %p371 = scmp.ne.s32.totalorder %s363, %s365
      %p372 = scmp.eq.s32.totalorder %s82, 1
      %p373 = por %p371, %p372
      %p374 = scmp.ne.s32.totalorder %s365, %s366
      %p375 = scmp.eq.s32.totalorder %s82, 0
      %p376 = por %p374, %p375
      %p377 = scmp.ne.s32.totalorder %s365, %s366
      %p378 = scmp.eq.s32.totalorder %s83, 1
      %p379 = por %p377, %p378
      %p381 = scmp.ne.s32.totalorder %s366, %s380
      %p382 = scmp.eq.s32.totalorder %s83, 0
      %p383 = por %p381, %p382
      %s385 = sadd.s32 %s384, 1
      %p388 = scmp.eq.s32.totalorder %s77, 1
      %p389 = scmp.ne.s32.totalorder %s384, %s386
      %p390 = scmp.eq.s32.totalorder %s77, 0
      %p391 = por %p389, %p390
      %p392 = scmp.ne.s32.totalorder %s384, %s386
      %p393 = scmp.eq.s32.totalorder %s82, 1
      %p394 = por %p392, %p393
      %p395 = scmp.ne.s32.totalorder %s386, %s387
      %p396 = scmp.eq.s32.totalorder %s82, 0
      %p397 = por %p395, %p396
      %p398 = scmp.ne.s32.totalorder %s386, %s387
      %p399 = scmp.eq.s32.totalorder %s83, 1
      %p400 = por %p398, %p399
      %p402 = scmp.ne.s32.totalorder %s387, %s401
      %p403 = scmp.eq.s32.totalorder %s83, 0
      %p404 = por %p402, %p403
      %s406 = sadd.s32 %s405, 1
      %p409 = scmp.eq.s32.totalorder %s77, 1
      %p410 = scmp.ne.s32.totalorder %s405, %s407
      %p411 = scmp.eq.s32.totalorder %s77, 0
      %p412 = por %p410, %p411
      %p413 = scmp.ne.s32.totalorder %s405, %s407
      %p414 = scmp.eq.s32.totalorder %s82, 1
      %p415 = por %p413, %p414
      %p416 = scmp.ne.s32.totalorder %s407, %s408
      %p417 = scmp.eq.s32.totalorder %s82, 0
      %p418 = por %p416, %p417
      %p419 = scmp.ne.s32.totalorder %s407, %s408
      %p420 = scmp.eq.s32.totalorder %s83, 1
      %p421 = por %p419, %p420
      %p423 = scmp.ne.s32.totalorder %s408, %s422
      %p424 = scmp.eq.s32.totalorder %s83, 0
      %p425 = por %p423, %p424
      %s427 = sadd.s32 %s426, 1
      %p430 = scmp.eq.s32.totalorder %s77, 1
      %p431 = scmp.ne.s32.totalorder %s426, %s428
      %p432 = scmp.eq.s32.totalorder %s77, 0
      %p433 = por %p431, %p432
      %p434 = scmp.ne.s32.totalorder %s426, %s428
      %p435 = scmp.eq.s32.totalorder %s82, 1
      %p436 = por %p434, %p435
      %p437 = scmp.ne.s32.totalorder %s428, %s429
      %p438 = scmp.eq.s32.totalorder %s82, 0
      %p439 = por %p437, %p438
      %p440 = scmp.ne.s32.totalorder %s428, %s429
      %p441 = scmp.eq.s32.totalorder %s83, 1
      %p442 = por %p440, %p441
      %p444 = scmp.ne.s32.totalorder %s429, %s443
      %p445 = scmp.eq.s32.totalorder %s83, 0
      %p446 = por %p444, %p445
      %s448 = sadd.s32 %s447, 1
      %p451 = scmp.eq.s32.totalorder %s77, 1
      %p452 = scmp.ne.s32.totalorder %s447, %s449
      %p453 = scmp.eq.s32.totalorder %s77, 0
      %p454 = por %p452, %p453
      %p455 = scmp.ne.s32.totalorder %s447, %s449
      %p456 = scmp.eq.s32.totalorder %s82, 1
      %p457 = por %p455, %p456
      %p458 = scmp.ne.s32.totalorder %s449, %s450
      %p459 = scmp.eq.s32.totalorder %s82, 0
      %p460 = por %p458, %p459
      %p461 = scmp.ne.s32.totalorder %s449, %s450
      %p462 = scmp.eq.s32.totalorder %s83, 1
      %p463 = por %p461, %p462
      %p465 = scmp.ne.s32.totalorder %s450, %s464
      %p466 = scmp.eq.s32.totalorder %s83, 0
      %p467 = por %p465, %p466
      %s469 = sadd.s32 %s468, 1
      %p472 = scmp.eq.s32.totalorder %s77, 1
      %p473 = scmp.ne.s32.totalorder %s468, %s470
      %p474 = scmp.eq.s32.totalorder %s77, 0
      %p475 = por %p473, %p474
      %p476 = scmp.ne.s32.totalorder %s468, %s470
      %p477 = scmp.eq.s32.totalorder %s82, 1
      %p478 = por %p476, %p477
      %p479 = scmp.ne.s32.totalorder %s470, %s471
      %p480 = scmp.eq.s32.totalorder %s82, 0
      %p481 = por %p479, %p480
      %p482 = scmp.ne.s32.totalorder %s470, %s471
      %p483 = scmp.eq.s32.totalorder %s83, 1
      %p484 = por %p482, %p483
      %p486 = scmp.ne.s32.totalorder %s471, %s485
      %p487 = scmp.eq.s32.totalorder %s83, 0
      %p488 = por %p486, %p487
      %s490 = sadd.s32 %s489, 1
      %p493 = scmp.eq.s32.totalorder %s77, 1
      %p494 = scmp.ne.s32.totalorder %s489, %s491
      %p495 = scmp.eq.s32.totalorder %s77, 0
      %p496 = por %p494, %p495
      %p497 = scmp.ne.s32.totalorder %s489, %s491
      %p498 = scmp.eq.s32.totalorder %s82, 1
      %p499 = por %p497, %p498
      %p500 = scmp.ne.s32.totalorder %s491, %s492
      %p501 = scmp.eq.s32.totalorder %s82, 0
      %p502 = por %p500, %p501
      %p503 = scmp.ne.s32.totalorder %s491, %s492
      %p504 = scmp.eq.s32.totalorder %s83, 1
      %p505 = por %p503, %p504
      %p507 = scmp.ne.s32.totalorder %s492, %s506
      %p508 = scmp.eq.s32.totalorder %s83, 0
      %p509 = por %p507, %p508
      %s511 = sadd.s32 %s510, 1
      %p514 = scmp.eq.s32.totalorder %s77, 1
      %p515 = scmp.ne.s32.totalorder %s510, %s512
      %p516 = scmp.eq.s32.totalorder %s77, 0
      %p517 = por %p515, %p516
      %p518 = scmp.ne.s32.totalorder %s510, %s512
      %p519 = scmp.eq.s32.totalorder %s82, 1
      %p520 = por %p518, %p519
      %p521 = scmp.ne.s32.totalorder %s512, %s513
      %p522 = scmp.eq.s32.totalorder %s82, 0
      %p523 = por %p521, %p522
      %p524 = scmp.ne.s32.totalorder %s512, %s513
      %p525 = scmp.eq.s32.totalorder %s83, 1
      %p526 = por %p524, %p525
      %p528 = scmp.ne.s32.totalorder %s513, %s527
      %p529 = scmp.eq.s32.totalorder %s83, 0
      %p530 = por %p528, %p529
      %s532 = sadd.s32 %s531, 1
      %p535 = scmp.eq.s32.totalorder %s77, 1
      %p536 = scmp.ne.s32.totalorder %s531, %s533
      %p537 = scmp.eq.s32.totalorder %s77, 0
      %p538 = por %p536, %p537
      %p539 = scmp.ne.s32.totalorder %s531, %s533
      %p540 = scmp.eq.s32.totalorder %s82, 1
      %p541 = por %p539, %p540
      %p542 = scmp.ne.s32.totalorder %s533, %s534
      %p543 = scmp.eq.s32.totalorder %s82, 0
      %p544 = por %p542, %p543
      %p545 = scmp.ne.s32.totalorder %s533, %s534
      %p546 = scmp.eq.s32.totalorder %s83, 1
      %p547 = por %p545, %p546
      %p549 = scmp.ne.s32.totalorder %s534, %s548
      %p550 = scmp.eq.s32.totalorder %s83, 0
      %p551 = por %p549, %p550
      %s553 = sadd.s32 %s552, 1
      %p556 = scmp.eq.s32.totalorder %s77, 1
      %p557 = scmp.ne.s32.totalorder %s552, %s554
      %p558 = scmp.eq.s32.totalorder %s77, 0
      %p559 = por %p557, %p558
      %p560 = scmp.ne.s32.totalorder %s552, %s554
      %p561 = scmp.eq.s32.totalorder %s82, 1
      %p562 = por %p560, %p561
      %p563 = scmp.ne.s32.totalorder %s554, %s555
      %p564 = scmp.eq.s32.totalorder %s82, 0
      %p565 = por %p563, %p564
      %p566 = scmp.ne.s32.totalorder %s554, %s555
      %p567 = scmp.eq.s32.totalorder %s83, 1
      %p568 = por %p566, %p567
      %p570 = scmp.ne.s32.totalorder %s555, %s569
      %p571 = scmp.eq.s32.totalorder %s83, 0
      %p572 = por %p570, %p571
      %s574 = sadd.s32 %s573, 1
      %p577 = scmp.eq.s32.totalorder %s77, 1
      %p578 = scmp.ne.s32.totalorder %s573, %s575
      %p579 = scmp.eq.s32.totalorder %s77, 0
      %p580 = por %p578, %p579
      %p581 = scmp.ne.s32.totalorder %s573, %s575
      %p582 = scmp.eq.s32.totalorder %s82, 1
      %p583 = por %p581, %p582
      %p584 = scmp.ne.s32.totalorder %s575, %s576
      %p585 = scmp.eq.s32.totalorder %s82, 0
      %p586 = por %p584, %p585
      %p587 = scmp.ne.s32.totalorder %s575, %s576
      %p588 = scmp.eq.s32.totalorder %s83, 1
      %p589 = por %p587, %p588
      %p591 = scmp.ne.s32.totalorder %s576, %s590
      %p592 = scmp.eq.s32.totalorder %s83, 0
      %p593 = por %p591, %p592
      %s595 = sadd.s32 %s594, 1
      %p598 = scmp.eq.s32.totalorder %s77, 1
      %p599 = scmp.ne.s32.totalorder %s594, %s596
      %p600 = scmp.eq.s32.totalorder %s77, 0
      %p601 = por %p599, %p600
      %p602 = scmp.ne.s32.totalorder %s594, %s596
      %p603 = scmp.eq.s32.totalorder %s82, 1
      %p604 = por %p602, %p603
      %p605 = scmp.ne.s32.totalorder %s596, %s597
      %p606 = scmp.eq.s32.totalorder %s82, 0
      %p607 = por %p605, %p606
      %p608 = scmp.ne.s32.totalorder %s596, %s597
      %p609 = scmp.eq.s32.totalorder %s83, 1
      %p610 = por %p608, %p609
      %p612 = scmp.ne.s32.totalorder %s597, %s611
      %p613 = scmp.eq.s32.totalorder %s83, 0
      %p614 = por %p612, %p613
      %s616 = sadd.s32 %s615, 1
      %p619 = scmp.eq.s32.totalorder %s77, 1
      %p620 = scmp.ne.s32.totalorder %s615, %s617
      %p621 = scmp.eq.s32.totalorder %s77, 0
      %p622 = por %p620, %p621
      %p623 = scmp.ne.s32.totalorder %s615, %s617
      %p624 = scmp.eq.s32.totalorder %s82, 1
      %p625 = por %p623, %p624
      %p626 = scmp.ne.s32.totalorder %s617, %s618
      %p627 = scmp.eq.s32.totalorder %s82, 0
      %p628 = por %p626, %p627
      %p629 = scmp.ne.s32.totalorder %s617, %s618
      %p630 = scmp.eq.s32.totalorder %s83, 1
      %p631 = por %p629, %p630
      %p633 = scmp.ne.s32.totalorder %s618, %s632
      %p634 = scmp.eq.s32.totalorder %s83, 0
      %p635 = por %p633, %p634
      %s637 = sadd.s32 %s636, 1
      %p640 = scmp.eq.s32.totalorder %s77, 1
      %p641 = scmp.ne.s32.totalorder %s636, %s638
      %p642 = scmp.eq.s32.totalorder %s77, 0
      %p643 = por %p641, %p642
      %p644 = scmp.ne.s32.totalorder %s636, %s638
      %p645 = scmp.eq.s32.totalorder %s82, 1
      %p646 = por %p644, %p645
      %p647 = scmp.ne.s32.totalorder %s638, %s639
      %p648 = scmp.eq.s32.totalorder %s82, 0
      %p649 = por %p647, %p648
      %p650 = scmp.ne.s32.totalorder %s638, %s639
      %p651 = scmp.eq.s32.totalorder %s83, 1
      %p652 = por %p650, %p651
      %p654 = scmp.ne.s32.totalorder %s639, %s653
      %p655 = scmp.eq.s32.totalorder %s83, 0
      %p656 = por %p654, %p655
      %s658 = sadd.s32 %s657, 1
      %p661 = scmp.eq.s32.totalorder %s77, 1
      %p662 = scmp.ne.s32.totalorder %s657, %s659
      %p663 = scmp.eq.s32.totalorder %s77, 0
      %p664 = por %p662, %p663
      %p665 = scmp.ne.s32.totalorder %s657, %s659
      %p666 = scmp.eq.s32.totalorder %s82, 1
      %p667 = por %p665, %p666
      %p668 = scmp.ne.s32.totalorder %s659, %s660
      %p669 = scmp.eq.s32.totalorder %s82, 0
      %p670 = por %p668, %p669
      %p671 = scmp.ne.s32.totalorder %s659, %s660
      %p672 = scmp.eq.s32.totalorder %s83, 1
      %p673 = por %p671, %p672
      %p675 = scmp.ne.s32.totalorder %s660, %s674
      %p676 = scmp.eq.s32.totalorder %s83, 0
      %p677 = por %p675, %p676
      %s679 = sadd.s32 %s678, 1
      %p682 = scmp.eq.s32.totalorder %s77, 1
      %p683 = scmp.ne.s32.totalorder %s678, %s680
      %p684 = scmp.eq.s32.totalorder %s77, 0
      %p685 = por %p683, %p684
      %p686 = scmp.ne.s32.totalorder %s678, %s680
      %p687 = scmp.eq.s32.totalorder %s82, 1
      %p688 = por %p686, %p687
      %p689 = scmp.ne.s32.totalorder %s680, %s681
      %p690 = scmp.eq.s32.totalorder %s82, 0
      %p691 = por %p689, %p690
      %p692 = scmp.ne.s32.totalorder %s680, %s681
      %p693 = scmp.eq.s32.totalorder %s83, 1
      %p694 = por %p692, %p693
      %p696 = scmp.ne.s32.totalorder %s681, %s695
      %p697 = scmp.eq.s32.totalorder %s83, 0
      %p698 = por %p696, %p697
      %s699 = ssub.s32 %s77, %s84
      %p700 = scmp.eq.s32.totalorder %s699, 0
      %s702 = sadd.s32 %s701, 1
      %s703 = scalar_select %p700, %s701, %s702
      %p706 = pneg %p700
      %p707 = scmp.eq.s32.totalorder %s77, 1
      %p708 = por %p706, %p707
      %p709 = scmp.ne.s32.totalorder %s701, %s704
      %p710 = scmp.eq.s32.totalorder %s77, 0
      %p711 = por %p709, %p710
      %p712 = scmp.ne.s32.totalorder %s701, %s704
      %p713 = scmp.eq.s32.totalorder %s82, 1
      %p714 = por %p712, %p713
      %p715 = scmp.ne.s32.totalorder %s704, %s705
      %p716 = scmp.eq.s32.totalorder %s82, 0
      %p717 = por %p715, %p716
      %p718 = scmp.ne.s32.totalorder %s704, %s705
      %p719 = scmp.eq.s32.totalorder %s83, 1
      %p720 = por %p718, %p719
      %p722 = scmp.ne.s32.totalorder %s705, %s721
      %p723 = scmp.eq.s32.totalorder %s83, 0
      %p724 = por %p722, %p723
      %p725 = scmp.le.s32.totalorder 1, %s77
      %p726 = scmp.lt.s32.totalorder %s77, 3
      %p727 = pnand %p725, %p726
      %p728 = pneg %p727
      // Predicated region
      $region9: #{forward.1} parent=5 // pred_check
        _
      $region10: #{forward.1} parent=5 // pred_check_branch
        %730 = sbr.rel (%p727) target = $region12
      $region11: #{forward.1} parent=5 // pred_region
        %s731 = ssub.s32 %s77, 1
        // Predicated region
        $region13: #{forward.1} parent=11 // pred_check
          %p732 = pneg %p124
        $region14: #{forward.1} parent=11 // pred_check_branch
          %734 = sbr.rel (%p732) target = $region16
        $region15: #{forward.1} parent=11 // pred_region
          %736 = vsyncadd [#allocation4], 0
          %s737 = sshll.u32 %s3, 4
          %s738 = int_to_ptr.hbm [resolvable:$true] %s737
          %s739 = sshll.u32 [#allocation3], 4
          %s740 = int_to_ptr.vmem [resolvable:$true] %s739
          %745 = dma.hbm_to_vmem [thread:$0]  %s738, 512, %s740, [#allocation4], 64, 64, 4
        $region16: #{forward.1} parent=11 // pred_fallthru
          _
        // Predicated region
        $region17: #{forward.1} parent=11 // pred_check
          %p746 = pneg %p145
        $region18: #{forward.1} parent=11 // pred_check_branch
          %748 = sbr.rel (%p746) target = $region20
        $region19: #{forward.1} parent=11 // pred_region
          _
        $region20: #{forward.1} parent=11 // pred_fallthru
          _
        // Predicated region
        $region21: #{forward.1} parent=11 // pred_check
          %p749 = pneg %p166
        $region22: #{forward.1} parent=11 // pred_check_branch
          %751 = sbr.rel (%p749) target = $region24
        $region23: #{forward.1} parent=11 // pred_region
          _
        $region24: #{forward.1} parent=11 // pred_fallthru
          _
        // Predicated region
        $region25: #{forward.1} parent=11 // pred_check
          %p752 = pneg %p187
        $region26: #{forward.1} parent=11 // pred_check_branch
          %754 = sbr.rel (%p752) target = $region28
        $region27: #{forward.1} parent=11 // pred_region
          _
        $region28: #{forward.1} parent=11 // pred_fallthru
          _
        // Predicated region
        $region29: #{forward.1} parent=11 // pred_check
          %p755 = pneg %p208
        $region30: #{forward.1} parent=11 // pred_check_branch
          %757 = sbr.rel (%p755) target = $region32
        $region31: #{forward.1} parent=11 // pred_region
          %759 = vsyncadd [#allocation6], 0
          %s761 = sshll.u32 %s11, 4
          %s762 = int_to_ptr.hbm [resolvable:$true] %s761
          %s763 = sshll.u32 [#allocation5], 4
          %s764 = int_to_ptr.vmem [resolvable:$true] %s763
          %766 = dma.hbm_to_vmem [thread:$0]  %s762, 16, %s764, [#allocation6]
        $region32: #{forward.1} parent=11 // pred_fallthru
          _
        // Predicated region
        $region33: #{forward.1} parent=11 // pred_check
          %p767 = pneg %p229
        $region34: #{forward.1} parent=11 // pred_check_branch
          %769 = sbr.rel (%p767) target = $region36
        $region35: #{forward.1} parent=11 // pred_region
          %771 = vsyncadd [#allocation6], 0
          %s772 = sshll.u32 %s13, 4
          %s773 = int_to_ptr.hbm [resolvable:$true] %s772
          %s774 = sshll.u32 [#allocation7], 4
          %s775 = int_to_ptr.vmem [resolvable:$true] %s774
          %780 = dma.hbm_to_vmem [thread:$0]  %s773, 192, %s775, [#allocation6], 64, 64, 4
        $region36: #{forward.1} parent=11 // pred_fallthru
          _
        // Predicated region
        $region37: #{forward.1} parent=11 // pred_check
          %p781 = pneg %p250
        $region38: #{forward.1} parent=11 // pred_check_branch
          %783 = sbr.rel (%p781) target = $region40
        $region39: #{forward.1} parent=11 // pred_region
          _
        $region40: #{forward.1} parent=11 // pred_fallthru
          _
        // Predicated region
        $region41: #{forward.1} parent=11 // pred_check
          %p784 = pneg %p271
        $region42: #{forward.1} parent=11 // pred_check_branch
          %786 = sbr.rel (%p784) target = $region44
        $region43: #{forward.1} parent=11 // pred_region
          %788 = vsyncadd [#allocation9], 0
          %s790 = sshll.u32 %s17, 4
          %s791 = int_to_ptr.hbm [resolvable:$true] %s790
          %s792 = sshll.u32 [#allocation8], 4
          %s793 = int_to_ptr.vmem [resolvable:$true] %s792
          %795 = dma.hbm_to_vmem [thread:$0]  %s791, 64, %s793, [#allocation9]
        $region44: #{forward.1} parent=11 // pred_fallthru
          _
        // Predicated region
        $region45: #{forward.1} parent=11 // pred_check
          %p796 = pneg %p292
        $region46: #{forward.1} parent=11 // pred_check_branch
          %798 = sbr.rel (%p796) target = $region48
        $region47: #{forward.1} parent=11 // pred_region
          _
        $region48: #{forward.1} parent=11 // pred_fallthru
          _
        // Predicated region
        $region49: #{forward.1} parent=11 // pred_check
          %p799 = pneg %p313
        $region50: #{forward.1} parent=11 // pred_check_branch
          %801 = sbr.rel (%p799) target = $region52
        $region51: #{forward.1} parent=11 // pred_region
          %803 = vsyncadd [#allocation9], 0
          %s805 = sshll.u32 %s21, 4
          %s806 = int_to_ptr.hbm [resolvable:$true] %s805
          %s807 = sshll.u32 [#allocation10], 4
          %s808 = int_to_ptr.vmem [resolvable:$true] %s807
          %810 = dma.hbm_to_vmem [thread:$0]  %s806, 16, %s808, [#allocation9]
        $region52: #{forward.1} parent=11 // pred_fallthru
          _
        // Predicated region
        $region53: #{forward.1} parent=11 // pred_check
          %p811 = pneg %p334
        $region54: #{forward.1} parent=11 // pred_check_branch
          %813 = sbr.rel (%p811) target = $region56
        $region55: #{forward.1} parent=11 // pred_region
          _
        $region56: #{forward.1} parent=11 // pred_fallthru
          _
        // Predicated region
        $region57: #{forward.1} parent=11 // pred_check
          %p814 = pneg %p355
        $region58: #{forward.1} parent=11 // pred_check_branch
          %816 = sbr.rel (%p814) target = $region60
        $region59: #{forward.1} parent=11 // pred_region
          %818 = vsyncadd [#allocation12], 0
          %s819 = sshll.u32 %s25, 4
          %s820 = int_to_ptr.hbm [resolvable:$true] %s819
          %s821 = sshll.u32 [#allocation11], 4
          %s822 = int_to_ptr.vmem [resolvable:$true] %s821
          %827 = dma.hbm_to_vmem [thread:$0]  %s820, 3072, %s822, [#allocation12], 64, 64, 4
        $region60: #{forward.1} parent=11 // pred_fallthru
          _
        // Predicated region
        $region61: #{forward.1} parent=11 // pred_check
          %p828 = pneg %p376
        $region62: #{forward.1} parent=11 // pred_check_branch
          %830 = sbr.rel (%p828) target = $region64
        $region63: #{forward.1} parent=11 // pred_region
          _
        $region64: #{forward.1} parent=11 // pred_fallthru
          _
        // Predicated region
        $region65: #{forward.1} parent=11 // pred_check
          %p831 = pneg %p397
        $region66: #{forward.1} parent=11 // pred_check_branch
          %833 = sbr.rel (%p831) target = $region68
        $region67: #{forward.1} parent=11 // pred_region
          _
        $region68: #{forward.1} parent=11 // pred_fallthru
          _
        // Predicated region
        $region69: #{forward.1} parent=11 // pred_check
          %p834 = pneg %p418
        $region70: #{forward.1} parent=11 // pred_check_branch
          %836 = sbr.rel (%p834) target = $region72
        $region71: #{forward.1} parent=11 // pred_region
          %838 = vsyncadd [#allocation12], 0
          %s839 = sshll.u32 %s31, 4
          %s840 = int_to_ptr.hbm [resolvable:$true] %s839
          %s841 = sshll.u32 [#allocation13], 4
          %s842 = int_to_ptr.vmem [resolvable:$true] %s841
          %847 = dma.hbm_to_vmem [thread:$0]  %s840, 3072, %s842, [#allocation12], 64, 64, 4
        $region72: #{forward.1} parent=11 // pred_fallthru
          _
        // Predicated region
        $region73: #{forward.1} parent=11 // pred_check
          %p848 = pneg %p439
        $region74: #{forward.1} parent=11 // pred_check_branch
          %850 = sbr.rel (%p848) target = $region76
        $region75: #{forward.1} parent=11 // pred_region
          %852 = vsyncadd [#allocation15], 0
          %s854 = sshll.u32 %s33, 4
          %s855 = int_to_ptr.hbm [resolvable:$true] %s854
          %s856 = sshll.u32 [#allocation14], 4
          %s857 = int_to_ptr.vmem [resolvable:$true] %s856
          %859 = dma.hbm_to_vmem [thread:$0]  %s855, 32, %s857, [#allocation15]
        $region76: #{forward.1} parent=11 // pred_fallthru
          _
        // Predicated region
        $region77: #{forward.1} parent=11 // pred_check
          %p860 = pneg %p460
        $region78: #{forward.1} parent=11 // pred_check_branch
          %862 = sbr.rel (%p860) target = $region80
        $region79: #{forward.1} parent=11 // pred_region
          %864 = vsyncadd [#allocation15], 0
          %s865 = sshll.u32 %s35, 4
          %s866 = int_to_ptr.hbm [resolvable:$true] %s865
          %s867 = sshll.u32 [#allocation16], 4
          %s868 = int_to_ptr.vmem [resolvable:$true] %s867
          %873 = dma.hbm_to_vmem [thread:$0]  %s866, 1024, %s868, [#allocation15], 64, 64, 4
        $region80: #{forward.1} parent=11 // pred_fallthru
          _
        // Predicated region
        $region81: #{forward.1} parent=11 // pred_check
          %p874 = pneg %p481
        $region82: #{forward.1} parent=11 // pred_check_branch
          %876 = sbr.rel (%p874) target = $region84
        $region83: #{forward.1} parent=11 // pred_region
          %878 = vsyncadd [#allocation18], 0
          %s880 = sshll.u32 %s37, 4
          %s881 = int_to_ptr.hbm [resolvable:$true] %s880
          %s882 = sshll.u32 [#allocation17], 4
          %s883 = int_to_ptr.vmem [resolvable:$true] %s882
          %885 = dma.hbm_to_vmem [thread:$0]  %s881, 16, %s883, [#allocation18]
        $region84: #{forward.1} parent=11 // pred_fallthru
          _
        // Predicated region
        $region85: #{forward.1} parent=11 // pred_check
          %p886 = pneg %p502
        $region86: #{forward.1} parent=11 // pred_check_branch
          %888 = sbr.rel (%p886) target = $region88
        $region87: #{forward.1} parent=11 // pred_region
          %890 = vsyncadd [#allocation18], 0
          %s891 = sshll.u32 %s39, 4
          %s892 = int_to_ptr.hbm [resolvable:$true] %s891
          %s893 = sshll.u32 [#allocation19], 4
          %s894 = int_to_ptr.vmem [resolvable:$true] %s893
          %899 = dma.hbm_to_vmem [thread:$0]  %s892, 48, %s894, [#allocation18], 16, 16, 1
        $region88: #{forward.1} parent=11 // pred_fallthru
          _
        // Predicated region
        $region89: #{forward.1} parent=11 // pred_check
          %p900 = pneg %p523
        $region90: #{forward.1} parent=11 // pred_check_branch
          %902 = sbr.rel (%p900) target = $region92
        $region91: #{forward.1} parent=11 // pred_region
          %904 = vsyncadd [#allocation21], 0
          %s905 = sshll.u32 %s41, 4
          %s906 = int_to_ptr.hbm [resolvable:$true] %s905
          %s907 = sshll.u32 [#allocation20], 4
          %s908 = int_to_ptr.vmem [resolvable:$true] %s907
          %913 = dma.hbm_to_vmem [thread:$0]  %s906, 3072, %s908, [#allocation21], 64, 64, 4
        $region92: #{forward.1} parent=11 // pred_fallthru
          _
        // Predicated region
        $region93: #{forward.1} parent=11 // pred_check
          %p914 = pneg %p544
        $region94: #{forward.1} parent=11 // pred_check_branch
          %916 = sbr.rel (%p914) target = $region96
        $region95: #{forward.1} parent=11 // pred_region
          %918 = vsyncadd [#allocation21], 0
          %s920 = sshll.u32 %s43, 4
          %s921 = int_to_ptr.hbm [resolvable:$true] %s920
          %s922 = sshll.u32 [#allocation22], 4
          %s923 = int_to_ptr.vmem [resolvable:$true] %s922
          %925 = dma.hbm_to_vmem [thread:$0]  %s921, 16, %s923, [#allocation21]
        $region96: #{forward.1} parent=11 // pred_fallthru
          _
        // Predicated region
        $region97: #{forward.1} parent=11 // pred_check
          %p926 = pneg %p565
        $region98: #{forward.1} parent=11 // pred_check_branch
          %928 = sbr.rel (%p926) target = $region100
        $region99: #{forward.1} parent=11 // pred_region
          _
        $region100: #{forward.1} parent=11 // pred_fallthru
          _
        // Predicated region
        $region101: #{forward.1} parent=11 // pred_check
          %p929 = pneg %p586
        $region102: #{forward.1} parent=11 // pred_check_branch
          %931 = sbr.rel (%p929) target = $region104
        $region103: #{forward.1} parent=11 // pred_region
          %933 = vsyncadd [#allocation24], 0
          %s934 = sshll.u32 %s47, 4
          %s935 = int_to_ptr.hbm [resolvable:$true] %s934
          %s936 = sshll.u32 [#allocation23], 4
          %s937 = int_to_ptr.vmem [resolvable:$true] %s936
          %942 = dma.hbm_to_vmem [thread:$0]  %s935, 3072, %s937, [#allocation24], 64, 64, 4
        $region104: #{forward.1} parent=11 // pred_fallthru
          _
        // Predicated region
        $region105: #{forward.1} parent=11 // pred_check
          %p943 = pneg %p607
        $region106: #{forward.1} parent=11 // pred_check_branch
          %945 = sbr.rel (%p943) target = $region108
        $region107: #{forward.1} parent=11 // pred_region
          %947 = vsyncadd [#allocation24], 0
          %s949 = sshll.u32 %s49, 4
          %s950 = int_to_ptr.hbm [resolvable:$true] %s949
          %s951 = sshll.u32 [#allocation25], 4
          %s952 = int_to_ptr.vmem [resolvable:$true] %s951
          %954 = dma.hbm_to_vmem [thread:$0]  %s950, 16, %s952, [#allocation24]
        $region108: #{forward.1} parent=11 // pred_fallthru
          _
        // Predicated region
        $region109: #{forward.1} parent=11 // pred_check
          %p955 = pneg %p628
        $region110: #{forward.1} parent=11 // pred_check_branch
          %957 = sbr.rel (%p955) target = $region112
        $region111: #{forward.1} parent=11 // pred_region
          %959 = vsyncadd [#allocation27], 0
          %s960 = sshll.u32 %s51, 4
          %s961 = int_to_ptr.hbm [resolvable:$true] %s960
          %s962 = sshll.u32 [#allocation26], 4
          %s963 = int_to_ptr.vmem [resolvable:$true] %s962
          %968 = dma.hbm_to_vmem [thread:$0]  %s961, 1024, %s963, [#allocation27], 64, 64, 4
        $region112: #{forward.1} parent=11 // pred_fallthru
          _
        // Predicated region
        $region113: #{forward.1} parent=11 // pred_check
          %p969 = pneg %p649
        $region114: #{forward.1} parent=11 // pred_check_branch
          %971 = sbr.rel (%p969) target = $region116
        $region115: #{forward.1} parent=11 // pred_region
          %973 = vsyncadd [#allocation27], 0
          %s975 = sshll.u32 %s53, 4
          %s976 = int_to_ptr.hbm [resolvable:$true] %s975
          %s977 = sshll.u32 [#allocation28], 4
          %s978 = int_to_ptr.vmem [resolvable:$true] %s977
          %980 = dma.hbm_to_vmem [thread:$0]  %s976, 16, %s978, [#allocation27]
        $region116: #{forward.1} parent=11 // pred_fallthru
          _
        // Predicated region
        $region117: #{forward.1} parent=11 // pred_check
          %p981 = pneg %p670
        $region118: #{forward.1} parent=11 // pred_check_branch
          %983 = sbr.rel (%p981) target = $region120
        $region119: #{forward.1} parent=11 // pred_region
          %985 = vsyncadd [#allocation30], 0
          %s987 = sshll.u32 %s55, 4
          %s988 = int_to_ptr.hbm [resolvable:$true] %s987
          %s989 = sshll.u32 [#allocation29], 4
          %s990 = int_to_ptr.vmem [resolvable:$true] %s989
          %992 = dma.hbm_to_vmem [thread:$0]  %s988, 16, %s990, [#allocation30]
        $region120: #{forward.1} parent=11 // pred_fallthru
          _
        // Predicated region
        $region121: #{forward.1} parent=11 // pred_check
          %p993 = pneg %p691
        $region122: #{forward.1} parent=11 // pred_check_branch
          %995 = sbr.rel (%p993) target = $region124
        $region123: #{forward.1} parent=11 // pred_region
          _
        $region124: #{forward.1} parent=11 // pred_fallthru
          _
      $region12: #{forward.1} parent=5 // pred_fallthru
        _
      %p996 = scmp.lt.s32.totalorder %s77, 2
      // Predicated region
      $region125: #{forward.1} parent=5 // pred_check
        %p997 = pneg %p996
      $region126: #{forward.1} parent=5 // pred_check_branch
        %999 = sbr.rel (%p997) target = $region128
      $region127: #{forward.1} parent=5 // pred_region
        // Predicated region
        $region129: #{forward.1} parent=127 // pred_check
          %p1000 = pneg %p97
        $region130: #{forward.1} parent=127 // pred_check_branch
          %1002 = sbr.rel (%p1000) target = $region132
        $region131: #{forward.1} parent=127 // pred_region
          %p1003 = scmp.lt.s32.totalorder %s77, 1
          %s1004 = scalar_select %p1003, %s77, 1
          %s1005 = smul.addr %s1004, 4
          %s1006 = smul.addr %s1005, 8
          %s1007 = scalar_lea.vmem %s1, %s1006
        $region132: #{forward.1} parent=127 // pred_fallthru
          _
      $region128: #{forward.1} parent=5 // pred_fallthru
        _
      %p1008 = scmp.le.s32.totalorder 1, %s77
      %p1009 = scmp.lt.s32.totalorder %s77, 3
      %p1010 = pnand %p1008, %p1009
      %p1011 = pneg %p1010
      // Predicated region
      $region133: #{forward.1} parent=5 // pred_check
        _
      $region134: #{forward.1} parent=5 // pred_check_branch
        %1013 = sbr.rel (%p1010) target = $region136
      $region135: #{forward.1} parent=5 // pred_region
        %s1014 = ssub.s32 %s77, 1
        // Predicated region
        $region137: #{forward.1} parent=135 // pred_check
          %p1015 = pneg %p124
        $region138: #{forward.1} parent=135 // pred_check_branch
          %1017 = sbr.rel (%p1015) target = $region140
        $region139: #{forward.1} parent=135 // pred_region
          %1019 = dma.done [#allocation4], 512
        $region140: #{forward.1} parent=135 // pred_fallthru
          _
        // Predicated region
        $region141: #{forward.1} parent=135 // pred_check
          %p1020 = pneg %p208
        $region142: #{forward.1} parent=135 // pred_check_branch
          %1022 = sbr.rel (%p1020) target = $region144
        $region143: #{forward.1} parent=135 // pred_region
          %1024 = dma.done [#allocation6], 16
        $region144: #{forward.1} parent=135 // pred_fallthru
          _
        // Predicated region
        $region145: #{forward.1} parent=135 // pred_check
          %p1025 = pneg %p229
        $region146: #{forward.1} parent=135 // pred_check_branch
          %1027 = sbr.rel (%p1025) target = $region148
        $region147: #{forward.1} parent=135 // pred_region
          %1029 = dma.done [#allocation6], 192
        $region148: #{forward.1} parent=135 // pred_fallthru
          _
        // Predicated region
        $region149: #{forward.1} parent=135 // pred_check
          %p1030 = pneg %p271
        $region150: #{forward.1} parent=135 // pred_check_branch
          %1032 = sbr.rel (%p1030) target = $region152
        $region151: #{forward.1} parent=135 // pred_region
          %1034 = dma.done [#allocation9], 64
        $region152: #{forward.1} parent=135 // pred_fallthru
          _
        // Predicated region
        $region153: #{forward.1} parent=135 // pred_check
          %p1035 = pneg %p313
        $region154: #{forward.1} parent=135 // pred_check_branch
          %1037 = sbr.rel (%p1035) target = $region156
        $region155: #{forward.1} parent=135 // pred_region
          %1039 = dma.done [#allocation9], 16
        $region156: #{forward.1} parent=135 // pred_fallthru
          _
        // Predicated region
        $region157: #{forward.1} parent=135 // pred_check
          %p1040 = pneg %p355
        $region158: #{forward.1} parent=135 // pred_check_branch
          %1042 = sbr.rel (%p1040) target = $region160
        $region159: #{forward.1} parent=135 // pred_region
          %1044 = dma.done [#allocation12], 3072
        $region160: #{forward.1} parent=135 // pred_fallthru
          _
        // Predicated region
        $region161: #{forward.1} parent=135 // pred_check
          %p1045 = pneg %p418
        $region162: #{forward.1} parent=135 // pred_check_branch
          %1047 = sbr.rel (%p1045) target = $region164
        $region163: #{forward.1} parent=135 // pred_region
          %1049 = dma.done [#allocation12], 3072
        $region164: #{forward.1} parent=135 // pred_fallthru
          _
        // Predicated region
        $region165: #{forward.1} parent=135 // pred_check
          %p1050 = pneg %p439
        $region166: #{forward.1} parent=135 // pred_check_branch
          %1052 = sbr.rel (%p1050) target = $region168
        $region167: #{forward.1} parent=135 // pred_region
          %1054 = dma.done [#allocation15], 32
        $region168: #{forward.1} parent=135 // pred_fallthru
          _
        // Predicated region
        $region169: #{forward.1} parent=135 // pred_check
          %p1055 = pneg %p460
        $region170: #{forward.1} parent=135 // pred_check_branch
          %1057 = sbr.rel (%p1055) target = $region172
        $region171: #{forward.1} parent=135 // pred_region
          %1059 = dma.done [#allocation15], 1024
        $region172: #{forward.1} parent=135 // pred_fallthru
          _
        // Predicated region
        $region173: #{forward.1} parent=135 // pred_check
          %p1060 = pneg %p481
        $region174: #{forward.1} parent=135 // pred_check_branch
          %1062 = sbr.rel (%p1060) target = $region176
        $region175: #{forward.1} parent=135 // pred_region
          %1064 = dma.done [#allocation18], 16
        $region176: #{forward.1} parent=135 // pred_fallthru
          _
        // Predicated region
        $region177: #{forward.1} parent=135 // pred_check
          %p1065 = pneg %p502
        $region178: #{forward.1} parent=135 // pred_check_branch
          %1067 = sbr.rel (%p1065) target = $region180
        $region179: #{forward.1} parent=135 // pred_region
          %1069 = dma.done [#allocation18], 48
        $region180: #{forward.1} parent=135 // pred_fallthru
          _
        // Predicated region
        $region181: #{forward.1} parent=135 // pred_check
          %p1070 = pneg %p523
        $region182: #{forward.1} parent=135 // pred_check_branch
          %1072 = sbr.rel (%p1070) target = $region184
        $region183: #{forward.1} parent=135 // pred_region
          %1074 = dma.done [#allocation21], 3072
        $region184: #{forward.1} parent=135 // pred_fallthru
          _
        // Predicated region
        $region185: #{forward.1} parent=135 // pred_check
          %p1075 = pneg %p544
        $region186: #{forward.1} parent=135 // pred_check_branch
          %1077 = sbr.rel (%p1075) target = $region188
        $region187: #{forward.1} parent=135 // pred_region
          %1079 = dma.done [#allocation21], 16
        $region188: #{forward.1} parent=135 // pred_fallthru
          _
        // Predicated region
        $region189: #{forward.1} parent=135 // pred_check
          %p1080 = pneg %p586
        $region190: #{forward.1} parent=135 // pred_check_branch
          %1082 = sbr.rel (%p1080) target = $region192
        $region191: #{forward.1} parent=135 // pred_region
          %1084 = dma.done [#allocation24], 3072
        $region192: #{forward.1} parent=135 // pred_fallthru
          _
        // Predicated region
        $region193: #{forward.1} parent=135 // pred_check
          %p1085 = pneg %p607
        $region194: #{forward.1} parent=135 // pred_check_branch
          %1087 = sbr.rel (%p1085) target = $region196
        $region195: #{forward.1} parent=135 // pred_region
          %1089 = dma.done [#allocation24], 16
        $region196: #{forward.1} parent=135 // pred_fallthru
          _
        // Predicated region
        $region197: #{forward.1} parent=135 // pred_check
          %p1090 = pneg %p628
        $region198: #{forward.1} parent=135 // pred_check_branch
          %1092 = sbr.rel (%p1090) target = $region200
        $region199: #{forward.1} parent=135 // pred_region
          %1094 = dma.done [#allocation27], 1024
        $region200: #{forward.1} parent=135 // pred_fallthru
          _
        // Predicated region
        $region201: #{forward.1} parent=135 // pred_check
          %p1095 = pneg %p649
        $region202: #{forward.1} parent=135 // pred_check_branch
          %1097 = sbr.rel (%p1095) target = $region204
        $region203: #{forward.1} parent=135 // pred_region
          %1099 = dma.done [#allocation27], 16
        $region204: #{forward.1} parent=135 // pred_fallthru
          _
        // Predicated region
        $region205: #{forward.1} parent=135 // pred_check
          %p1100 = pneg %p670
        $region206: #{forward.1} parent=135 // pred_check_branch
          %1102 = sbr.rel (%p1100) target = $region208
        $region207: #{forward.1} parent=135 // pred_region
          %1104 = dma.done [#allocation30], 16
        $region208: #{forward.1} parent=135 // pred_fallthru
          _
        %p1105 = scmp.lt.s32.totalorder %s82, 1
        %s1106 = scalar_select %p1105, %s82, 1
        %s1107 = smul.addr %s1106, 4
        %s1108 = smul.addr %s1107, 8
        %s1109 = scalar_lea.vmem %s1, %s1108
        %p1110 = pneg %p103
        %p1111 = pneg %p100
        %p1112 = pneg %p124
        %p1113 = pneg %p121
        %p1114 = pneg %p145
        %p1115 = pneg %p142
        %p1116 = pneg %p166
        %p1117 = pneg %p163
        %p1118 = pneg %p187
        %p1119 = pneg %p184
        %p1120 = pneg %p208
        %p1121 = pneg %p205
        %p1122 = pneg %p229
        %p1123 = pneg %p226
        %p1124 = pneg %p250
        %p1125 = pneg %p247
        %p1126 = pneg %p271
        %p1127 = pneg %p268
        %p1128 = pneg %p292
        %p1129 = pneg %p289
        %p1130 = pneg %p313
        %p1131 = pneg %p310
        %p1132 = pneg %p334
        %p1133 = pneg %p331
        %p1134 = pneg %p355
        %p1135 = pneg %p352
        %p1136 = pneg %p376
        %p1137 = pneg %p373
        %p1138 = pneg %p397
        %p1139 = pneg %p394
        %p1140 = pneg %p418
        %p1141 = pneg %p415
        %p1142 = pneg %p439
        %p1143 = pneg %p436
        %p1144 = pneg %p460
        %p1145 = pneg %p457
        %p1146 = pneg %p481
        %p1147 = pneg %p478
        %p1148 = pneg %p502
        %p1149 = pneg %p499
        %p1150 = pneg %p523
        %p1151 = pneg %p520
        %p1152 = pneg %p544
        %p1153 = pneg %p541
        %p1154 = pneg %p565
        %p1155 = pneg %p562
        %p1156 = pneg %p586
        %p1157 = pneg %p583
        %p1158 = pneg %p607
        %p1159 = pneg %p604
        %p1160 = pneg %p628
        %p1161 = pneg %p625
        %p1162 = pneg %p649
        %p1163 = pneg %p646
        %p1164 = pneg %p670
        %p1165 = pneg %p667
        %p1166 = pneg %p691
        %p1167 = pneg %p688
        %p1168 = pneg %p717
        %p1169 = pneg %p714
        %p1170 = scmp.lt.s32.totalorder %s82, 1
        %s1171 = scalar_select %p1170, %s82, 1
        %s1172 = scalar_lea.vmem %s59, %s1171
        %p1173 = scmp.lt.s32.totalorder %s82, 1
        %s1174 = scalar_select %p1173, %s82, 1
        %s1175 = smul.addr %s1174, 4
        %s1176 = smul.addr %s1175, 8
        %s1177 = scalar_lea.vmem %s1, %s1176
        %p1178 = scmp.lt.s32.totalorder %s82, 1
        %s1179 = scalar_select %p1178, %s82, 1
        %s1180 = scalar_lea.vmem %s59, %s1179
        %v1182 = vld [vmem:[%s1177] sm:$0xff]
        %v1183 = vld [vmem:[%s1177 + $0x8] sm:$0xff]
        %v1184 = vld [vmem:[%s1177 + $0x10] sm:$0xff]
        %v1185 = vld [vmem:[%s1177 + $0x18] sm:$0xff]
        %v1186 = vpack.c.bf16 %v1183, %v1182
        %v1187 = vpack.c.bf16 %v1185, %v1184
        %v1188 = vld [vmem:[#allocation3] sm:$0xf]
        %v1189 = vld [vmem:[#allocation3 + $0x4] sm:$0xf]
        %v1192 = vunpack.c.l.b16 %v1188
        %v1193 = vunpack.c.l.b16 %v1189
        %v1194 = vpack.c.b16 %v1193, %v1192
        %vm1195 = vcmask 261120
        %v1197 = vsel %vm1195, %v1194, 0
        %1199 = vmatpush.bf16.msra.mxu0 0
        %1200 = vmatpush.bf16.msra.mxu0 0
        %1201 = vmatpush.bf16.msra.mxu0 0
        %1202 = vmatpush.bf16.msra.mxu0 0
        %1203 = vmatpush.bf16.msra.mxu0 0
        %1204 = vmatpush.bf16.msra.mxu0 0
        %1205 = vmatpush.bf16.msra.mxu0 %v1187
        %1206 = vmatpush.bf16.msra.mxu0 %v1186
        %1207 = vmatmul.bf16.gmra.mxu0 %v1197
        %v1208 = vpop.f32.mrf.mxu0
        %v1209 = vadd.f32 0.0, %v1208
        %v1210 = vpop.f32.mrf.mxu0
        %v1211 = vadd.f32 0.0, %v1210
        %1212 = vdwg.mxu0
        %v1213 = vpack.c.bf16 %v1211, %v1209
        %v1214 = vld [vmem:[%s5] sm:$0xf]
        %v1215 = vld [vmem:[%s5 + $0x4] sm:$0xf]
        %v1216 = vld [vmem:[%s5 + $0x8] sm:$0xf]
        %v1217 = vld [vmem:[%s5 + $0xc] sm:$0xf]
        %v1218 = vld [vmem:[%s5 + $0x10] sm:$0xf]
        %v1219 = vld [vmem:[%s5 + $0x14] sm:$0xf]
        %v1220 = vld [vmem:[%s5 + $0x18] sm:$0xf]
        %v1221 = vld [vmem:[%s5 + $0x1c] sm:$0xf]
        %v1222 = vld [vmem:[%s5 + $0x20] sm:$0xf]
        %v1223 = vld [vmem:[%s5 + $0x24] sm:$0xf]
        %v1224 = vld [vmem:[%s5 + $0x28] sm:$0xf]
        %v1225 = vld [vmem:[%s5 + $0x2c] sm:$0xf]
        %s1226 = scalar_lea.vmem [#allocation3], 8
        %v1227 = vld [vmem:[%s1226] sm:$0xf]
        %v1228 = vld [vmem:[%s1226 + $0x4] sm:$0xf]
        %v1231 = vunpack.c.l.b16 %v1227
        %v1232 = vunpack.c.l.b16 %v1228
        %v1233 = vpack.c.b16 %v1232, %v1231
        %v1235 = vsel %vm1195, %v1233, 0
        %1237 = vmatpush.bf16.msra.mxu0 0
        %1238 = vmatpush.bf16.msra.mxu0 0
        %1239 = vmatpush.bf16.msra.mxu0 0
        %1240 = vmatpush.bf16.msra.mxu0 0
        %1241 = vmatpush.bf16.msra.mxu0 0
        %1242 = vmatpush.bf16.msra.mxu0 0
        %1243 = vmatpush.bf16.msra.mxu0 %v1187
        %1244 = vmatpush.bf16.msra.mxu0 %v1186
        %1245 = vmatmul.bf16.gmra.mxu0 %v1235
        %v1246 = vpop.f32.mrf.mxu0
        %v1247 = vadd.f32 0.0, %v1246
        %v1248 = vpop.f32.mrf.mxu0
        %v1249 = vadd.f32 0.0, %v1248
        %1250 = vdwg.mxu0
        %v1251 = vpack.c.bf16 %v1249, %v1247
        %s1252 = scalar_lea.vmem %s5, 48
        %v1253 = vld [vmem:[%s1252] sm:$0xf]
        %v1254 = vld [vmem:[%s1252 + $0x4] sm:$0xf]
        %v1255 = vld [vmem:[%s1252 + $0x8] sm:$0xf]
        %v1256 = vld [vmem:[%s1252 + $0xc] sm:$0xf]
        %v1257 = vld [vmem:[%s1252 + $0x10] sm:$0xf]
        %v1258 = vld [vmem:[%s1252 + $0x14] sm:$0xf]
        %v1259 = vld [vmem:[%s1252 + $0x18] sm:$0xf]
        %v1260 = vld [vmem:[%s1252 + $0x1c] sm:$0xf]
        %v1261 = vld [vmem:[%s1252 + $0x20] sm:$0xf]
        %v1262 = vld [vmem:[%s1252 + $0x24] sm:$0xf]
        %v1263 = vld [vmem:[%s1252 + $0x28] sm:$0xf]
        %v1264 = vld [vmem:[%s1252 + $0x2c] sm:$0xf]
        %v1277 = vunpack.c.l.b16 %v1253
        %v1278 = vunpack.c.l.b16 %v1254
        %v1279 = vunpack.c.l.b16 %v1255
        %v1280 = vunpack.c.l.b16 %v1256
        %v1281 = vunpack.c.l.b16 %v1257
        %v1282 = vunpack.c.l.b16 %v1258
        %v1283 = vunpack.c.l.b16 %v1259
        %v1284 = vunpack.c.l.b16 %v1260
        %v1285 = vunpack.c.l.b16 %v1261
        %v1286 = vunpack.c.l.b16 %v1262
        %v1287 = vunpack.c.l.b16 %v1263
        %v1288 = vunpack.c.l.b16 %v1264
        %v1289 = vpack.c.b16 %v1278, %v1277
        %v1290 = vpack.c.b16 %v1280, %v1279
        %v1291 = vpack.c.b16 %v1282, %v1281
        %v1292 = vpack.c.b16 %v1284, %v1283
        %v1293 = vpack.c.b16 %v1286, %v1285
        %v1294 = vpack.c.b16 %v1288, %v1287
        %vm1301 = vcmask 785408
        %v1303 = vsel %vm1301, %v1251, 0
        %1305 = vmatpush.bf16.msra.mxu0 0
        %1306 = vmatpush.bf16.msra.mxu0 0
        %1307 = vmatpush.bf16.msra.mxu0 %v1294
        %1308 = vmatpush.bf16.msra.mxu0 %v1293
        %1309 = vmatpush.bf16.msra.mxu0 %v1292
        %1310 = vmatpush.bf16.msra.mxu0 %v1291
        %1311 = vmatpush.bf16.msra.mxu0 %v1290
        %1312 = vmatpush.bf16.msra.mxu0 %v1289
        %1313 = vmatmul.bf16.gmra.mxu0 %v1303
        %v1314 = vpop.f32.mrf.mxu0
        %v1315 = vadd.f32 0.0, %v1314
        %v1316 = vpop.f32.mrf.mxu0
        %v1317 = vadd.f32 0.0, %v1316
        %1318 = vdwg.mxu0
        %v1331 = vunpack.c.l.b16 %v1214
        %v1332 = vunpack.c.l.b16 %v1215
        %v1333 = vunpack.c.l.b16 %v1216
        %v1334 = vunpack.c.l.b16 %v1217
        %v1335 = vunpack.c.l.b16 %v1218
        %v1336 = vunpack.c.l.b16 %v1219
        %v1337 = vunpack.c.l.b16 %v1220
        %v1338 = vunpack.c.l.b16 %v1221
        %v1339 = vunpack.c.l.b16 %v1222
        %v1340 = vunpack.c.l.b16 %v1223
        %v1341 = vunpack.c.l.b16 %v1224
        %v1342 = vunpack.c.l.b16 %v1225
        %v1343 = vpack.c.b16 %v1332, %v1331
        %v1344 = vpack.c.b16 %v1334, %v1333
        %v1345 = vpack.c.b16 %v1336, %v1335
        %v1346 = vpack.c.b16 %v1338, %v1337
        %v1347 = vpack.c.b16 %v1340, %v1339
        %v1348 = vpack.c.b16 %v1342, %v1341
        %v1356 = vsel %vm1301, %v1213, 0
        %1358 = vmatpush.bf16.msra.mxu0 0
        %1359 = vmatpush.bf16.msra.mxu0 0
        %1360 = vmatpush.bf16.msra.mxu0 %v1348
        %1361 = vmatpush.bf16.msra.mxu0 %v1347
        %1362 = vmatpush.bf16.msra.mxu0 %v1346
        %1363 = vmatpush.bf16.msra.mxu0 %v1345
        %1364 = vmatpush.bf16.msra.mxu0 %v1344
        %1365 = vmatpush.bf16.msra.mxu0 %v1343
        %1366 = vmatmul.bf16.gmra.mxu0 %v1356
        %v1367 = vpop.f32.mrf.mxu0
        %v1368 = vadd.f32 %v1315, %v1367
        %v1369 = vpop.f32.mrf.mxu0
        %v1370 = vadd.f32 %v1317, %v1369
        %1371 = vdwg.mxu0
        %s1372 = scalar_lea.vmem [#allocation3], 16
        %v1373 = vld [vmem:[%s1372] sm:$0xf]
        %v1374 = vld [vmem:[%s1372 + $0x4] sm:$0xf]
        %v1377 = vunpack.c.l.b16 %v1373
        %v1378 = vunpack.c.l.b16 %v1374
        %v1379 = vpack.c.b16 %v1378, %v1377
        %v1381 = vsel %vm1195, %v1379, 0
        %1383 = vmatpush.bf16.msra.mxu0 0
        %1384 = vmatpush.bf16.msra.mxu0 0
        %1385 = vmatpush.bf16.msra.mxu0 0
        %1386 = vmatpush.bf16.msra.mxu0 0
        %1387 = vmatpush.bf16.msra.mxu0 0
        %1388 = vmatpush.bf16.msra.mxu0 0
        %1389 = vmatpush.bf16.msra.mxu0 %v1187
        %1390 = vmatpush.bf16.msra.mxu0 %v1186
        %1391 = vmatmul.bf16.gmra.mxu0 %v1381
        %v1392 = vpop.f32.mrf.mxu0
        %v1393 = vadd.f32 0.0, %v1392
        %v1394 = vpop.f32.mrf.mxu0
        %v1395 = vadd.f32 0.0, %v1394
        %1396 = vdwg.mxu0
        %v1397 = vpack.c.bf16 %v1395, %v1393
        %s1398 = scalar_lea.vmem %s5, 96
        %v1399 = vld [vmem:[%s1398] sm:$0xf]
        %v1400 = vld [vmem:[%s1398 + $0x4] sm:$0xf]
        %v1401 = vld [vmem:[%s1398 + $0x8] sm:$0xf]
        %v1402 = vld [vmem:[%s1398 + $0xc] sm:$0xf]
        %v1403 = vld [vmem:[%s1398 + $0x10] sm:$0xf]
        %v1404 = vld [vmem:[%s1398 + $0x14] sm:$0xf]
        %v1405 = vld [vmem:[%s1398 + $0x18] sm:$0xf]
        %v1406 = vld [vmem:[%s1398 + $0x1c] sm:$0xf]
        %v1407 = vld [vmem:[%s1398 + $0x20] sm:$0xf]
        %v1408 = vld [vmem:[%s1398 + $0x24] sm:$0xf]
        %v1409 = vld [vmem:[%s1398 + $0x28] sm:$0xf]
        %v1410 = vld [vmem:[%s1398 + $0x2c] sm:$0xf]
        %v1423 = vunpack.c.l.b16 %v1399
        %v1424 = vunpack.c.l.b16 %v1400
        %v1425 = vunpack.c.l.b16 %v1401
        %v1426 = vunpack.c.l.b16 %v1402
        %v1427 = vunpack.c.l.b16 %v1403
        %v1428 = vunpack.c.l.b16 %v1404
        %v1429 = vunpack.c.l.b16 %v1405
        %v1430 = vunpack.c.l.b16 %v1406
        %v1431 = vunpack.c.l.b16 %v1407
        %v1432 = vunpack.c.l.b16 %v1408
        %v1433 = vunpack.c.l.b16 %v1409
        %v1434 = vunpack.c.l.b16 %v1410
        %v1435 = vpack.c.b16 %v1424, %v1423
        %v1436 = vpack.c.b16 %v1426, %v1425
        %v1437 = vpack.c.b16 %v1428, %v1427
        %v1438 = vpack.c.b16 %v1430, %v1429
        %v1439 = vpack.c.b16 %v1432, %v1431
        %v1440 = vpack.c.b16 %v1434, %v1433
        %v1448 = vsel %vm1301, %v1397, 0
        %1450 = vmatpush.bf16.msra.mxu0 0
        %1451 = vmatpush.bf16.msra.mxu0 0
        %1452 = vmatpush.bf16.msra.mxu0 %v1440
        %1453 = vmatpush.bf16.msra.mxu0 %v1439
        %1454 = vmatpush.bf16.msra.mxu0 %v1438
        %1455 = vmatpush.bf16.msra.mxu0 %v1437
        %1456 = vmatpush.bf16.msra.mxu0 %v1436
        %1457 = vmatpush.bf16.msra.mxu0 %v1435
        %1458 = vmatmul.bf16.gmra.mxu0 %v1448
        %v1459 = vpop.f32.mrf.mxu0
        %v1460 = vadd.f32 0.0, %v1459
        %v1461 = vpop.f32.mrf.mxu0
        %v1462 = vadd.f32 0.0, %v1461
        %1463 = vdwg.mxu0
        %v1464 = vadd.f32 %v1368, %v1460
        %v1465 = vadd.f32 %v1370, %v1462
        %s1466 = scalar_lea.vmem [#allocation3], 24
        %v1467 = vld [vmem:[%s1466] sm:$0xf]
        %v1468 = vld [vmem:[%s1466 + $0x4] sm:$0xf]
        %v1471 = vunpack.c.l.b16 %v1467
        %v1472 = vunpack.c.l.b16 %v1468
        %v1473 = vpack.c.b16 %v1472, %v1471
        %v1475 = vsel %vm1195, %v1473, 0
        %1477 = vmatpush.bf16.msra.mxu0 0
        %1478 = vmatpush.bf16.msra.mxu0 0
        %1479 = vmatpush.bf16.msra.mxu0 0
        %1480 = vmatpush.bf16.msra.mxu0 0
        %1481 = vmatpush.bf16.msra.mxu0 0
        %1482 = vmatpush.bf16.msra.mxu0 0
        %1483 = vmatpush.bf16.msra.mxu0 %v1187
        %1484 = vmatpush.bf16.msra.mxu0 %v1186
        %1485 = vmatmul.bf16.gmra.mxu0 %v1475
        %v1486 = vpop.f32.mrf.mxu0
        %v1487 = vadd.f32 0.0, %v1486
        %v1488 = vpop.f32.mrf.mxu0
        %v1489 = vadd.f32 0.0, %v1488
        %1490 = vdwg.mxu0
        %v1491 = vpack.c.bf16 %v1489, %v1487
        %s1492 = scalar_lea.vmem %s5, 144
        %v1493 = vld [vmem:[%s1492] sm:$0xf]
        %v1494 = vld [vmem:[%s1492 + $0x4] sm:$0xf]
        %v1495 = vld [vmem:[%s1492 + $0x8] sm:$0xf]
        %v1496 = vld [vmem:[%s1492 + $0xc] sm:$0xf]
        %v1497 = vld [vmem:[%s1492 + $0x10] sm:$0xf]
        %v1498 = vld [vmem:[%s1492 + $0x14] sm:$0xf]
        %v1499 = vld [vmem:[%s1492 + $0x18] sm:$0xf]
        %v1500 = vld [vmem:[%s1492 + $0x1c] sm:$0xf]
        %v1501 = vld [vmem:[%s1492 + $0x20] sm:$0xf]
        %v1502 = vld [vmem:[%s1492 + $0x24] sm:$0xf]
        %v1503 = vld [vmem:[%s1492 + $0x28] sm:$0xf]
        %v1504 = vld [vmem:[%s1492 + $0x2c] sm:$0xf]
        %v1517 = vunpack.c.l.b16 %v1493
        %v1518 = vunpack.c.l.b16 %v1494
        %v1519 = vunpack.c.l.b16 %v1495
        %v1520 = vunpack.c.l.b16 %v1496
        %v1521 = vunpack.c.l.b16 %v1497
        %v1522 = vunpack.c.l.b16 %v1498
        %v1523 = vunpack.c.l.b16 %v1499
        %v1524 = vunpack.c.l.b16 %v1500
        %v1525 = vunpack.c.l.b16 %v1501
        %v1526 = vunpack.c.l.b16 %v1502
        %v1527 = vunpack.c.l.b16 %v1503
        %v1528 = vunpack.c.l.b16 %v1504
        %v1529 = vpack.c.b16 %v1518, %v1517
        %v1530 = vpack.c.b16 %v1520, %v1519
        %v1531 = vpack.c.b16 %v1522, %v1521
        %v1532 = vpack.c.b16 %v1524, %v1523
        %v1533 = vpack.c.b16 %v1526, %v1525
        %v1534 = vpack.c.b16 %v1528, %v1527
        %v1542 = vsel %vm1301, %v1491, 0
        %1544 = vmatpush.bf16.msra.mxu0 0
        %1545 = vmatpush.bf16.msra.mxu0 0
        %1546 = vmatpush.bf16.msra.mxu0 %v1534
        %1547 = vmatpush.bf16.msra.mxu0 %v1533
        %1548 = vmatpush.bf16.msra.mxu0 %v1532
        %1549 = vmatpush.bf16.msra.mxu0 %v1531
        %1550 = vmatpush.bf16.msra.mxu0 %v1530
        %1551 = vmatpush.bf16.msra.mxu0 %v1529
        %1552 = vmatmul.bf16.gmra.mxu0 %v1542
        %v1553 = vpop.f32.mrf.mxu0
        %v1554 = vadd.f32 0.0, %v1553
        %v1555 = vpop.f32.mrf.mxu0
        %v1556 = vadd.f32 0.0, %v1555
        %1557 = vdwg.mxu0
        %v1558 = vadd.f32 %v1464, %v1554
        %v1559 = vadd.f32 %v1465, %v1556
        %v1560 = vmul.f32 %v1558, 0.2
        %v1561 = vmul.f32 %v1559, 0.2
        %v1562 = vmax.f32 %v1558, %v1560
        %v1563 = vmax.f32 %v1559, %v1561
        %v1564 = vpack.c.bf16 %v1563, %v1562
        %v1565 = vld [vmem:[%s7] sm:$0xf]
        %vm1566 = vcmask 130048
        %v1568 = vsel %vm1566, %v1565, 0
        %1570 = vmatpush.bf16.msra.mxu0 0
        %1571 = vmatpush.bf16.msra.mxu0 0
        %1572 = vmatpush.bf16.msra.mxu0 0
        %1573 = vmatpush.bf16.msra.mxu0 0
        %1574 = vmatpush.bf16.msra.mxu0 0
        %1575 = vmatpush.bf16.msra.mxu0 0
        %1576 = vmatpush.bf16.msra.mxu0 0
        %1577 = vmatpush.bf16.msra.mxu0 %v1564
        %1578 = vmatmul.bf16.gmra.mxu0 %v1568
        %v1579 = vpop.f32.mrf.mxu0
        %v1580 = vadd.f32 0.0, %v1579
        %v1581 = vpop.f32.mrf.mxu0
        %1582 = vdwg.mxu0
        %v1583 = vpack.c.bf16 %v1580, %v1580
        %v1584 = vld [vmem:[%s9] sm:$0xf]
        %v1585 = vld [vmem:[%s9 + $0x4] sm:$0xf]
        %v1586 = vld [vmem:[%s9 + $0x8] sm:$0xf]
        %v1587 = vld [vmem:[%s9 + $0xc] sm:$0xf]
        %v1588 = vld [vmem:[%s9 + $0x10] sm:$0xf]
        %v1589 = vld [vmem:[%s9 + $0x14] sm:$0xf]
        %v1590 = vld [vmem:[%s9 + $0x18] sm:$0xf]
        %v1591 = vld [vmem:[%s9 + $0x1c] sm:$0xf]
        %v1592 = vld [vmem:[%s9 + $0x20] sm:$0xf]
        %v1593 = vld [vmem:[%s9 + $0x24] sm:$0xf]
        %v1594 = vld [vmem:[%s9 + $0x28] sm:$0xf]
        %v1595 = vld [vmem:[%s9 + $0x2c] sm:$0xf]
        %v1596 = vld [vmem:[%s9 + $0x30] sm:$0xf]
        %v1597 = vld [vmem:[%s9 + $0x34] sm:$0xf]
        %v1598 = vld [vmem:[%s9 + $0x38] sm:$0xf]
        %v1599 = vld [vmem:[%s9 + $0x3c] sm:$0xf]
        %s1600 = scalar_lea.vmem %s7, 4
        %v1601 = vld [vmem:[%s1600] sm:$0xf]
        %v1603 = vsel %vm1566, %v1601, 0
        %1605 = vmatpush.bf16.msra.mxu0 0
        %1606 = vmatpush.bf16.msra.mxu0 0
        %1607 = vmatpush.bf16.msra.mxu0 0
        %1608 = vmatpush.bf16.msra.mxu0 0
        %1609 = vmatpush.bf16.msra.mxu0 0
        %1610 = vmatpush.bf16.msra.mxu0 0
        %1611 = vmatpush.bf16.msra.mxu0 0
        %1612 = vmatpush.bf16.msra.mxu0 %v1564
        %1613 = vmatmul.bf16.gmra.mxu0 %v1603
        %v1614 = vpop.f32.mrf.mxu0
        %v1615 = vadd.f32 0.0, %v1614
        %v1616 = vpop.f32.mrf.mxu0
        %1617 = vdwg.mxu0
        %v1618 = vpack.c.bf16 %v1615, %v1615
        %s1619 = scalar_lea.vmem %s9, 64
        %v1620 = vld [vmem:[%s1619] sm:$0xf]
        %v1621 = vld [vmem:[%s1619 + $0x4] sm:$0xf]
        %v1622 = vld [vmem:[%s1619 + $0x8] sm:$0xf]
        %v1623 = vld [vmem:[%s1619 + $0xc] sm:$0xf]
        %v1624 = vld [vmem:[%s1619 + $0x10] sm:$0xf]
        %v1625 = vld [vmem:[%s1619 + $0x14] sm:$0xf]
        %v1626 = vld [vmem:[%s1619 + $0x18] sm:$0xf]
        %v1627 = vld [vmem:[%s1619 + $0x1c] sm:$0xf]
        %v1628 = vld [vmem:[%s1619 + $0x20] sm:$0xf]
        %v1629 = vld [vmem:[%s1619 + $0x24] sm:$0xf]
        %v1630 = vld [vmem:[%s1619 + $0x28] sm:$0xf]
        %v1631 = vld [vmem:[%s1619 + $0x2c] sm:$0xf]
        %v1632 = vld [vmem:[%s1619 + $0x30] sm:$0xf]
        %v1633 = vld [vmem:[%s1619 + $0x34] sm:$0xf]
        %v1634 = vld [vmem:[%s1619 + $0x38] sm:$0xf]
        %v1635 = vld [vmem:[%s1619 + $0x3c] sm:$0xf]
        %v1652 = vunpack.c.l.b16 %v1620
        %v1653 = vunpack.c.l.b16 %v1621
        %v1654 = vunpack.c.l.b16 %v1622
        %v1655 = vunpack.c.l.b16 %v1623
        %v1656 = vunpack.c.l.b16 %v1624
        %v1657 = vunpack.c.l.b16 %v1625
        %v1658 = vunpack.c.l.b16 %v1626
        %v1659 = vunpack.c.l.b16 %v1627
        %v1660 = vunpack.c.l.b16 %v1628
        %v1661 = vunpack.c.l.b16 %v1629
        %v1662 = vunpack.c.l.b16 %v1630
        %v1663 = vunpack.c.l.b16 %v1631
        %v1664 = vunpack.c.l.b16 %v1632
        %v1665 = vunpack.c.l.b16 %v1633
        %v1666 = vunpack.c.l.b16 %v1634
        %v1667 = vunpack.c.l.b16 %v1635
        %v1668 = vpack.c.b16 %v1653, %v1652
        %v1669 = vpack.c.b16 %v1655, %v1654
        %v1670 = vpack.c.b16 %v1657, %v1656
        %v1671 = vpack.c.b16 %v1659, %v1658
        %v1672 = vpack.c.b16 %v1661, %v1660
        %v1673 = vpack.c.b16 %v1663, %v1662
        %v1674 = vpack.c.b16 %v1665, %v1664
        %v1675 = vpack.c.b16 %v1667, %v1666
        %1684 = vmatpush.bf16.msra.mxu0 %v1675
        %1685 = vmatpush.bf16.msra.mxu0 %v1674
        %1686 = vmatpush.bf16.msra.mxu0 %v1673
        %1687 = vmatpush.bf16.msra.mxu0 %v1672
        %1688 = vmatpush.bf16.msra.mxu0 %v1671
        %1689 = vmatpush.bf16.msra.mxu0 %v1670
        %1690 = vmatpush.bf16.msra.mxu0 %v1669
        %1691 = vmatpush.bf16.msra.mxu0 %v1668
        %1692 = vmatmul.bf16.gmra.mxu0 %v1618
        %v1693 = vpop.f32.mrf.mxu0
        %v1694 = vadd.f32 0.0, %v1693
        %v1695 = vpop.f32.mrf.mxu0
        %1696 = vdwg.mxu0
        %v1713 = vunpack.c.l.b16 %v1584
        %v1714 = vunpack.c.l.b16 %v1585
        %v1715 = vunpack.c.l.b16 %v1586
        %v1716 = vunpack.c.l.b16 %v1587
        %v1717 = vunpack.c.l.b16 %v1588
        %v1718 = vunpack.c.l.b16 %v1589
        %v1719 = vunpack.c.l.b16 %v1590
        %v1720 = vunpack.c.l.b16 %v1591
        %v1721 = vunpack.c.l.b16 %v1592
        %v1722 = vunpack.c.l.b16 %v1593
        %v1723 = vunpack.c.l.b16 %v1594
        %v1724 = vunpack.c.l.b16 %v1595
        %v1725 = vunpack.c.l.b16 %v1596
        %v1726 = vunpack.c.l.b16 %v1597
        %v1727 = vunpack.c.l.b16 %v1598
        %v1728 = vunpack.c.l.b16 %v1599
        %v1729 = vpack.c.b16 %v1714, %v1713
        %v1730 = vpack.c.b16 %v1716, %v1715
        %v1731 = vpack.c.b16 %v1718, %v1717
        %v1732 = vpack.c.b16 %v1720, %v1719
        %v1733 = vpack.c.b16 %v1722, %v1721
        %v1734 = vpack.c.b16 %v1724, %v1723
        %v1735 = vpack.c.b16 %v1726, %v1725
        %v1736 = vpack.c.b16 %v1728, %v1727
        %1745 = vmatpush.bf16.msra.mxu0 %v1736
        %1746 = vmatpush.bf16.msra.mxu0 %v1735
        %1747 = vmatpush.bf16.msra.mxu0 %v1734
        %1748 = vmatpush.bf16.msra.mxu0 %v1733
        %1749 = vmatpush.bf16.msra.mxu0 %v1732
        %1750 = vmatpush.bf16.msra.mxu0 %v1731
        %1751 = vmatpush.bf16.msra.mxu0 %v1730
        %1752 = vmatpush.bf16.msra.mxu0 %v1729
        %1753 = vmatmul.bf16.gmra.mxu0 %v1583
        %v1754 = vpop.f32.mrf.mxu0
        %v1755 = vadd.f32 %v1694, %v1754
        %v1756 = vpop.f32.mrf.mxu0
        %1757 = vdwg.mxu0
        %s1758 = scalar_lea.vmem %s7, 8
        %v1759 = vld [vmem:[%s1758] sm:$0xf]
        %v1761 = vsel %vm1566, %v1759, 0
        %1763 = vmatpush.bf16.msra.mxu0 0
        %1764 = vmatpush.bf16.msra.mxu0 0
        %1765 = vmatpush.bf16.msra.mxu0 0
        %1766 = vmatpush.bf16.msra.mxu0 0
        %1767 = vmatpush.bf16.msra.mxu0 0
        %1768 = vmatpush.bf16.msra.mxu0 0
        %1769 = vmatpush.bf16.msra.mxu0 0
        %1770 = vmatpush.bf16.msra.mxu0 %v1564
        %1771 = vmatmul.bf16.gmra.mxu0 %v1761
        %v1772 = vpop.f32.mrf.mxu0
        %v1773 = vadd.f32 0.0, %v1772
        %v1774 = vpop.f32.mrf.mxu0
        %1775 = vdwg.mxu0
        %v1776 = vpack.c.bf16 %v1773, %v1773
        %s1777 = scalar_lea.vmem %s9, 128
        %v1778 = vld [vmem:[%s1777] sm:$0xf]
        %v1779 = vld [vmem:[%s1777 + $0x4] sm:$0xf]
        %v1780 = vld [vmem:[%s1777 + $0x8] sm:$0xf]
        %v1781 = vld [vmem:[%s1777 + $0xc] sm:$0xf]
        %v1782 = vld [vmem:[%s1777 + $0x10] sm:$0xf]
        %v1783 = vld [vmem:[%s1777 + $0x14] sm:$0xf]
        %v1784 = vld [vmem:[%s1777 + $0x18] sm:$0xf]
        %v1785 = vld [vmem:[%s1777 + $0x1c] sm:$0xf]
        %v1786 = vld [vmem:[%s1777 + $0x20] sm:$0xf]
        %v1787 = vld [vmem:[%s1777 + $0x24] sm:$0xf]
        %v1788 = vld [vmem:[%s1777 + $0x28] sm:$0xf]
        %v1789 = vld [vmem:[%s1777 + $0x2c] sm:$0xf]
        %v1790 = vld [vmem:[%s1777 + $0x30] sm:$0xf]
        %v1791 = vld [vmem:[%s1777 + $0x34] sm:$0xf]
        %v1792 = vld [vmem:[%s1777 + $0x38] sm:$0xf]
        %v1793 = vld [vmem:[%s1777 + $0x3c] sm:$0xf]
        %v1810 = vunpack.c.l.b16 %v1778
        %v1811 = vunpack.c.l.b16 %v1779
        %v1812 = vunpack.c.l.b16 %v1780
        %v1813 = vunpack.c.l.b16 %v1781
        %v1814 = vunpack.c.l.b16 %v1782
        %v1815 = vunpack.c.l.b16 %v1783
        %v1816 = vunpack.c.l.b16 %v1784
        %v1817 = vunpack.c.l.b16 %v1785
        %v1818 = vunpack.c.l.b16 %v1786
        %v1819 = vunpack.c.l.b16 %v1787
        %v1820 = vunpack.c.l.b16 %v1788
        %v1821 = vunpack.c.l.b16 %v1789
        %v1822 = vunpack.c.l.b16 %v1790
        %v1823 = vunpack.c.l.b16 %v1791
        %v1824 = vunpack.c.l.b16 %v1792
        %v1825 = vunpack.c.l.b16 %v1793
        %v1826 = vpack.c.b16 %v1811, %v1810
        %v1827 = vpack.c.b16 %v1813, %v1812
        %v1828 = vpack.c.b16 %v1815, %v1814
        %v1829 = vpack.c.b16 %v1817, %v1816
        %v1830 = vpack.c.b16 %v1819, %v1818
        %v1831 = vpack.c.b16 %v1821, %v1820
        %v1832 = vpack.c.b16 %v1823, %v1822
        %v1833 = vpack.c.b16 %v1825, %v1824
        %1842 = vmatpush.bf16.msra.mxu0 %v1833
        %1843 = vmatpush.bf16.msra.mxu0 %v1832
        %1844 = vmatpush.bf16.msra.mxu0 %v1831
        %1845 = vmatpush.bf16.msra.mxu0 %v1830
        %1846 = vmatpush.bf16.msra.mxu0 %v1829
        %1847 = vmatpush.bf16.msra.mxu0 %v1828
        %1848 = vmatpush.bf16.msra.mxu0 %v1827
        %1849 = vmatpush.bf16.msra.mxu0 %v1826
        %1850 = vmatmul.bf16.gmra.mxu0 %v1776
        %v1851 = vpop.f32.mrf.mxu0
        %v1852 = vadd.f32 0.0, %v1851
        %v1853 = vpop.f32.mrf.mxu0
        %1854 = vdwg.mxu0
        %v1855 = vadd.f32 %v1755, %v1852
        %v1856 = vld [vmem:[#allocation5] sm:$0x1]
        %v1858 = vperm.slane %v1856, 0
        %v1860 = vadd.f32 %v1855, %v1858
        %v1861 = vmax.f32 %v1860, 0.0
        %v1862 = vpack.c.bf16 %v1861, %v1861
        %v1863 = vld [vmem:[#allocation7] sm:$0xf]
        %vm1864 = vcmask 64512
        %v1866 = vsel %vm1864, %v1863, 0
        %vm1868 = vcmask 1043456
        %v1870 = vsel %vm1868, %v1862, 0
        %1872 = vmatpush.bf16.msra.mxu0 0
        %1873 = vmatpush.bf16.msra.mxu0 0
        %1874 = vmatpush.bf16.msra.mxu0 0
        %1875 = vmatpush.bf16.msra.mxu0 0
        %1876 = vmatpush.bf16.msra.mxu0 0
        %1877 = vmatpush.bf16.msra.mxu0 0
        %1878 = vmatpush.bf16.msra.mxu0 0
        %1879 = vmatpush.bf16.msra.mxu0 %v1870
        %1880 = vmatmul.bf16.gmra.mxu0 %v1866
        %v1881 = vpop.f32.mrf.mxu0
        %v1882 = vadd.f32 0.0, %v1881
        %v1883 = vpop.f32.mrf.mxu0
        %1884 = vdwg.mxu0
        %v1885 = vpack.c.bf16 %v1882, %v1882
        %v1886 = vld [vmem:[%s15] sm:$0xf]
        %v1887 = vld [vmem:[%s15 + $0x4] sm:$0xf]
        %v1888 = vld [vmem:[%s15 + $0x8] sm:$0xf]
        %v1889 = vld [vmem:[%s15 + $0xc] sm:$0xf]
        %v1890 = vld [vmem:[%s15 + $0x10] sm:$0xf]
        %v1891 = vld [vmem:[%s15 + $0x14] sm:$0xf]
        %v1892 = vld [vmem:[%s15 + $0x18] sm:$0xf]
        %v1893 = vld [vmem:[%s15 + $0x1c] sm:$0xf]
        %v1894 = vld [vmem:[%s15 + $0x20] sm:$0xf]
        %v1895 = vld [vmem:[%s15 + $0x24] sm:$0xf]
        %v1896 = vld [vmem:[%s15 + $0x28] sm:$0xf]
        %v1897 = vld [vmem:[%s15 + $0x2c] sm:$0xf]
        %v1898 = vld [vmem:[%s15 + $0x30] sm:$0xf]
        %v1899 = vld [vmem:[%s15 + $0x34] sm:$0xf]
        %v1900 = vld [vmem:[%s15 + $0x38] sm:$0xf]
        %v1901 = vld [vmem:[%s15 + $0x3c] sm:$0xf]
        %s1902 = scalar_lea.vmem [#allocation7], 4
        %v1903 = vld [vmem:[%s1902] sm:$0xf]
        %v1905 = vsel %vm1864, %v1903, 0
        %1907 = vmatpush.bf16.msra.mxu0 0
        %1908 = vmatpush.bf16.msra.mxu0 0
        %1909 = vmatpush.bf16.msra.mxu0 0
        %1910 = vmatpush.bf16.msra.mxu0 0
        %1911 = vmatpush.bf16.msra.mxu0 0
        %1912 = vmatpush.bf16.msra.mxu0 0
        %1913 = vmatpush.bf16.msra.mxu0 0
        %1914 = vmatpush.bf16.msra.mxu0 %v1870
        %1915 = vmatmul.bf16.gmra.mxu0 %v1905
        %v1916 = vpop.f32.mrf.mxu0
        %v1917 = vadd.f32 0.0, %v1916
        %v1918 = vpop.f32.mrf.mxu0
        %1919 = vdwg.mxu0
        %v1920 = vpack.c.bf16 %v1917, %v1917
        %s1921 = scalar_lea.vmem %s15, 64
        %v1922 = vld [vmem:[%s1921] sm:$0xf]
        %v1923 = vld [vmem:[%s1921 + $0x4] sm:$0xf]
        %v1924 = vld [vmem:[%s1921 + $0x8] sm:$0xf]
        %v1925 = vld [vmem:[%s1921 + $0xc] sm:$0xf]
        %v1926 = vld [vmem:[%s1921 + $0x10] sm:$0xf]
        %v1927 = vld [vmem:[%s1921 + $0x14] sm:$0xf]
        %v1928 = vld [vmem:[%s1921 + $0x18] sm:$0xf]
        %v1929 = vld [vmem:[%s1921 + $0x1c] sm:$0xf]
        %v1930 = vld [vmem:[%s1921 + $0x20] sm:$0xf]
        %v1931 = vld [vmem:[%s1921 + $0x24] sm:$0xf]
        %v1932 = vld [vmem:[%s1921 + $0x28] sm:$0xf]
        %v1933 = vld [vmem:[%s1921 + $0x2c] sm:$0xf]
        %v1934 = vld [vmem:[%s1921 + $0x30] sm:$0xf]
        %v1935 = vld [vmem:[%s1921 + $0x34] sm:$0xf]
        %v1936 = vld [vmem:[%s1921 + $0x38] sm:$0xf]
        %v1937 = vld [vmem:[%s1921 + $0x3c] sm:$0xf]
        %v1954 = vunpack.c.l.b16 %v1922
        %v1955 = vunpack.c.l.b16 %v1923
        %v1956 = vunpack.c.l.b16 %v1924
        %v1957 = vunpack.c.l.b16 %v1925
        %v1958 = vunpack.c.l.b16 %v1926
        %v1959 = vunpack.c.l.b16 %v1927
        %v1960 = vunpack.c.l.b16 %v1928
        %v1961 = vunpack.c.l.b16 %v1929
        %v1962 = vunpack.c.l.b16 %v1930
        %v1963 = vunpack.c.l.b16 %v1931
        %v1964 = vunpack.c.l.b16 %v1932
        %v1965 = vunpack.c.l.b16 %v1933
        %v1966 = vunpack.c.l.b16 %v1934
        %v1967 = vunpack.c.l.b16 %v1935
        %v1968 = vunpack.c.l.b16 %v1936
        %v1969 = vunpack.c.l.b16 %v1937
        %v1970 = vpack.c.b16 %v1955, %v1954
        %v1971 = vpack.c.b16 %v1957, %v1956
        %v1972 = vpack.c.b16 %v1959, %v1958
        %v1973 = vpack.c.b16 %v1961, %v1960
        %v1974 = vpack.c.b16 %v1963, %v1962
        %v1975 = vpack.c.b16 %v1965, %v1964
        %v1976 = vpack.c.b16 %v1967, %v1966
        %v1977 = vpack.c.b16 %v1969, %v1968
        %1986 = vmatpush.bf16.msra.mxu0 %v1977
        %1987 = vmatpush.bf16.msra.mxu0 %v1976
        %1988 = vmatpush.bf16.msra.mxu0 %v1975
        %1989 = vmatpush.bf16.msra.mxu0 %v1974
        %1990 = vmatpush.bf16.msra.mxu0 %v1973
        %1991 = vmatpush.bf16.msra.mxu0 %v1972
        %1992 = vmatpush.bf16.msra.mxu0 %v1971
        %1993 = vmatpush.bf16.msra.mxu0 %v1970
        %1994 = vmatmul.bf16.gmra.mxu0 %v1920
        %v1995 = vpop.f32.mrf.mxu0
        %v1996 = vadd.f32 0.0, %v1995
        %v1997 = vpop.f32.mrf.mxu0
        %1998 = vdwg.mxu0
        %v2015 = vunpack.c.l.b16 %v1886
        %v2016 = vunpack.c.l.b16 %v1887
        %v2017 = vunpack.c.l.b16 %v1888
        %v2018 = vunpack.c.l.b16 %v1889
        %v2019 = vunpack.c.l.b16 %v1890
        %v2020 = vunpack.c.l.b16 %v1891
        %v2021 = vunpack.c.l.b16 %v1892
        %v2022 = vunpack.c.l.b16 %v1893
        %v2023 = vunpack.c.l.b16 %v1894
        %v2024 = vunpack.c.l.b16 %v1895
        %v2025 = vunpack.c.l.b16 %v1896
        %v2026 = vunpack.c.l.b16 %v1897
        %v2027 = vunpack.c.l.b16 %v1898
        %v2028 = vunpack.c.l.b16 %v1899
        %v2029 = vunpack.c.l.b16 %v1900
        %v2030 = vunpack.c.l.b16 %v1901
        %v2031 = vpack.c.b16 %v2016, %v2015
        %v2032 = vpack.c.b16 %v2018, %v2017
        %v2033 = vpack.c.b16 %v2020, %v2019
        %v2034 = vpack.c.b16 %v2022, %v2021
        %v2035 = vpack.c.b16 %v2024, %v2023
        %v2036 = vpack.c.b16 %v2026, %v2025
        %v2037 = vpack.c.b16 %v2028, %v2027
        %v2038 = vpack.c.b16 %v2030, %v2029
        %2047 = vmatpush.bf16.msra.mxu0 %v2038
        %2048 = vmatpush.bf16.msra.mxu0 %v2037
        %2049 = vmatpush.bf16.msra.mxu0 %v2036
        %2050 = vmatpush.bf16.msra.mxu0 %v2035
        %2051 = vmatpush.bf16.msra.mxu0 %v2034
        %2052 = vmatpush.bf16.msra.mxu0 %v2033
        %2053 = vmatpush.bf16.msra.mxu0 %v2032
        %2054 = vmatpush.bf16.msra.mxu0 %v2031
        %2055 = vmatmul.bf16.gmra.mxu0 %v1885
        %v2056 = vpop.f32.mrf.mxu0
        %v2057 = vadd.f32 %v1996, %v2056
        %v2058 = vpop.f32.mrf.mxu0
        %2059 = vdwg.mxu0
        %s2060 = scalar_lea.vmem [#allocation7], 8
        %v2061 = vld [vmem:[%s2060] sm:$0xf]
        %v2063 = vsel %vm1864, %v2061, 0
        %2065 = vmatpush.bf16.msra.mxu0 0
        %2066 = vmatpush.bf16.msra.mxu0 0
        %2067 = vmatpush.bf16.msra.mxu0 0
        %2068 = vmatpush.bf16.msra.mxu0 0
        %2069 = vmatpush.bf16.msra.mxu0 0
        %2070 = vmatpush.bf16.msra.mxu0 0
        %2071 = vmatpush.bf16.msra.mxu0 0
        %2072 = vmatpush.bf16.msra.mxu0 %v1870
        %2073 = vmatmul.bf16.gmra.mxu0 %v2063
        %v2074 = vpop.f32.mrf.mxu0
        %v2075 = vadd.f32 0.0, %v2074
        %v2076 = vpop.f32.mrf.mxu0
        %2077 = vdwg.mxu0
        %v2078 = vpack.c.bf16 %v2075, %v2075
        %s2079 = scalar_lea.vmem %s15, 128
        %v2080 = vld [vmem:[%s2079] sm:$0xf]
        %v2081 = vld [vmem:[%s2079 + $0x4] sm:$0xf]
        %v2082 = vld [vmem:[%s2079 + $0x8] sm:$0xf]
        %v2083 = vld [vmem:[%s2079 + $0xc] sm:$0xf]
        %v2084 = vld [vmem:[%s2079 + $0x10] sm:$0xf]
        %v2085 = vld [vmem:[%s2079 + $0x14] sm:$0xf]
        %v2086 = vld [vmem:[%s2079 + $0x18] sm:$0xf]
        %v2087 = vld [vmem:[%s2079 + $0x1c] sm:$0xf]
        %v2088 = vld [vmem:[%s2079 + $0x20] sm:$0xf]
        %v2089 = vld [vmem:[%s2079 + $0x24] sm:$0xf]
        %v2090 = vld [vmem:[%s2079 + $0x28] sm:$0xf]
        %v2091 = vld [vmem:[%s2079 + $0x2c] sm:$0xf]
        %v2092 = vld [vmem:[%s2079 + $0x30] sm:$0xf]
        %v2093 = vld [vmem:[%s2079 + $0x34] sm:$0xf]
        %v2094 = vld [vmem:[%s2079 + $0x38] sm:$0xf]
        %v2095 = vld [vmem:[%s2079 + $0x3c] sm:$0xf]
        %v2112 = vunpack.c.l.b16 %v2080
        %v2113 = vunpack.c.l.b16 %v2081
        %v2114 = vunpack.c.l.b16 %v2082
        %v2115 = vunpack.c.l.b16 %v2083
        %v2116 = vunpack.c.l.b16 %v2084
        %v2117 = vunpack.c.l.b16 %v2085
        %v2118 = vunpack.c.l.b16 %v2086
        %v2119 = vunpack.c.l.b16 %v2087
        %v2120 = vunpack.c.l.b16 %v2088
        %v2121 = vunpack.c.l.b16 %v2089
        %v2122 = vunpack.c.l.b16 %v2090
        %v2123 = vunpack.c.l.b16 %v2091
        %v2124 = vunpack.c.l.b16 %v2092
        %v2125 = vunpack.c.l.b16 %v2093
        %v2126 = vunpack.c.l.b16 %v2094
        %v2127 = vunpack.c.l.b16 %v2095
        %v2128 = vpack.c.b16 %v2113, %v2112
        %v2129 = vpack.c.b16 %v2115, %v2114
        %v2130 = vpack.c.b16 %v2117, %v2116
        %v2131 = vpack.c.b16 %v2119, %v2118
        %v2132 = vpack.c.b16 %v2121, %v2120
        %v2133 = vpack.c.b16 %v2123, %v2122
        %v2134 = vpack.c.b16 %v2125, %v2124
        %v2135 = vpack.c.b16 %v2127, %v2126
        %2144 = vmatpush.bf16.msra.mxu0 %v2135
        %2145 = vmatpush.bf16.msra.mxu0 %v2134
        %2146 = vmatpush.bf16.msra.mxu0 %v2133
        %2147 = vmatpush.bf16.msra.mxu0 %v2132
        %2148 = vmatpush.bf16.msra.mxu0 %v2131
        %2149 = vmatpush.bf16.msra.mxu0 %v2130
        %2150 = vmatpush.bf16.msra.mxu0 %v2129
        %2151 = vmatpush.bf16.msra.mxu0 %v2128
        %2152 = vmatmul.bf16.gmra.mxu0 %v2078
        %v2153 = vpop.f32.mrf.mxu0
        %v2154 = vadd.f32 0.0, %v2153
        %v2155 = vpop.f32.mrf.mxu0
        %2156 = vdwg.mxu0
        %v2157 = vadd.f32 %v2057, %v2154
        %v2158 = vld [vmem:[#allocation8] sm:$0xf]
        %v2160 = vsel %vm1566, %v2158, 0
        %2162 = vmatpush.bf16.msra.mxu0 0
        %2163 = vmatpush.bf16.msra.mxu0 0
        %2164 = vmatpush.bf16.msra.mxu0 0
        %2165 = vmatpush.bf16.msra.mxu0 0
        %2166 = vmatpush.bf16.msra.mxu0 0
        %2167 = vmatpush.bf16.msra.mxu0 0
        %2168 = vmatpush.bf16.msra.mxu0 0
        %2169 = vmatpush.bf16.msra.mxu0 %v1564
        %2170 = vmatmul.bf16.gmra.mxu0 %v2160
        %v2171 = vpop.f32.mrf.mxu0
        %v2172 = vadd.f32 0.0, %v2171
        %v2173 = vpop.f32.mrf.mxu0
        %2174 = vdwg.mxu0
        %v2175 = vpack.c.bf16 %v2172, %v2172
        %v2176 = vld [vmem:[%s19] sm:$0xf]
        %v2177 = vld [vmem:[%s19 + $0x4] sm:$0xf]
        %v2178 = vld [vmem:[%s19 + $0x8] sm:$0xf]
        %v2179 = vld [vmem:[%s19 + $0xc] sm:$0xf]
        %v2180 = vld [vmem:[%s19 + $0x10] sm:$0xf]
        %v2181 = vld [vmem:[%s19 + $0x14] sm:$0xf]
        %v2182 = vld [vmem:[%s19 + $0x18] sm:$0xf]
        %v2183 = vld [vmem:[%s19 + $0x1c] sm:$0xf]
        %v2184 = vld [vmem:[%s19 + $0x20] sm:$0xf]
        %v2185 = vld [vmem:[%s19 + $0x24] sm:$0xf]
        %v2186 = vld [vmem:[%s19 + $0x28] sm:$0xf]
        %v2187 = vld [vmem:[%s19 + $0x2c] sm:$0xf]
        %v2188 = vld [vmem:[%s19 + $0x30] sm:$0xf]
        %v2189 = vld [vmem:[%s19 + $0x34] sm:$0xf]
        %v2190 = vld [vmem:[%s19 + $0x38] sm:$0xf]
        %v2191 = vld [vmem:[%s19 + $0x3c] sm:$0xf]
        %v2208 = vunpack.c.l.b16 %v2176
        %v2209 = vunpack.c.l.b16 %v2177
        %v2210 = vunpack.c.l.b16 %v2178
        %v2211 = vunpack.c.l.b16 %v2179
        %v2212 = vunpack.c.l.b16 %v2180
        %v2213 = vunpack.c.l.b16 %v2181
        %v2214 = vunpack.c.l.b16 %v2182
        %v2215 = vunpack.c.l.b16 %v2183
        %v2216 = vunpack.c.l.b16 %v2184
        %v2217 = vunpack.c.l.b16 %v2185
        %v2218 = vunpack.c.l.b16 %v2186
        %v2219 = vunpack.c.l.b16 %v2187
        %v2220 = vunpack.c.l.b16 %v2188
        %v2221 = vunpack.c.l.b16 %v2189
        %v2222 = vunpack.c.l.b16 %v2190
        %v2223 = vunpack.c.l.b16 %v2191
        %v2224 = vpack.c.b16 %v2209, %v2208
        %v2225 = vpack.c.b16 %v2211, %v2210
        %v2226 = vpack.c.b16 %v2213, %v2212
        %v2227 = vpack.c.b16 %v2215, %v2214
        %v2228 = vpack.c.b16 %v2217, %v2216
        %v2229 = vpack.c.b16 %v2219, %v2218
        %v2230 = vpack.c.b16 %v2221, %v2220
        %v2231 = vpack.c.b16 %v2223, %v2222
        %2240 = vmatpush.bf16.msra.mxu0 %v2231
        %2241 = vmatpush.bf16.msra.mxu0 %v2230
        %2242 = vmatpush.bf16.msra.mxu0 %v2229
        %2243 = vmatpush.bf16.msra.mxu0 %v2228
        %2244 = vmatpush.bf16.msra.mxu0 %v2227
        %2245 = vmatpush.bf16.msra.mxu0 %v2226
        %2246 = vmatpush.bf16.msra.mxu0 %v2225
        %2247 = vmatpush.bf16.msra.mxu0 %v2224
        %2248 = vmatmul.bf16.gmra.mxu0 %v2175
        %v2249 = vpop.f32.mrf.mxu0
        %v2250 = vadd.f32 0.0, %v2249
        %v2251 = vpop.f32.mrf.mxu0
        %2252 = vdwg.mxu0
        %v2253 = vadd.f32 %v2157, %v2250
        %v2254 = vld [vmem:[#allocation10] sm:$0x1]
        %v2256 = vperm.slane %v2254, 0
        %v2258 = vadd.f32 %v2253, %v2256
        %v2259 = vmax.f32 %v2258, 0.0
        %v2260 = vpack.c.bf16 %v2259, %v2259
        %v2261 = vld [vmem:[%s23] sm:$0x3]
        %v2263 = vsel %vm1864, %v2261, 0
        %v2266 = vsel %vm1868, %v2260, 0
        %2268 = vmatpush.bf16.msra.mxu0 0
        %2269 = vmatpush.bf16.msra.mxu0 0
        %2270 = vmatpush.bf16.msra.mxu0 0
        %2271 = vmatpush.bf16.msra.mxu0 0
        %2272 = vmatpush.bf16.msra.mxu0 0
        %2273 = vmatpush.bf16.msra.mxu0 0
        %2274 = vmatpush.bf16.msra.mxu0 0
        %2275 = vmatpush.bf16.msra.mxu0 %v2266
        %2276 = vmatmul.bf16.gmra.mxu0 %v2263
        %v2277 = vpop.f32.mrf.mxu0
        %v2278 = vadd.f32 0.0, %v2277
        %v2279 = vpop.f32.mrf.mxu0
        %2280 = vdwg.mxu0
        %v2281 = vpack.c.bf16 %v2278, %v2278
        %v2282 = vld [vmem:[#allocation11] sm:$0xf]
        %v2283 = vld [vmem:[#allocation11 + $0x4] sm:$0xf]
        %v2284 = vld [vmem:[#allocation11 + $0x8] sm:$0xf]
        %v2285 = vld [vmem:[#allocation11 + $0xc] sm:$0xf]
        %v2286 = vld [vmem:[#allocation11 + $0x10] sm:$0xf]
        %v2287 = vld [vmem:[#allocation11 + $0x14] sm:$0xf]
        %v2288 = vld [vmem:[#allocation11 + $0x18] sm:$0xf]
        %v2289 = vld [vmem:[#allocation11 + $0x1c] sm:$0xf]
        %v2290 = vld [vmem:[#allocation11 + $0x20] sm:$0xf]
        %v2291 = vld [vmem:[#allocation11 + $0x24] sm:$0xf]
        %v2292 = vld [vmem:[#allocation11 + $0x28] sm:$0xf]
        %v2293 = vld [vmem:[#allocation11 + $0x2c] sm:$0xf]
        %v2294 = vld [vmem:[#allocation11 + $0x30] sm:$0xf]
        %v2295 = vld [vmem:[#allocation11 + $0x34] sm:$0xf]
        %v2296 = vld [vmem:[#allocation11 + $0x38] sm:$0xf]
        %v2297 = vld [vmem:[#allocation11 + $0x3c] sm:$0xf]
        %s2298 = scalar_lea.vmem %s23, 2
        %v2299 = vld [vmem:[%s2298] sm:$0x3]
        %v2301 = vsel %vm1864, %v2299, 0
        %2303 = vmatpush.bf16.msra.mxu0 0
        %2304 = vmatpush.bf16.msra.mxu0 0
        %2305 = vmatpush.bf16.msra.mxu0 0
        %2306 = vmatpush.bf16.msra.mxu0 0
        %2307 = vmatpush.bf16.msra.mxu0 0
        %2308 = vmatpush.bf16.msra.mxu0 0
        %2309 = vmatpush.bf16.msra.mxu0 0
        %2310 = vmatpush.bf16.msra.mxu0 %v2266
        %2311 = vmatmul.bf16.gmra.mxu0 %v2301
        %v2312 = vpop.f32.mrf.mxu0
        %v2313 = vadd.f32 0.0, %v2312
        %v2314 = vpop.f32.mrf.mxu0
        %2315 = vdwg.mxu0
        %v2316 = vpack.c.bf16 %v2313, %v2313
        %s2317 = scalar_lea.vmem [#allocation11], 64
        %v2318 = vld [vmem:[%s2317] sm:$0xf]
        %v2319 = vld [vmem:[%s2317 + $0x4] sm:$0xf]
        %v2320 = vld [vmem:[%s2317 + $0x8] sm:$0xf]
        %v2321 = vld [vmem:[%s2317 + $0xc] sm:$0xf]
        %v2322 = vld [vmem:[%s2317 + $0x10] sm:$0xf]
        %v2323 = vld [vmem:[%s2317 + $0x14] sm:$0xf]
        %v2324 = vld [vmem:[%s2317 + $0x18] sm:$0xf]
        %v2325 = vld [vmem:[%s2317 + $0x1c] sm:$0xf]
        %v2326 = vld [vmem:[%s2317 + $0x20] sm:$0xf]
        %v2327 = vld [vmem:[%s2317 + $0x24] sm:$0xf]
        %v2328 = vld [vmem:[%s2317 + $0x28] sm:$0xf]
        %v2329 = vld [vmem:[%s2317 + $0x2c] sm:$0xf]
        %v2330 = vld [vmem:[%s2317 + $0x30] sm:$0xf]
        %v2331 = vld [vmem:[%s2317 + $0x34] sm:$0xf]
        %v2332 = vld [vmem:[%s2317 + $0x38] sm:$0xf]
        %v2333 = vld [vmem:[%s2317 + $0x3c] sm:$0xf]
        %v2350 = vunpack.c.l.b16 %v2318
        %v2351 = vunpack.c.l.b16 %v2319
        %v2352 = vunpack.c.l.b16 %v2320
        %v2353 = vunpack.c.l.b16 %v2321
        %v2354 = vunpack.c.l.b16 %v2322
        %v2355 = vunpack.c.l.b16 %v2323
        %v2356 = vunpack.c.l.b16 %v2324
        %v2357 = vunpack.c.l.b16 %v2325
        %v2358 = vunpack.c.l.b16 %v2326
        %v2359 = vunpack.c.l.b16 %v2327
        %v2360 = vunpack.c.l.b16 %v2328
        %v2361 = vunpack.c.l.b16 %v2329
        %v2362 = vunpack.c.l.b16 %v2330
        %v2363 = vunpack.c.l.b16 %v2331
        %v2364 = vunpack.c.l.b16 %v2332
        %v2365 = vunpack.c.l.b16 %v2333
        %v2366 = vpack.c.b16 %v2351, %v2350
        %v2367 = vpack.c.b16 %v2353, %v2352
        %v2368 = vpack.c.b16 %v2355, %v2354
        %v2369 = vpack.c.b16 %v2357, %v2356
        %v2370 = vpack.c.b16 %v2359, %v2358
        %v2371 = vpack.c.b16 %v2361, %v2360
        %v2372 = vpack.c.b16 %v2363, %v2362
        %v2373 = vpack.c.b16 %v2365, %v2364
        %2382 = vmatpush.bf16.msra.mxu0 %v2373
        %2383 = vmatpush.bf16.msra.mxu0 %v2372
        %2384 = vmatpush.bf16.msra.mxu0 %v2371
        %2385 = vmatpush.bf16.msra.mxu0 %v2370
        %2386 = vmatpush.bf16.msra.mxu0 %v2369
        %2387 = vmatpush.bf16.msra.mxu0 %v2368
        %2388 = vmatpush.bf16.msra.mxu0 %v2367
        %2389 = vmatpush.bf16.msra.mxu0 %v2366
        %2390 = vmatmul.bf16.gmra.mxu0 %v2316
        %v2391 = vpop.f32.mrf.mxu0
        %v2392 = vadd.f32 0.0, %v2391
        %v2393 = vpop.f32.mrf.mxu0
        %2394 = vdwg.mxu0
        %v2411 = vunpack.c.l.b16 %v2282
        %v2412 = vunpack.c.l.b16 %v2283
        %v2413 = vunpack.c.l.b16 %v2284
        %v2414 = vunpack.c.l.b16 %v2285
        %v2415 = vunpack.c.l.b16 %v2286
        %v2416 = vunpack.c.l.b16 %v2287
        %v2417 = vunpack.c.l.b16 %v2288
        %v2418 = vunpack.c.l.b16 %v2289
        %v2419 = vunpack.c.l.b16 %v2290
        %v2420 = vunpack.c.l.b16 %v2291
        %v2421 = vunpack.c.l.b16 %v2292
        %v2422 = vunpack.c.l.b16 %v2293
        %v2423 = vunpack.c.l.b16 %v2294
        %v2424 = vunpack.c.l.b16 %v2295
        %v2425 = vunpack.c.l.b16 %v2296
        %v2426 = vunpack.c.l.b16 %v2297
        %v2427 = vpack.c.b16 %v2412, %v2411
        %v2428 = vpack.c.b16 %v2414, %v2413
        %v2429 = vpack.c.b16 %v2416, %v2415
        %v2430 = vpack.c.b16 %v2418, %v2417
        %v2431 = vpack.c.b16 %v2420, %v2419
        %v2432 = vpack.c.b16 %v2422, %v2421
        %v2433 = vpack.c.b16 %v2424, %v2423
        %v2434 = vpack.c.b16 %v2426, %v2425
        %2443 = vmatpush.bf16.msra.mxu0 %v2434
        %2444 = vmatpush.bf16.msra.mxu0 %v2433
        %2445 = vmatpush.bf16.msra.mxu0 %v2432
        %2446 = vmatpush.bf16.msra.mxu0 %v2431
        %2447 = vmatpush.bf16.msra.mxu0 %v2430
        %2448 = vmatpush.bf16.msra.mxu0 %v2429
        %2449 = vmatpush.bf16.msra.mxu0 %v2428
        %2450 = vmatpush.bf16.msra.mxu0 %v2427
        %2451 = vmatmul.bf16.gmra.mxu0 %v2281
        %v2452 = vpop.f32.mrf.mxu0
        %v2453 = vadd.f32 %v2392, %v2452
        %v2454 = vpop.f32.mrf.mxu0
        %2455 = vdwg.mxu0
        %s2456 = scalar_lea.vmem %s23, 4
        %v2457 = vld [vmem:[%s2456] sm:$0x3]
        %v2459 = vsel %vm1864, %v2457, 0
        %2461 = vmatpush.bf16.msra.mxu0 0
        %2462 = vmatpush.bf16.msra.mxu0 0
        %2463 = vmatpush.bf16.msra.mxu0 0
        %2464 = vmatpush.bf16.msra.mxu0 0
        %2465 = vmatpush.bf16.msra.mxu0 0
        %2466 = vmatpush.bf16.msra.mxu0 0
        %2467 = vmatpush.bf16.msra.mxu0 0
        %2468 = vmatpush.bf16.msra.mxu0 %v2266
        %2469 = vmatmul.bf16.gmra.mxu0 %v2459
        %v2470 = vpop.f32.mrf.mxu0
        %v2471 = vadd.f32 0.0, %v2470
        %v2472 = vpop.f32.mrf.mxu0
        %2473 = vdwg.mxu0
        %v2474 = vpack.c.bf16 %v2471, %v2471
        %s2475 = scalar_lea.vmem [#allocation11], 128
        %v2476 = vld [vmem:[%s2475] sm:$0xf]
        %v2477 = vld [vmem:[%s2475 + $0x4] sm:$0xf]
        %v2478 = vld [vmem:[%s2475 + $0x8] sm:$0xf]
        %v2479 = vld [vmem:[%s2475 + $0xc] sm:$0xf]
        %v2480 = vld [vmem:[%s2475 + $0x10] sm:$0xf]
        %v2481 = vld [vmem:[%s2475 + $0x14] sm:$0xf]
        %v2482 = vld [vmem:[%s2475 + $0x18] sm:$0xf]
        %v2483 = vld [vmem:[%s2475 + $0x1c] sm:$0xf]
        %v2484 = vld [vmem:[%s2475 + $0x20] sm:$0xf]
        %v2485 = vld [vmem:[%s2475 + $0x24] sm:$0xf]
        %v2486 = vld [vmem:[%s2475 + $0x28] sm:$0xf]
        %v2487 = vld [vmem:[%s2475 + $0x2c] sm:$0xf]
        %v2488 = vld [vmem:[%s2475 + $0x30] sm:$0xf]
        %v2489 = vld [vmem:[%s2475 + $0x34] sm:$0xf]
        %v2490 = vld [vmem:[%s2475 + $0x38] sm:$0xf]
        %v2491 = vld [vmem:[%s2475 + $0x3c] sm:$0xf]
        %v2508 = vunpack.c.l.b16 %v2476
        %v2509 = vunpack.c.l.b16 %v2477
        %v2510 = vunpack.c.l.b16 %v2478
        %v2511 = vunpack.c.l.b16 %v2479
        %v2512 = vunpack.c.l.b16 %v2480
        %v2513 = vunpack.c.l.b16 %v2481
        %v2514 = vunpack.c.l.b16 %v2482
        %v2515 = vunpack.c.l.b16 %v2483
        %v2516 = vunpack.c.l.b16 %v2484
        %v2517 = vunpack.c.l.b16 %v2485
        %v2518 = vunpack.c.l.b16 %v2486
        %v2519 = vunpack.c.l.b16 %v2487
        %v2520 = vunpack.c.l.b16 %v2488
        %v2521 = vunpack.c.l.b16 %v2489
        %v2522 = vunpack.c.l.b16 %v2490
        %v2523 = vunpack.c.l.b16 %v2491
        %v2524 = vpack.c.b16 %v2509, %v2508
        %v2525 = vpack.c.b16 %v2511, %v2510
        %v2526 = vpack.c.b16 %v2513, %v2512
        %v2527 = vpack.c.b16 %v2515, %v2514
        %v2528 = vpack.c.b16 %v2517, %v2516
        %v2529 = vpack.c.b16 %v2519, %v2518
        %v2530 = vpack.c.b16 %v2521, %v2520
        %v2531 = vpack.c.b16 %v2523, %v2522
        %2540 = vmatpush.bf16.msra.mxu0 %v2531
        %2541 = vmatpush.bf16.msra.mxu0 %v2530
        %2542 = vmatpush.bf16.msra.mxu0 %v2529
        %2543 = vmatpush.bf16.msra.mxu0 %v2528
        %2544 = vmatpush.bf16.msra.mxu0 %v2527
        %2545 = vmatpush.bf16.msra.mxu0 %v2526
        %2546 = vmatpush.bf16.msra.mxu0 %v2525
        %2547 = vmatpush.bf16.msra.mxu0 %v2524
        %2548 = vmatmul.bf16.gmra.mxu0 %v2474
        %v2549 = vpop.f32.mrf.mxu0
        %v2550 = vadd.f32 0.0, %v2549
        %v2551 = vpop.f32.mrf.mxu0
        %2552 = vdwg.mxu0
        %v2553 = vadd.f32 %v2453, %v2550
        %v2554 = vld [vmem:[%s27] sm:$0x1]
        %v2556 = vperm.slane %v2554, 0
        %v2558 = vadd.f32 %v2553, %v2556
        %v2559 = vmax.f32 %v2558, 0.0
        %v2560 = vpack.c.bf16 %v2559, %v2559
        %v2561 = vld [vmem:[%s29] sm:$0x3]
        %vm2562 = vcmask 31744
        %v2564 = vsel %vm2562, %v2561, 0
        %vm2566 = vcmask 1041408
        %v2568 = vsel %vm2566, %v2560, 0
        %2570 = vmatpush.bf16.msra.mxu0 0
        %2571 = vmatpush.bf16.msra.mxu0 0
        %2572 = vmatpush.bf16.msra.mxu0 0
        %2573 = vmatpush.bf16.msra.mxu0 0
        %2574 = vmatpush.bf16.msra.mxu0 0
        %2575 = vmatpush.bf16.msra.mxu0 0
        %2576 = vmatpush.bf16.msra.mxu0 0
        %2577 = vmatpush.bf16.msra.mxu0 %v2568
        %2578 = vmatmul.bf16.gmra.mxu0 %v2564
        %v2579 = vpop.f32.mrf.mxu0
        %v2580 = vadd.f32 0.0, %v2579
        %v2581 = vpop.f32.mrf.mxu0
        %2582 = vdwg.mxu0
        %v2583 = vpack.c.bf16 %v2580, %v2580
        %v2584 = vld [vmem:[#allocation13] sm:$0xf]
        %v2585 = vld [vmem:[#allocation13 + $0x4] sm:$0xf]
        %v2586 = vld [vmem:[#allocation13 + $0x8] sm:$0xf]
        %v2587 = vld [vmem:[#allocation13 + $0xc] sm:$0xf]
        %v2588 = vld [vmem:[#allocation13 + $0x10] sm:$0xf]
        %v2589 = vld [vmem:[#allocation13 + $0x14] sm:$0xf]
        %v2590 = vld [vmem:[#allocation13 + $0x18] sm:$0xf]
        %v2591 = vld [vmem:[#allocation13 + $0x1c] sm:$0xf]
        %v2592 = vld [vmem:[#allocation13 + $0x20] sm:$0xf]
        %v2593 = vld [vmem:[#allocation13 + $0x24] sm:$0xf]
        %v2594 = vld [vmem:[#allocation13 + $0x28] sm:$0xf]
        %v2595 = vld [vmem:[#allocation13 + $0x2c] sm:$0xf]
        %v2596 = vld [vmem:[#allocation13 + $0x30] sm:$0xf]
        %v2597 = vld [vmem:[#allocation13 + $0x34] sm:$0xf]
        %v2598 = vld [vmem:[#allocation13 + $0x38] sm:$0xf]
        %v2599 = vld [vmem:[#allocation13 + $0x3c] sm:$0xf]
        %s2600 = scalar_lea.vmem %s29, 2
        %v2601 = vld [vmem:[%s2600] sm:$0x3]
        %v2603 = vsel %vm2562, %v2601, 0
        %2605 = vmatpush.bf16.msra.mxu0 0
        %2606 = vmatpush.bf16.msra.mxu0 0
        %2607 = vmatpush.bf16.msra.mxu0 0
        %2608 = vmatpush.bf16.msra.mxu0 0
        %2609 = vmatpush.bf16.msra.mxu0 0
        %2610 = vmatpush.bf16.msra.mxu0 0
        %2611 = vmatpush.bf16.msra.mxu0 0
        %2612 = vmatpush.bf16.msra.mxu0 %v2568
        %2613 = vmatmul.bf16.gmra.mxu0 %v2603
        %v2614 = vpop.f32.mrf.mxu0
        %v2615 = vadd.f32 0.0, %v2614
        %v2616 = vpop.f32.mrf.mxu0
        %2617 = vdwg.mxu0
        %v2618 = vpack.c.bf16 %v2615, %v2615
        %s2619 = scalar_lea.vmem [#allocation13], 64
        %v2620 = vld [vmem:[%s2619] sm:$0xf]
        %v2621 = vld [vmem:[%s2619 + $0x4] sm:$0xf]
        %v2622 = vld [vmem:[%s2619 + $0x8] sm:$0xf]
        %v2623 = vld [vmem:[%s2619 + $0xc] sm:$0xf]
        %v2624 = vld [vmem:[%s2619 + $0x10] sm:$0xf]
        %v2625 = vld [vmem:[%s2619 + $0x14] sm:$0xf]
        %v2626 = vld [vmem:[%s2619 + $0x18] sm:$0xf]
        %v2627 = vld [vmem:[%s2619 + $0x1c] sm:$0xf]
        %v2628 = vld [vmem:[%s2619 + $0x20] sm:$0xf]
        %v2629 = vld [vmem:[%s2619 + $0x24] sm:$0xf]
        %v2630 = vld [vmem:[%s2619 + $0x28] sm:$0xf]
        %v2631 = vld [vmem:[%s2619 + $0x2c] sm:$0xf]
        %v2632 = vld [vmem:[%s2619 + $0x30] sm:$0xf]
        %v2633 = vld [vmem:[%s2619 + $0x34] sm:$0xf]
        %v2634 = vld [vmem:[%s2619 + $0x38] sm:$0xf]
        %v2635 = vld [vmem:[%s2619 + $0x3c] sm:$0xf]
        %v2652 = vunpack.c.l.b16 %v2620
        %v2653 = vunpack.c.l.b16 %v2621
        %v2654 = vunpack.c.l.b16 %v2622
        %v2655 = vunpack.c.l.b16 %v2623
        %v2656 = vunpack.c.l.b16 %v2624
        %v2657 = vunpack.c.l.b16 %v2625
        %v2658 = vunpack.c.l.b16 %v2626
        %v2659 = vunpack.c.l.b16 %v2627
        %v2660 = vunpack.c.l.b16 %v2628
        %v2661 = vunpack.c.l.b16 %v2629
        %v2662 = vunpack.c.l.b16 %v2630
        %v2663 = vunpack.c.l.b16 %v2631
        %v2664 = vunpack.c.l.b16 %v2632
        %v2665 = vunpack.c.l.b16 %v2633
        %v2666 = vunpack.c.l.b16 %v2634
        %v2667 = vunpack.c.l.b16 %v2635
        %v2668 = vpack.c.b16 %v2653, %v2652
        %v2669 = vpack.c.b16 %v2655, %v2654
        %v2670 = vpack.c.b16 %v2657, %v2656
        %v2671 = vpack.c.b16 %v2659, %v2658
        %v2672 = vpack.c.b16 %v2661, %v2660
        %v2673 = vpack.c.b16 %v2663, %v2662
        %v2674 = vpack.c.b16 %v2665, %v2664
        %v2675 = vpack.c.b16 %v2667, %v2666
        %2684 = vmatpush.bf16.msra.mxu0 %v2675
        %2685 = vmatpush.bf16.msra.mxu0 %v2674
        %2686 = vmatpush.bf16.msra.mxu0 %v2673
        %2687 = vmatpush.bf16.msra.mxu0 %v2672
        %2688 = vmatpush.bf16.msra.mxu0 %v2671
        %2689 = vmatpush.bf16.msra.mxu0 %v2670
        %2690 = vmatpush.bf16.msra.mxu0 %v2669
        %2691 = vmatpush.bf16.msra.mxu0 %v2668
        %2692 = vmatmul.bf16.gmra.mxu0 %v2618
        %v2693 = vpop.f32.mrf.mxu0
        %v2694 = vadd.f32 0.0, %v2693
        %v2695 = vpop.f32.mrf.mxu0
        %2696 = vdwg.mxu0
        %v2713 = vunpack.c.l.b16 %v2584
        %v2714 = vunpack.c.l.b16 %v2585
        %v2715 = vunpack.c.l.b16 %v2586
        %v2716 = vunpack.c.l.b16 %v2587
        %v2717 = vunpack.c.l.b16 %v2588
        %v2718 = vunpack.c.l.b16 %v2589
        %v2719 = vunpack.c.l.b16 %v2590
        %v2720 = vunpack.c.l.b16 %v2591
        %v2721 = vunpack.c.l.b16 %v2592
        %v2722 = vunpack.c.l.b16 %v2593
        %v2723 = vunpack.c.l.b16 %v2594
        %v2724 = vunpack.c.l.b16 %v2595
        %v2725 = vunpack.c.l.b16 %v2596
        %v2726 = vunpack.c.l.b16 %v2597
        %v2727 = vunpack.c.l.b16 %v2598
        %v2728 = vunpack.c.l.b16 %v2599
        %v2729 = vpack.c.b16 %v2714, %v2713
        %v2730 = vpack.c.b16 %v2716, %v2715
        %v2731 = vpack.c.b16 %v2718, %v2717
        %v2732 = vpack.c.b16 %v2720, %v2719
        %v2733 = vpack.c.b16 %v2722, %v2721
        %v2734 = vpack.c.b16 %v2724, %v2723
        %v2735 = vpack.c.b16 %v2726, %v2725
        %v2736 = vpack.c.b16 %v2728, %v2727
        %2745 = vmatpush.bf16.msra.mxu0 %v2736
        %2746 = vmatpush.bf16.msra.mxu0 %v2735
        %2747 = vmatpush.bf16.msra.mxu0 %v2734
        %2748 = vmatpush.bf16.msra.mxu0 %v2733
        %2749 = vmatpush.bf16.msra.mxu0 %v2732
        %2750 = vmatpush.bf16.msra.mxu0 %v2731
        %2751 = vmatpush.bf16.msra.mxu0 %v2730
        %2752 = vmatpush.bf16.msra.mxu0 %v2729
        %2753 = vmatmul.bf16.gmra.mxu0 %v2583
        %v2754 = vpop.f32.mrf.mxu0
        %v2755 = vadd.f32 %v2694, %v2754
        %v2756 = vpop.f32.mrf.mxu0
        %2757 = vdwg.mxu0
        %s2758 = scalar_lea.vmem %s29, 4
        %v2759 = vld [vmem:[%s2758] sm:$0x3]
        %v2761 = vsel %vm2562, %v2759, 0
        %2763 = vmatpush.bf16.msra.mxu0 0
        %2764 = vmatpush.bf16.msra.mxu0 0
        %2765 = vmatpush.bf16.msra.mxu0 0
        %2766 = vmatpush.bf16.msra.mxu0 0
        %2767 = vmatpush.bf16.msra.mxu0 0
        %2768 = vmatpush.bf16.msra.mxu0 0
        %2769 = vmatpush.bf16.msra.mxu0 0
        %2770 = vmatpush.bf16.msra.mxu0 %v2568
        %2771 = vmatmul.bf16.gmra.mxu0 %v2761
        %v2772 = vpop.f32.mrf.mxu0
        %v2773 = vadd.f32 0.0, %v2772
        %v2774 = vpop.f32.mrf.mxu0
        %2775 = vdwg.mxu0
        %v2776 = vpack.c.bf16 %v2773, %v2773
        %s2777 = scalar_lea.vmem [#allocation13], 128
        %v2778 = vld [vmem:[%s2777] sm:$0xf]
        %v2779 = vld [vmem:[%s2777 + $0x4] sm:$0xf]
        %v2780 = vld [vmem:[%s2777 + $0x8] sm:$0xf]
        %v2781 = vld [vmem:[%s2777 + $0xc] sm:$0xf]
        %v2782 = vld [vmem:[%s2777 + $0x10] sm:$0xf]
        %v2783 = vld [vmem:[%s2777 + $0x14] sm:$0xf]
        %v2784 = vld [vmem:[%s2777 + $0x18] sm:$0xf]
        %v2785 = vld [vmem:[%s2777 + $0x1c] sm:$0xf]
        %v2786 = vld [vmem:[%s2777 + $0x20] sm:$0xf]
        %v2787 = vld [vmem:[%s2777 + $0x24] sm:$0xf]
        %v2788 = vld [vmem:[%s2777 + $0x28] sm:$0xf]
        %v2789 = vld [vmem:[%s2777 + $0x2c] sm:$0xf]
        %v2790 = vld [vmem:[%s2777 + $0x30] sm:$0xf]
        %v2791 = vld [vmem:[%s2777 + $0x34] sm:$0xf]
        %v2792 = vld [vmem:[%s2777 + $0x38] sm:$0xf]
        %v2793 = vld [vmem:[%s2777 + $0x3c] sm:$0xf]
        %v2810 = vunpack.c.l.b16 %v2778
        %v2811 = vunpack.c.l.b16 %v2779
        %v2812 = vunpack.c.l.b16 %v2780
        %v2813 = vunpack.c.l.b16 %v2781
        %v2814 = vunpack.c.l.b16 %v2782
        %v2815 = vunpack.c.l.b16 %v2783
        %v2816 = vunpack.c.l.b16 %v2784
        %v2817 = vunpack.c.l.b16 %v2785
        %v2818 = vunpack.c.l.b16 %v2786
        %v2819 = vunpack.c.l.b16 %v2787
        %v2820 = vunpack.c.l.b16 %v2788
        %v2821 = vunpack.c.l.b16 %v2789
        %v2822 = vunpack.c.l.b16 %v2790
        %v2823 = vunpack.c.l.b16 %v2791
        %v2824 = vunpack.c.l.b16 %v2792
        %v2825 = vunpack.c.l.b16 %v2793
        %v2826 = vpack.c.b16 %v2811, %v2810
        %v2827 = vpack.c.b16 %v2813, %v2812
        %v2828 = vpack.c.b16 %v2815, %v2814
        %v2829 = vpack.c.b16 %v2817, %v2816
        %v2830 = vpack.c.b16 %v2819, %v2818
        %v2831 = vpack.c.b16 %v2821, %v2820
        %v2832 = vpack.c.b16 %v2823, %v2822
        %v2833 = vpack.c.b16 %v2825, %v2824
        %2842 = vmatpush.bf16.msra.mxu0 %v2833
        %2843 = vmatpush.bf16.msra.mxu0 %v2832
        %2844 = vmatpush.bf16.msra.mxu0 %v2831
        %2845 = vmatpush.bf16.msra.mxu0 %v2830
        %2846 = vmatpush.bf16.msra.mxu0 %v2829
        %2847 = vmatpush.bf16.msra.mxu0 %v2828
        %2848 = vmatpush.bf16.msra.mxu0 %v2827
        %2849 = vmatpush.bf16.msra.mxu0 %v2826
        %2850 = vmatmul.bf16.gmra.mxu0 %v2776
        %v2851 = vpop.f32.mrf.mxu0
        %v2852 = vadd.f32 0.0, %v2851
        %v2853 = vpop.f32.mrf.mxu0
        %2854 = vdwg.mxu0
        %v2855 = vadd.f32 %v2755, %v2852
        %v2856 = vld [vmem:[#allocation14] sm:$0x3]
        %v2858 = vsel %vm1864, %v2856, 0
        %2860 = vmatpush.bf16.msra.mxu0 0
        %2861 = vmatpush.bf16.msra.mxu0 0
        %2862 = vmatpush.bf16.msra.mxu0 0
        %2863 = vmatpush.bf16.msra.mxu0 0
        %2864 = vmatpush.bf16.msra.mxu0 0
        %2865 = vmatpush.bf16.msra.mxu0 0
        %2866 = vmatpush.bf16.msra.mxu0 0
        %2867 = vmatpush.bf16.msra.mxu0 %v2266
        %2868 = vmatmul.bf16.gmra.mxu0 %v2858
        %v2869 = vpop.f32.mrf.mxu0
        %v2870 = vadd.f32 0.0, %v2869
        %v2871 = vpop.f32.mrf.mxu0
        %2872 = vdwg.mxu0
        %v2873 = vpack.c.bf16 %v2870, %v2870
        %v2874 = vld [vmem:[#allocation16] sm:$0xf]
        %v2875 = vld [vmem:[#allocation16 + $0x4] sm:$0xf]
        %v2876 = vld [vmem:[#allocation16 + $0x8] sm:$0xf]
        %v2877 = vld [vmem:[#allocation16 + $0xc] sm:$0xf]
        %v2878 = vld [vmem:[#allocation16 + $0x10] sm:$0xf]
        %v2879 = vld [vmem:[#allocation16 + $0x14] sm:$0xf]
        %v2880 = vld [vmem:[#allocation16 + $0x18] sm:$0xf]
        %v2881 = vld [vmem:[#allocation16 + $0x1c] sm:$0xf]
        %v2882 = vld [vmem:[#allocation16 + $0x20] sm:$0xf]
        %v2883 = vld [vmem:[#allocation16 + $0x24] sm:$0xf]
        %v2884 = vld [vmem:[#allocation16 + $0x28] sm:$0xf]
        %v2885 = vld [vmem:[#allocation16 + $0x2c] sm:$0xf]
        %v2886 = vld [vmem:[#allocation16 + $0x30] sm:$0xf]
        %v2887 = vld [vmem:[#allocation16 + $0x34] sm:$0xf]
        %v2888 = vld [vmem:[#allocation16 + $0x38] sm:$0xf]
        %v2889 = vld [vmem:[#allocation16 + $0x3c] sm:$0xf]
        %v2906 = vunpack.c.l.b16 %v2874
        %v2907 = vunpack.c.l.b16 %v2875
        %v2908 = vunpack.c.l.b16 %v2876
        %v2909 = vunpack.c.l.b16 %v2877
        %v2910 = vunpack.c.l.b16 %v2878
        %v2911 = vunpack.c.l.b16 %v2879
        %v2912 = vunpack.c.l.b16 %v2880
        %v2913 = vunpack.c.l.b16 %v2881
        %v2914 = vunpack.c.l.b16 %v2882
        %v2915 = vunpack.c.l.b16 %v2883
        %v2916 = vunpack.c.l.b16 %v2884
        %v2917 = vunpack.c.l.b16 %v2885
        %v2918 = vunpack.c.l.b16 %v2886
        %v2919 = vunpack.c.l.b16 %v2887
        %v2920 = vunpack.c.l.b16 %v2888
        %v2921 = vunpack.c.l.b16 %v2889
        %v2922 = vpack.c.b16 %v2907, %v2906
        %v2923 = vpack.c.b16 %v2909, %v2908
        %v2924 = vpack.c.b16 %v2911, %v2910
        %v2925 = vpack.c.b16 %v2913, %v2912
        %v2926 = vpack.c.b16 %v2915, %v2914
        %v2927 = vpack.c.b16 %v2917, %v2916
        %v2928 = vpack.c.b16 %v2919, %v2918
        %v2929 = vpack.c.b16 %v2921, %v2920
        %2938 = vmatpush.bf16.msra.mxu0 %v2929
        %2939 = vmatpush.bf16.msra.mxu0 %v2928
        %2940 = vmatpush.bf16.msra.mxu0 %v2927
        %2941 = vmatpush.bf16.msra.mxu0 %v2926
        %2942 = vmatpush.bf16.msra.mxu0 %v2925
        %2943 = vmatpush.bf16.msra.mxu0 %v2924
        %2944 = vmatpush.bf16.msra.mxu0 %v2923
        %2945 = vmatpush.bf16.msra.mxu0 %v2922
        %2946 = vmatmul.bf16.gmra.mxu0 %v2873
        %v2947 = vpop.f32.mrf.mxu0
        %v2948 = vadd.f32 0.0, %v2947
        %v2949 = vpop.f32.mrf.mxu0
        %2950 = vdwg.mxu0
        %v2951 = vadd.f32 %v2855, %v2948
        %v2952 = vld [vmem:[#allocation17] sm:$0x1]
        %v2954 = vperm.slane %v2952, 0
        %v2956 = vadd.f32 %v2951, %v2954
        %v2957 = vmax.f32 %v2956, 0.0
        %v2958 = vpack.c.bf16 %v2957, %v2957
        %v2959 = vld [vmem:[#allocation19] sm:$0x1]
        %v2961 = vsel %vm2562, %v2959, 0
        %v2964 = vsel %vm2566, %v2958, 0
        %2966 = vmatpush.bf16.msra.mxu0 0
        %2967 = vmatpush.bf16.msra.mxu0 0
        %2968 = vmatpush.bf16.msra.mxu0 0
        %2969 = vmatpush.bf16.msra.mxu0 0
        %2970 = vmatpush.bf16.msra.mxu0 0
        %2971 = vmatpush.bf16.msra.mxu0 0
        %2972 = vmatpush.bf16.msra.mxu0 0
        %2973 = vmatpush.bf16.msra.mxu0 %v2964
        %2974 = vmatmul.bf16.gmra.mxu0 %v2961
        %v2975 = vpop.f32.mrf.mxu0
        %v2976 = vadd.f32 0.0, %v2975
        %v2977 = vpop.f32.mrf.mxu0
        %2978 = vdwg.mxu0
        %v2979 = vpack.c.bf16 %v2976, %v2976
        %v2980 = vld [vmem:[#allocation20] sm:$0xf]
        %v2981 = vld [vmem:[#allocation20 + $0x4] sm:$0xf]
        %v2982 = vld [vmem:[#allocation20 + $0x8] sm:$0xf]
        %v2983 = vld [vmem:[#allocation20 + $0xc] sm:$0xf]
        %v2984 = vld [vmem:[#allocation20 + $0x10] sm:$0xf]
        %v2985 = vld [vmem:[#allocation20 + $0x14] sm:$0xf]
        %v2986 = vld [vmem:[#allocation20 + $0x18] sm:$0xf]
        %v2987 = vld [vmem:[#allocation20 + $0x1c] sm:$0xf]
        %v2988 = vld [vmem:[#allocation20 + $0x20] sm:$0xf]
        %v2989 = vld [vmem:[#allocation20 + $0x24] sm:$0xf]
        %v2990 = vld [vmem:[#allocation20 + $0x28] sm:$0xf]
        %v2991 = vld [vmem:[#allocation20 + $0x2c] sm:$0xf]
        %v2992 = vld [vmem:[#allocation20 + $0x30] sm:$0xf]
        %v2993 = vld [vmem:[#allocation20 + $0x34] sm:$0xf]
        %v2994 = vld [vmem:[#allocation20 + $0x38] sm:$0xf]
        %v2995 = vld [vmem:[#allocation20 + $0x3c] sm:$0xf]
        %s2996 = scalar_lea.vmem [#allocation19], 1
        %v2997 = vld [vmem:[%s2996] sm:$0x1]
        %v2999 = vsel %vm2562, %v2997, 0
        %3001 = vmatpush.bf16.msra.mxu0 0
        %3002 = vmatpush.bf16.msra.mxu0 0
        %3003 = vmatpush.bf16.msra.mxu0 0
        %3004 = vmatpush.bf16.msra.mxu0 0
        %3005 = vmatpush.bf16.msra.mxu0 0
        %3006 = vmatpush.bf16.msra.mxu0 0
        %3007 = vmatpush.bf16.msra.mxu0 0
        %3008 = vmatpush.bf16.msra.mxu0 %v2964
        %3009 = vmatmul.bf16.gmra.mxu0 %v2999
        %v3010 = vpop.f32.mrf.mxu0
        %v3011 = vadd.f32 0.0, %v3010
        %v3012 = vpop.f32.mrf.mxu0
        %3013 = vdwg.mxu0
        %v3014 = vpack.c.bf16 %v3011, %v3011
        %s3015 = scalar_lea.vmem [#allocation20], 64
        %v3016 = vld [vmem:[%s3015] sm:$0xf]
        %v3017 = vld [vmem:[%s3015 + $0x4] sm:$0xf]
        %v3018 = vld [vmem:[%s3015 + $0x8] sm:$0xf]
        %v3019 = vld [vmem:[%s3015 + $0xc] sm:$0xf]
        %v3020 = vld [vmem:[%s3015 + $0x10] sm:$0xf]
        %v3021 = vld [vmem:[%s3015 + $0x14] sm:$0xf]
        %v3022 = vld [vmem:[%s3015 + $0x18] sm:$0xf]
        %v3023 = vld [vmem:[%s3015 + $0x1c] sm:$0xf]
        %v3024 = vld [vmem:[%s3015 + $0x20] sm:$0xf]
        %v3025 = vld [vmem:[%s3015 + $0x24] sm:$0xf]
        %v3026 = vld [vmem:[%s3015 + $0x28] sm:$0xf]
        %v3027 = vld [vmem:[%s3015 + $0x2c] sm:$0xf]
        %v3028 = vld [vmem:[%s3015 + $0x30] sm:$0xf]
        %v3029 = vld [vmem:[%s3015 + $0x34] sm:$0xf]
        %v3030 = vld [vmem:[%s3015 + $0x38] sm:$0xf]
        %v3031 = vld [vmem:[%s3015 + $0x3c] sm:$0xf]
        %v3048 = vunpack.c.l.b16 %v3016
        %v3049 = vunpack.c.l.b16 %v3017
        %v3050 = vunpack.c.l.b16 %v3018
        %v3051 = vunpack.c.l.b16 %v3019
        %v3052 = vunpack.c.l.b16 %v3020
        %v3053 = vunpack.c.l.b16 %v3021
        %v3054 = vunpack.c.l.b16 %v3022
        %v3055 = vunpack.c.l.b16 %v3023
        %v3056 = vunpack.c.l.b16 %v3024
        %v3057 = vunpack.c.l.b16 %v3025
        %v3058 = vunpack.c.l.b16 %v3026
        %v3059 = vunpack.c.l.b16 %v3027
        %v3060 = vunpack.c.l.b16 %v3028
        %v3061 = vunpack.c.l.b16 %v3029
        %v3062 = vunpack.c.l.b16 %v3030
        %v3063 = vunpack.c.l.b16 %v3031
        %v3064 = vpack.c.b16 %v3049, %v3048
        %v3065 = vpack.c.b16 %v3051, %v3050
        %v3066 = vpack.c.b16 %v3053, %v3052
        %v3067 = vpack.c.b16 %v3055, %v3054
        %v3068 = vpack.c.b16 %v3057, %v3056
        %v3069 = vpack.c.b16 %v3059, %v3058
        %v3070 = vpack.c.b16 %v3061, %v3060
        %v3071 = vpack.c.b16 %v3063, %v3062
        %3080 = vmatpush.bf16.msra.mxu0 %v3071
        %3081 = vmatpush.bf16.msra.mxu0 %v3070
        %3082 = vmatpush.bf16.msra.mxu0 %v3069
        %3083 = vmatpush.bf16.msra.mxu0 %v3068
        %3084 = vmatpush.bf16.msra.mxu0 %v3067
        %3085 = vmatpush.bf16.msra.mxu0 %v3066
        %3086 = vmatpush.bf16.msra.mxu0 %v3065
        %3087 = vmatpush.bf16.msra.mxu0 %v3064
        %3088 = vmatmul.bf16.gmra.mxu0 %v3014
        %v3089 = vpop.f32.mrf.mxu0
        %v3090 = vadd.f32 0.0, %v3089
        %v3091 = vpop.f32.mrf.mxu0
        %3092 = vdwg.mxu0
        %v3109 = vunpack.c.l.b16 %v2980
        %v3110 = vunpack.c.l.b16 %v2981
        %v3111 = vunpack.c.l.b16 %v2982
        %v3112 = vunpack.c.l.b16 %v2983
        %v3113 = vunpack.c.l.b16 %v2984
        %v3114 = vunpack.c.l.b16 %v2985
        %v3115 = vunpack.c.l.b16 %v2986
        %v3116 = vunpack.c.l.b16 %v2987
        %v3117 = vunpack.c.l.b16 %v2988
        %v3118 = vunpack.c.l.b16 %v2989
        %v3119 = vunpack.c.l.b16 %v2990
        %v3120 = vunpack.c.l.b16 %v2991
        %v3121 = vunpack.c.l.b16 %v2992
        %v3122 = vunpack.c.l.b16 %v2993
        %v3123 = vunpack.c.l.b16 %v2994
        %v3124 = vunpack.c.l.b16 %v2995
        %v3125 = vpack.c.b16 %v3110, %v3109
        %v3126 = vpack.c.b16 %v3112, %v3111
        %v3127 = vpack.c.b16 %v3114, %v3113
        %v3128 = vpack.c.b16 %v3116, %v3115
        %v3129 = vpack.c.b16 %v3118, %v3117
        %v3130 = vpack.c.b16 %v3120, %v3119
        %v3131 = vpack.c.b16 %v3122, %v3121
        %v3132 = vpack.c.b16 %v3124, %v3123
        %3141 = vmatpush.bf16.msra.mxu0 %v3132
        %3142 = vmatpush.bf16.msra.mxu0 %v3131
        %3143 = vmatpush.bf16.msra.mxu0 %v3130
        %3144 = vmatpush.bf16.msra.mxu0 %v3129
        %3145 = vmatpush.bf16.msra.mxu0 %v3128
        %3146 = vmatpush.bf16.msra.mxu0 %v3127
        %3147 = vmatpush.bf16.msra.mxu0 %v3126
        %3148 = vmatpush.bf16.msra.mxu0 %v3125
        %3149 = vmatmul.bf16.gmra.mxu0 %v2979
        %v3150 = vpop.f32.mrf.mxu0
        %v3151 = vadd.f32 %v3090, %v3150
        %v3152 = vpop.f32.mrf.mxu0
        %3153 = vdwg.mxu0
        %s3154 = scalar_lea.vmem [#allocation19], 2
        %v3155 = vld [vmem:[%s3154] sm:$0x1]
        %v3157 = vsel %vm2562, %v3155, 0
        %3159 = vmatpush.bf16.msra.mxu0 0
        %3160 = vmatpush.bf16.msra.mxu0 0
        %3161 = vmatpush.bf16.msra.mxu0 0
        %3162 = vmatpush.bf16.msra.mxu0 0
        %3163 = vmatpush.bf16.msra.mxu0 0
        %3164 = vmatpush.bf16.msra.mxu0 0
        %3165 = vmatpush.bf16.msra.mxu0 0
        %3166 = vmatpush.bf16.msra.mxu0 %v2964
        %3167 = vmatmul.bf16.gmra.mxu0 %v3157
        %v3168 = vpop.f32.mrf.mxu0
        %v3169 = vadd.f32 0.0, %v3168
        %v3170 = vpop.f32.mrf.mxu0
        %3171 = vdwg.mxu0
        %v3172 = vpack.c.bf16 %v3169, %v3169
        %s3173 = scalar_lea.vmem [#allocation20], 128
        %v3174 = vld [vmem:[%s3173] sm:$0xf]
        %v3175 = vld [vmem:[%s3173 + $0x4] sm:$0xf]
        %v3176 = vld [vmem:[%s3173 + $0x8] sm:$0xf]
        %v3177 = vld [vmem:[%s3173 + $0xc] sm:$0xf]
        %v3178 = vld [vmem:[%s3173 + $0x10] sm:$0xf]
        %v3179 = vld [vmem:[%s3173 + $0x14] sm:$0xf]
        %v3180 = vld [vmem:[%s3173 + $0x18] sm:$0xf]
        %v3181 = vld [vmem:[%s3173 + $0x1c] sm:$0xf]
        %v3182 = vld [vmem:[%s3173 + $0x20] sm:$0xf]
        %v3183 = vld [vmem:[%s3173 + $0x24] sm:$0xf]
        %v3184 = vld [vmem:[%s3173 + $0x28] sm:$0xf]
        %v3185 = vld [vmem:[%s3173 + $0x2c] sm:$0xf]
        %v3186 = vld [vmem:[%s3173 + $0x30] sm:$0xf]
        %v3187 = vld [vmem:[%s3173 + $0x34] sm:$0xf]
        %v3188 = vld [vmem:[%s3173 + $0x38] sm:$0xf]
        %v3189 = vld [vmem:[%s3173 + $0x3c] sm:$0xf]
        %v3206 = vunpack.c.l.b16 %v3174
        %v3207 = vunpack.c.l.b16 %v3175
        %v3208 = vunpack.c.l.b16 %v3176
        %v3209 = vunpack.c.l.b16 %v3177
        %v3210 = vunpack.c.l.b16 %v3178
        %v3211 = vunpack.c.l.b16 %v3179
        %v3212 = vunpack.c.l.b16 %v3180
        %v3213 = vunpack.c.l.b16 %v3181
        %v3214 = vunpack.c.l.b16 %v3182
        %v3215 = vunpack.c.l.b16 %v3183
        %v3216 = vunpack.c.l.b16 %v3184
        %v3217 = vunpack.c.l.b16 %v3185
        %v3218 = vunpack.c.l.b16 %v3186
        %v3219 = vunpack.c.l.b16 %v3187
        %v3220 = vunpack.c.l.b16 %v3188
        %v3221 = vunpack.c.l.b16 %v3189
        %v3222 = vpack.c.b16 %v3207, %v3206
        %v3223 = vpack.c.b16 %v3209, %v3208
        %v3224 = vpack.c.b16 %v3211, %v3210
        %v3225 = vpack.c.b16 %v3213, %v3212
        %v3226 = vpack.c.b16 %v3215, %v3214
        %v3227 = vpack.c.b16 %v3217, %v3216
        %v3228 = vpack.c.b16 %v3219, %v3218
        %v3229 = vpack.c.b16 %v3221, %v3220
        %3238 = vmatpush.bf16.msra.mxu0 %v3229
        %3239 = vmatpush.bf16.msra.mxu0 %v3228
        %3240 = vmatpush.bf16.msra.mxu0 %v3227
        %3241 = vmatpush.bf16.msra.mxu0 %v3226
        %3242 = vmatpush.bf16.msra.mxu0 %v3225
        %3243 = vmatpush.bf16.msra.mxu0 %v3224
        %3244 = vmatpush.bf16.msra.mxu0 %v3223
        %3245 = vmatpush.bf16.msra.mxu0 %v3222
        %3246 = vmatmul.bf16.gmra.mxu0 %v3172
        %v3247 = vpop.f32.mrf.mxu0
        %v3248 = vadd.f32 0.0, %v3247
        %v3249 = vpop.f32.mrf.mxu0
        %3250 = vdwg.mxu0
        %v3251 = vadd.f32 %v3151, %v3248
        %v3252 = vld [vmem:[#allocation22] sm:$0x1]
        %v3254 = vperm.slane %v3252, 0
        %v3256 = vadd.f32 %v3251, %v3254
        %v3257 = vmax.f32 %v3256, 0.0
        %v3258 = vpack.c.bf16 %v3257, %v3257
        %v3259 = vld [vmem:[%s45] sm:$0x1]
        %vm3260 = vcmask 15360
        %v3262 = vsel %vm3260, %v3259, 0
        %vm3264 = vcmask 1040384
        %v3266 = vsel %vm3264, %v3258, 0
        %3268 = vmatpush.bf16.msra.mxu0 0
        %3269 = vmatpush.bf16.msra.mxu0 0
        %3270 = vmatpush.bf16.msra.mxu0 0
        %3271 = vmatpush.bf16.msra.mxu0 0
        %3272 = vmatpush.bf16.msra.mxu0 0
        %3273 = vmatpush.bf16.msra.mxu0 0
        %3274 = vmatpush.bf16.msra.mxu0 0
        %3275 = vmatpush.bf16.msra.mxu0 %v3266
        %3276 = vmatmul.bf16.gmra.mxu0 %v3262
        %v3277 = vpop.f32.mrf.mxu0
        %v3278 = vadd.f32 0.0, %v3277
        %v3279 = vpop.f32.mrf.mxu0
        %3280 = vdwg.mxu0
        %v3281 = vpack.c.bf16 %v3278, %v3278
        %v3282 = vld [vmem:[#allocation23] sm:$0xf]
        %v3283 = vld [vmem:[#allocation23 + $0x4] sm:$0xf]
        %v3284 = vld [vmem:[#allocation23 + $0x8] sm:$0xf]
        %v3285 = vld [vmem:[#allocation23 + $0xc] sm:$0xf]
        %v3286 = vld [vmem:[#allocation23 + $0x10] sm:$0xf]
        %v3287 = vld [vmem:[#allocation23 + $0x14] sm:$0xf]
        %v3288 = vld [vmem:[#allocation23 + $0x18] sm:$0xf]
        %v3289 = vld [vmem:[#allocation23 + $0x1c] sm:$0xf]
        %v3290 = vld [vmem:[#allocation23 + $0x20] sm:$0xf]
        %v3291 = vld [vmem:[#allocation23 + $0x24] sm:$0xf]
        %v3292 = vld [vmem:[#allocation23 + $0x28] sm:$0xf]
        %v3293 = vld [vmem:[#allocation23 + $0x2c] sm:$0xf]
        %v3294 = vld [vmem:[#allocation23 + $0x30] sm:$0xf]
        %v3295 = vld [vmem:[#allocation23 + $0x34] sm:$0xf]
        %v3296 = vld [vmem:[#allocation23 + $0x38] sm:$0xf]
        %v3297 = vld [vmem:[#allocation23 + $0x3c] sm:$0xf]
        %s3298 = scalar_lea.vmem %s45, 1
        %v3299 = vld [vmem:[%s3298] sm:$0x1]
        %v3301 = vsel %vm3260, %v3299, 0
        %3303 = vmatpush.bf16.msra.mxu0 0
        %3304 = vmatpush.bf16.msra.mxu0 0
        %3305 = vmatpush.bf16.msra.mxu0 0
        %3306 = vmatpush.bf16.msra.mxu0 0
        %3307 = vmatpush.bf16.msra.mxu0 0
        %3308 = vmatpush.bf16.msra.mxu0 0
        %3309 = vmatpush.bf16.msra.mxu0 0
        %3310 = vmatpush.bf16.msra.mxu0 %v3266
        %3311 = vmatmul.bf16.gmra.mxu0 %v3301
        %v3312 = vpop.f32.mrf.mxu0
        %v3313 = vadd.f32 0.0, %v3312
        %v3314 = vpop.f32.mrf.mxu0
        %3315 = vdwg.mxu0
        %v3316 = vpack.c.bf16 %v3313, %v3313
        %s3317 = scalar_lea.vmem [#allocation23], 64
        %v3318 = vld [vmem:[%s3317] sm:$0xf]
        %v3319 = vld [vmem:[%s3317 + $0x4] sm:$0xf]
        %v3320 = vld [vmem:[%s3317 + $0x8] sm:$0xf]
        %v3321 = vld [vmem:[%s3317 + $0xc] sm:$0xf]
        %v3322 = vld [vmem:[%s3317 + $0x10] sm:$0xf]
        %v3323 = vld [vmem:[%s3317 + $0x14] sm:$0xf]
        %v3324 = vld [vmem:[%s3317 + $0x18] sm:$0xf]
        %v3325 = vld [vmem:[%s3317 + $0x1c] sm:$0xf]
        %v3326 = vld [vmem:[%s3317 + $0x20] sm:$0xf]
        %v3327 = vld [vmem:[%s3317 + $0x24] sm:$0xf]
        %v3328 = vld [vmem:[%s3317 + $0x28] sm:$0xf]
        %v3329 = vld [vmem:[%s3317 + $0x2c] sm:$0xf]
        %v3330 = vld [vmem:[%s3317 + $0x30] sm:$0xf]
        %v3331 = vld [vmem:[%s3317 + $0x34] sm:$0xf]
        %v3332 = vld [vmem:[%s3317 + $0x38] sm:$0xf]
        %v3333 = vld [vmem:[%s3317 + $0x3c] sm:$0xf]
        %v3350 = vunpack.c.l.b16 %v3318
        %v3351 = vunpack.c.l.b16 %v3319
        %v3352 = vunpack.c.l.b16 %v3320
        %v3353 = vunpack.c.l.b16 %v3321
        %v3354 = vunpack.c.l.b16 %v3322
        %v3355 = vunpack.c.l.b16 %v3323
        %v3356 = vunpack.c.l.b16 %v3324
        %v3357 = vunpack.c.l.b16 %v3325
        %v3358 = vunpack.c.l.b16 %v3326
        %v3359 = vunpack.c.l.b16 %v3327
        %v3360 = vunpack.c.l.b16 %v3328
        %v3361 = vunpack.c.l.b16 %v3329
        %v3362 = vunpack.c.l.b16 %v3330
        %v3363 = vunpack.c.l.b16 %v3331
        %v3364 = vunpack.c.l.b16 %v3332
        %v3365 = vunpack.c.l.b16 %v3333
        %v3366 = vpack.c.b16 %v3351, %v3350
        %v3367 = vpack.c.b16 %v3353, %v3352
        %v3368 = vpack.c.b16 %v3355, %v3354
        %v3369 = vpack.c.b16 %v3357, %v3356
        %v3370 = vpack.c.b16 %v3359, %v3358
        %v3371 = vpack.c.b16 %v3361, %v3360
        %v3372 = vpack.c.b16 %v3363, %v3362
        %v3373 = vpack.c.b16 %v3365, %v3364
        %3382 = vmatpush.bf16.msra.mxu0 %v3373
        %3383 = vmatpush.bf16.msra.mxu0 %v3372
        %3384 = vmatpush.bf16.msra.mxu0 %v3371
        %3385 = vmatpush.bf16.msra.mxu0 %v3370
        %3386 = vmatpush.bf16.msra.mxu0 %v3369
        %3387 = vmatpush.bf16.msra.mxu0 %v3368
        %3388 = vmatpush.bf16.msra.mxu0 %v3367
        %3389 = vmatpush.bf16.msra.mxu0 %v3366
        %3390 = vmatmul.bf16.gmra.mxu0 %v3316
        %v3391 = vpop.f32.mrf.mxu0
        %v3392 = vadd.f32 0.0, %v3391
        %v3393 = vpop.f32.mrf.mxu0
        %3394 = vdwg.mxu0
        %v3411 = vunpack.c.l.b16 %v3282
        %v3412 = vunpack.c.l.b16 %v3283
        %v3413 = vunpack.c.l.b16 %v3284
        %v3414 = vunpack.c.l.b16 %v3285
        %v3415 = vunpack.c.l.b16 %v3286
        %v3416 = vunpack.c.l.b16 %v3287
        %v3417 = vunpack.c.l.b16 %v3288
        %v3418 = vunpack.c.l.b16 %v3289
        %v3419 = vunpack.c.l.b16 %v3290
        %v3420 = vunpack.c.l.b16 %v3291
        %v3421 = vunpack.c.l.b16 %v3292
        %v3422 = vunpack.c.l.b16 %v3293
        %v3423 = vunpack.c.l.b16 %v3294
        %v3424 = vunpack.c.l.b16 %v3295
        %v3425 = vunpack.c.l.b16 %v3296
        %v3426 = vunpack.c.l.b16 %v3297
        %v3427 = vpack.c.b16 %v3412, %v3411
        %v3428 = vpack.c.b16 %v3414, %v3413
        %v3429 = vpack.c.b16 %v3416, %v3415
        %v3430 = vpack.c.b16 %v3418, %v3417
        %v3431 = vpack.c.b16 %v3420, %v3419
        %v3432 = vpack.c.b16 %v3422, %v3421
        %v3433 = vpack.c.b16 %v3424, %v3423
        %v3434 = vpack.c.b16 %v3426, %v3425
        %3443 = vmatpush.bf16.msra.mxu0 %v3434
        %3444 = vmatpush.bf16.msra.mxu0 %v3433
        %3445 = vmatpush.bf16.msra.mxu0 %v3432
        %3446 = vmatpush.bf16.msra.mxu0 %v3431
        %3447 = vmatpush.bf16.msra.mxu0 %v3430
        %3448 = vmatpush.bf16.msra.mxu0 %v3429
        %3449 = vmatpush.bf16.msra.mxu0 %v3428
        %3450 = vmatpush.bf16.msra.mxu0 %v3427
        %3451 = vmatmul.bf16.gmra.mxu0 %v3281
        %v3452 = vpop.f32.mrf.mxu0
        %v3453 = vadd.f32 %v3392, %v3452
        %v3454 = vpop.f32.mrf.mxu0
        %3455 = vdwg.mxu0
        %s3456 = scalar_lea.vmem %s45, 2
        %v3457 = vld [vmem:[%s3456] sm:$0x1]
        %v3459 = vsel %vm3260, %v3457, 0
        %3461 = vmatpush.bf16.msra.mxu0 0
        %3462 = vmatpush.bf16.msra.mxu0 0
        %3463 = vmatpush.bf16.msra.mxu0 0
        %3464 = vmatpush.bf16.msra.mxu0 0
        %3465 = vmatpush.bf16.msra.mxu0 0
        %3466 = vmatpush.bf16.msra.mxu0 0
        %3467 = vmatpush.bf16.msra.mxu0 0
        %3468 = vmatpush.bf16.msra.mxu0 %v3266
        %3469 = vmatmul.bf16.gmra.mxu0 %v3459
        %v3470 = vpop.f32.mrf.mxu0
        %v3471 = vadd.f32 0.0, %v3470
        %v3472 = vpop.f32.mrf.mxu0
        %3473 = vdwg.mxu0
        %v3474 = vpack.c.bf16 %v3471, %v3471
        %s3475 = scalar_lea.vmem [#allocation23], 128
        %v3476 = vld [vmem:[%s3475] sm:$0xf]
        %v3477 = vld [vmem:[%s3475 + $0x4] sm:$0xf]
        %v3478 = vld [vmem:[%s3475 + $0x8] sm:$0xf]
        %v3479 = vld [vmem:[%s3475 + $0xc] sm:$0xf]
        %v3480 = vld [vmem:[%s3475 + $0x10] sm:$0xf]
        %v3481 = vld [vmem:[%s3475 + $0x14] sm:$0xf]
        %v3482 = vld [vmem:[%s3475 + $0x18] sm:$0xf]
        %v3483 = vld [vmem:[%s3475 + $0x1c] sm:$0xf]
        %v3484 = vld [vmem:[%s3475 + $0x20] sm:$0xf]
        %v3485 = vld [vmem:[%s3475 + $0x24] sm:$0xf]
        %v3486 = vld [vmem:[%s3475 + $0x28] sm:$0xf]
        %v3487 = vld [vmem:[%s3475 + $0x2c] sm:$0xf]
        %v3488 = vld [vmem:[%s3475 + $0x30] sm:$0xf]
        %v3489 = vld [vmem:[%s3475 + $0x34] sm:$0xf]
        %v3490 = vld [vmem:[%s3475 + $0x38] sm:$0xf]
        %v3491 = vld [vmem:[%s3475 + $0x3c] sm:$0xf]
        %v3508 = vunpack.c.l.b16 %v3476
        %v3509 = vunpack.c.l.b16 %v3477
        %v3510 = vunpack.c.l.b16 %v3478
        %v3511 = vunpack.c.l.b16 %v3479
        %v3512 = vunpack.c.l.b16 %v3480
        %v3513 = vunpack.c.l.b16 %v3481
        %v3514 = vunpack.c.l.b16 %v3482
        %v3515 = vunpack.c.l.b16 %v3483
        %v3516 = vunpack.c.l.b16 %v3484
        %v3517 = vunpack.c.l.b16 %v3485
        %v3518 = vunpack.c.l.b16 %v3486
        %v3519 = vunpack.c.l.b16 %v3487
        %v3520 = vunpack.c.l.b16 %v3488
        %v3521 = vunpack.c.l.b16 %v3489
        %v3522 = vunpack.c.l.b16 %v3490
        %v3523 = vunpack.c.l.b16 %v3491
        %v3524 = vpack.c.b16 %v3509, %v3508
        %v3525 = vpack.c.b16 %v3511, %v3510
        %v3526 = vpack.c.b16 %v3513, %v3512
        %v3527 = vpack.c.b16 %v3515, %v3514
        %v3528 = vpack.c.b16 %v3517, %v3516
        %v3529 = vpack.c.b16 %v3519, %v3518
        %v3530 = vpack.c.b16 %v3521, %v3520
        %v3531 = vpack.c.b16 %v3523, %v3522
        %3540 = vmatpush.bf16.msra.mxu0 %v3531
        %3541 = vmatpush.bf16.msra.mxu0 %v3530
        %3542 = vmatpush.bf16.msra.mxu0 %v3529
        %3543 = vmatpush.bf16.msra.mxu0 %v3528
        %3544 = vmatpush.bf16.msra.mxu0 %v3527
        %3545 = vmatpush.bf16.msra.mxu0 %v3526
        %3546 = vmatpush.bf16.msra.mxu0 %v3525
        %3547 = vmatpush.bf16.msra.mxu0 %v3524
        %3548 = vmatmul.bf16.gmra.mxu0 %v3474
        %v3549 = vpop.f32.mrf.mxu0
        %v3550 = vadd.f32 0.0, %v3549
        %v3551 = vpop.f32.mrf.mxu0
        %3552 = vdwg.mxu0
        %v3553 = vadd.f32 %v3453, %v3550
        %v3554 = vld [vmem:[#allocation25] sm:$0x1]
        %v3556 = vsel %vm2562, %v3554, 0
        %3558 = vmatpush.bf16.msra.mxu0 0
        %3559 = vmatpush.bf16.msra.mxu0 0
        %3560 = vmatpush.bf16.msra.mxu0 0
        %3561 = vmatpush.bf16.msra.mxu0 0
        %3562 = vmatpush.bf16.msra.mxu0 0
        %3563 = vmatpush.bf16.msra.mxu0 0
        %3564 = vmatpush.bf16.msra.mxu0 0
        %3565 = vmatpush.bf16.msra.mxu0 %v2964
        %3566 = vmatmul.bf16.gmra.mxu0 %v3556
        %v3567 = vpop.f32.mrf.mxu0
        %v3568 = vadd.f32 0.0, %v3567
        %v3569 = vpop.f32.mrf.mxu0
        %3570 = vdwg.mxu0
        %v3571 = vpack.c.bf16 %v3568, %v3568
        %v3572 = vld [vmem:[#allocation26] sm:$0xf]
        %v3573 = vld [vmem:[#allocation26 + $0x4] sm:$0xf]
        %v3574 = vld [vmem:[#allocation26 + $0x8] sm:$0xf]
        %v3575 = vld [vmem:[#allocation26 + $0xc] sm:$0xf]
        %v3576 = vld [vmem:[#allocation26 + $0x10] sm:$0xf]
        %v3577 = vld [vmem:[#allocation26 + $0x14] sm:$0xf]
        %v3578 = vld [vmem:[#allocation26 + $0x18] sm:$0xf]
        %v3579 = vld [vmem:[#allocation26 + $0x1c] sm:$0xf]
        %v3580 = vld [vmem:[#allocation26 + $0x20] sm:$0xf]
        %v3581 = vld [vmem:[#allocation26 + $0x24] sm:$0xf]
        %v3582 = vld [vmem:[#allocation26 + $0x28] sm:$0xf]
        %v3583 = vld [vmem:[#allocation26 + $0x2c] sm:$0xf]
        %v3584 = vld [vmem:[#allocation26 + $0x30] sm:$0xf]
        %v3585 = vld [vmem:[#allocation26 + $0x34] sm:$0xf]
        %v3586 = vld [vmem:[#allocation26 + $0x38] sm:$0xf]
        %v3587 = vld [vmem:[#allocation26 + $0x3c] sm:$0xf]
        %v3604 = vunpack.c.l.b16 %v3572
        %v3605 = vunpack.c.l.b16 %v3573
        %v3606 = vunpack.c.l.b16 %v3574
        %v3607 = vunpack.c.l.b16 %v3575
        %v3608 = vunpack.c.l.b16 %v3576
        %v3609 = vunpack.c.l.b16 %v3577
        %v3610 = vunpack.c.l.b16 %v3578
        %v3611 = vunpack.c.l.b16 %v3579
        %v3612 = vunpack.c.l.b16 %v3580
        %v3613 = vunpack.c.l.b16 %v3581
        %v3614 = vunpack.c.l.b16 %v3582
        %v3615 = vunpack.c.l.b16 %v3583
        %v3616 = vunpack.c.l.b16 %v3584
        %v3617 = vunpack.c.l.b16 %v3585
        %v3618 = vunpack.c.l.b16 %v3586
        %v3619 = vunpack.c.l.b16 %v3587
        %v3620 = vpack.c.b16 %v3605, %v3604
        %v3621 = vpack.c.b16 %v3607, %v3606
        %v3622 = vpack.c.b16 %v3609, %v3608
        %v3623 = vpack.c.b16 %v3611, %v3610
        %v3624 = vpack.c.b16 %v3613, %v3612
        %v3625 = vpack.c.b16 %v3615, %v3614
        %v3626 = vpack.c.b16 %v3617, %v3616
        %v3627 = vpack.c.b16 %v3619, %v3618
        %3636 = vmatpush.bf16.msra.mxu0 %v3627
        %3637 = vmatpush.bf16.msra.mxu0 %v3626
        %3638 = vmatpush.bf16.msra.mxu0 %v3625
        %3639 = vmatpush.bf16.msra.mxu0 %v3624
        %3640 = vmatpush.bf16.msra.mxu0 %v3623
        %3641 = vmatpush.bf16.msra.mxu0 %v3622
        %3642 = vmatpush.bf16.msra.mxu0 %v3621
        %3643 = vmatpush.bf16.msra.mxu0 %v3620
        %3644 = vmatmul.bf16.gmra.mxu0 %v3571
        %v3645 = vpop.f32.mrf.mxu0
        %v3646 = vadd.f32 0.0, %v3645
        %v3647 = vpop.f32.mrf.mxu0
        %3648 = vdwg.mxu0
        %v3649 = vadd.f32 %v3553, %v3646
        %v3650 = vld [vmem:[#allocation28] sm:$0x1]
        %v3652 = vperm.slane %v3650, 0
        %v3654 = vadd.f32 %v3649, %v3652
        %v3655 = vmax.f32 %v3654, 0.0
        %v3656 = vsel %vm2566, %v3655, 0.0
        %v3657 = vrot.slane %v3656, 4
        %v3658 = vadd.f32 %v3656, %v3657
        %v3659 = vrot.slane %v3658, 2
        %v3660 = vadd.f32 %v3658, %v3659
        %v3661 = vrot.slane %v3660, 1
        %v3662 = vadd.f32 %v3660, %v3661
        %v3663 = vrcp.pop 2.0
        %v3664 = vmul.f32 2.0, %v3663
        %v3665 = vsub.f32 1.0, %v3664
        %v3666 = vmul.f32 %v3663, %v3665
        %v3667 = vadd.f32 %v3663, %v3666
        %vm3668 = vweird.f32 %v3663
        %v3669 = vsel %vm3668, %v3663, %v3667
        %v3670 = vmul.f32 %v3662, %v3669
        %v3671 = vld [vmem:[#allocation29] sm:$0x1]
        %v3672 = vmul.f32 %v3670, %v3671
        %v3673 = vsel %vm3264, %v3672, 0.0
        %3674 = vadd.xlane.f32.xlu0 %v3673
        %v3675 = vpop.xlane.xlu0 %3674
        %v3676 = vld [vmem:[#allocation2] sm:$0x1]
        %v3677 = vadd.f32 %v3675, %v3676
        %v3678 = vsub.f32 0.0, %v3677
        %v3679 = vmul.f32 %v3678, 1.442695
        %v3680 = vpow.pop %v3679
        %v3681 = vadd.f32 %v3680, 1.0
        %v3682 = vrcp.pop %v3681
        %v3683 = vmul.f32 %v3681, %v3682
        %v3684 = vsub.f32 1.0, %v3683
        %v3685 = vmul.f32 %v3682, %v3684
        %v3686 = vadd.f32 %v3682, %v3685
        %vm3687 = vweird.f32 %v3681
        %vm3688 = vweird.f32 %v3682
        %vm3689 = vmor %vm3687, %vm3688
        %v3690 = vsel %vm3689, %v3682, %v3686
        %v3691 = vand.u32 2147483647, %v3681
        %vm3692 = vcmp.eq.f32.partialorder %v3691, 8.507059e+37
        %v3693 = vand.u32 %v3681, 2147483648
        %v3694 = vor.u32 1.1754944e-38, %v3693
        %v3695 = vsel %vm3692, %v3694, %v3690
        %v3696 = vmul.f32 1.0, %v3695
        %vm3697 = vcmask 0
        %3698 = vst.msk [vmem:[%s1180] sm:$0x1] %vm3697, %v3696
        %p3699 = scmp.lt.s32.totalorder %s82, 1
        %s3700 = scalar_select %p3699, %s82, 1
        %s3701 = scalar_lea.vmem %s59, %s3700
        // Predicated region
        $region209: #{forward.1} parent=135 // pred_check
          %p3702 = pneg %p714
        $region210: #{forward.1} parent=135 // pred_check_branch
          %3704 = sbr.rel (%p3702) target = $region212
        $region211: #{forward.1} parent=135 // pred_region
          _
        $region212: #{forward.1} parent=135 // pred_fallthru
          _
      $region136: #{forward.1} parent=5 // pred_fallthru
        _
      %p3705 = scmp.le.s32.totalorder 2, %s77
      // Predicated region
      $region213: #{forward.1} parent=5 // pred_check
        %p3706 = pneg %p3705
      $region214: #{forward.1} parent=5 // pred_check_branch
        %3708 = sbr.rel (%p3706) target = $region216
      $region215: #{forward.1} parent=5 // pred_region
        %s3709 = ssub.s32 %s77, 2
        // Predicated region
        $region217: #{forward.1} parent=215 // pred_check
          %p3710 = pneg %p720
        $region218: #{forward.1} parent=215 // pred_check_branch
          %3712 = sbr.rel (%p3710) target = $region220
        $region219: #{forward.1} parent=215 // pred_region
          %p3713 = scmp.lt.s32.totalorder %s83, 1
          %s3714 = scalar_select %p3713, %s83, 1
          %s3715 = scalar_lea.vmem %s59, %s3714
        $region220: #{forward.1} parent=215 // pred_fallthru
          _
      $region216: #{forward.1} parent=5 // pred_fallthru
        _
    $region6: #{forward.1} parent=1 // loop_footer
      %s81 = sadd.s32 1, %s77
    $region7: #{forward.1} parent=1 // loop_footer_branch
      %76 = sbr.rel target = $region3
    $region8: #{forward.1} parent=1 // loop_exit
      _
    %3716 = vsyncpa [#allocation4], 1
    %s3717 = scalar_lea.sflag [#allocation4], 1
    %3718 = vsyncpa %s3717, 1
    %3719 = vsyncpa [#allocation6], 1
    %3720 = vsyncpa [#allocation9], 1
    %3721 = vsyncpa [#allocation12], 1
    %3722 = vsyncpa [#allocation15], 1
    %3723 = vsyncpa [#allocation18], 1
    %3724 = vsyncpa [#allocation21], 1
    %3725 = vsyncpa [#allocation24], 1
    %3726 = vsyncpa [#allocation27], 1
    %3727 = vsyncpa [#allocation30], 1

</llo_original>
